<compile_context>
chip_gen: v5e
topology: v5e:2x2
jax: 0.10.0
libtpu: 0.0.40
codegen_flags: <defaults>
</compile_context>

<pallas_src>
import functools
import math

import jax
import jax.numpy as jnp
from jax.experimental import pallas as pl
from jax.experimental.pallas import tpu as pltpu


def _round_up(x, m):
    return (x + m - 1) // m * m


def _layer_norm(x, g, b, eps=1e-5):
    mu = jnp.mean(x, axis=-1, keepdims=True)
    var = jnp.mean(jnp.square(x - mu), axis=-1, keepdims=True)
    return (x - mu) * jax.lax.rsqrt(var + eps) * g + b


# ---------------------------------------------------------------------------
# fused ViT kernel: grid axis = encoder layer
# ---------------------------------------------------------------------------
def _vit_kernel(patches_ref, convw_ref, convb_ref, cls_ref, pos_ref,
                ln1g_ref, ln1b_ref, wqkv_ref, bqkv_ref, wo_ref, bo_ref,
                ln2g_ref, ln2b_ref, w1_ref, b1_ref, w2_ref, b2_ref,
                hg_ref, hb_ref, hw_ref, hbias_ref,
                out_ref, x_ref,
                *, num_heads, B, S, S_pad, P):
    l = pl.program_id(0)
    D = convw_ref.shape[1]
    hd = D // num_heads
    scale = 1.0 / math.sqrt(hd)

    # ---- step 0: patch embedding + cls token + positional embedding -------
    @pl.when(l == 0)
    def _embed():
        emb = jnp.dot(patches_ref[...], convw_ref[...],
                      preferred_element_type=jnp.float32) + convb_ref[...]
        pos_patch = pos_ref[0:P, :]                      # (P, D)
        cls_row = cls_ref[...] + pos_ref[P:P + 1, :]     # (1, D)
        x_ref[...] = jnp.zeros_like(x_ref)               # zero padded rows
        for b in range(B):                               # static, B is small
            x_ref[b * S_pad: b * S_pad + P, :] = (
                emb[b * P:(b + 1) * P, :] + pos_patch)
            x_ref[b * S_pad + P: b * S_pad + P + 1, :] = cls_row
        # TODO(synk): reference does `x += self.dropout` (adds an nn.Module);
        # dropout is treated as eval-mode identity here.

    # ---- encoder layer l (pre-LN), M = B * S_pad tokens at once -----------
    x = x_ref[...]                                       # (M, D) f32
    h = _layer_norm(x, ln1g_ref[0], ln1b_ref[0])
    qkv = jnp.dot(h.astype(jnp.bfloat16), wqkv_ref[0],
                  preferred_element_type=jnp.float32) + bqkv_ref[0]   # (M, 3D)
    q = qkv[:, 0 * D:1 * D].reshape(B, S_pad, D)
    k = qkv[:, 1 * D:2 * D].reshape(B, S_pad, D)
    v = qkv[:, 2 * D:3 * D].reshape(B, S_pad, D)

    # mask padded key positions (j >= S) out of the softmax
    kidx = jax.lax.broadcasted_iota(jnp.int32, (1, 1, S_pad), 2)
    kmask = jnp.where(kidx < S, 0.0, -1e30).astype(jnp.float32)

    wo = wo_ref[0]
    attn = jnp.zeros((B * S_pad, D), jnp.float32)
    for hi in range(num_heads):                          # static head loop
        sl = slice(hi * hd, (hi + 1) * hd)
        qh = q[:, :, sl].astype(jnp.bfloat16)
        kh = k[:, :, sl].astype(jnp.bfloat16)
        vh = v[:, :, sl].astype(jnp.bfloat16)
        s = jnp.einsum('bqd,bkd->bqk', qh, kh,
                       preferred_element_type=jnp.float32) * scale + kmask
        s = s - jnp.max(s, axis=-1, keepdims=True)
        p = jnp.exp(s)
        p = p * pl.reciprocal(jnp.sum(p, axis=-1, keepdims=True), approx=True)
        oh = jnp.einsum('bqk,bkd->bqd', p.astype(jnp.bfloat16), vh,
                        preferred_element_type=jnp.float32)   # (B, S_pad, hd)
        # accumulate through this head's slice of W_o (no lane concatenate)
        attn = attn + jnp.dot(
            oh.reshape(B * S_pad, hd).astype(jnp.bfloat16), wo[sl, :],
            preferred_element_type=jnp.float32)
    x = x + attn + bo_ref[0]                             # residual

    h2 = _layer_norm(x, ln2g_ref[0], ln2b_ref[0])
    f = jnp.dot(h2.astype(jnp.bfloat16), w1_ref[0],
                preferred_element_type=jnp.float32) + b1_ref[0]
    # TODO(synk): reference activation='gelu' is exact erf GELU; tanh approx used.
    f = jax.nn.gelu(f, approximate=True)
    f = jnp.dot(f.astype(jnp.bfloat16), w2_ref[0],
                preferred_element_type=jnp.float32) + b2_ref[0]
    x = x + f                                            # residual
    x_ref[...] = x

    # ---- last step: LayerNorm + classification head (lane-dense output) ---
    @pl.when(l == pl.num_programs(0) - 1)
    def _head():
        hx = _layer_norm(x, hg_ref[...], hb_ref[...])
        out_ref[...] = jnp.dot(hx.astype(jnp.bfloat16), hw_ref[...],
                               preferred_element_type=jnp.float32) + hbias_ref[...]


# ---------------------------------------------------------------------------
# parameters (per-layer weights stacked on a leading layer axis)
# ---------------------------------------------------------------------------
def init_vit_params(key, *, in_channels, patch_size, embed_dim, num_patches,
                    num_encoders, num_classes, dim_ff):
    D = embed_dim
    Pin = in_channels * patch_size * patch_size
    L = num_encoders
    S = num_patches + 1
    cpad = _round_up(num_classes, 128)
    keys = jax.random.split(key, 8)

    def nrm(k, shape, scale=0.02):
        return (scale * jax.random.normal(k, shape)).astype(jnp.float32)

    head_w = jnp.zeros((D, cpad), jnp.float32)
    head_w = head_w.at[:, :num_classes].set(nrm(keys[3], (D, num_classes)))

    return dict(
        conv_w=nrm(keys[0], (Pin, D)).astype(jnp.bfloat16),
        conv_b=jnp.zeros((1, D), jnp.float32),
        cls_token=nrm(keys[1], (1, D), 1.0),
        pos_emb=nrm(keys[2], (S, D), 1.0),
        head_ln_g=jnp.ones((1, D), jnp.float32),
        head_ln_b=jnp.zeros((1, D), jnp.float32),
        head_w=head_w.astype(jnp.bfloat16),
        head_b=jnp.zeros((1, cpad), jnp.float32),
        ln1_g=jnp.ones((L, 1, D), jnp.float32),
        ln1_b=jnp.zeros((L, 1, D), jnp.float32),
        wqkv=nrm(keys[4], (L, D, 3 * D)).astype(jnp.bfloat16),
        bqkv=jnp.zeros((L, 1, 3 * D), jnp.float32),
        wo=nrm(keys[5], (L, D, D)).astype(jnp.bfloat16),
        bo=jnp.zeros((L, 1, D), jnp.float32),
        ln2_g=jnp.ones((L, 1, D), jnp.float32),
        ln2_b=jnp.zeros((L, 1, D), jnp.float32),
        w1=nrm(keys[6], (L, D, dim_ff)).astype(jnp.bfloat16),
        b1=jnp.zeros((L, 1, dim_ff), jnp.float32),
        w2=nrm(keys[7], (L, dim_ff, D)).astype(jnp.bfloat16),
        b2=jnp.zeros((L, 1, D), jnp.float32),
    )


# ---------------------------------------------------------------------------
# forward
# ---------------------------------------------------------------------------
def vit_forward(params, x, *, patch_size, num_heads, num_classes):
    B, C, H, W = x.shape
    ps = patch_size
    nh, nw = H // ps, W // ps
    P = nh * nw
    S = P + 1
    S_pad = _round_up(S, 8)
    M = B * S_pad
    D = params["conv_w"].shape[1]
    L, _, D3 = params["wqkv"].shape
    F = params["w1"].shape[2]
    cpad = params["head_w"].shape[1]
    Pin = C * ps * ps

    # Patchify: equivalent to Conv2d(k=s=ps) + Flatten(2) + transpose.
    # (tiny 6-D transpose on the raw image, done once in XLA)
    patches = x.reshape(B, C, nh, ps, nw, ps).transpose(0, 2, 4, 1, 3, 5)
    patches = patches.reshape(B * P, Pin).astype(jnp.bfloat16)

    kernel = functools.partial(_vit_kernel, num_heads=num_heads,
                               B=B, S=S, S_pad=S_pad, P=P)
    const2 = lambda l: (0, 0)
    layer3 = lambda l: (l, 0, 0)

    in_specs = [
        pl.BlockSpec((B * P, Pin), const2),     # patches
        pl.BlockSpec((Pin, D), const2),         # conv_w
        pl.BlockSpec((1, D), const2),           # conv_b
        pl.BlockSpec((1, D), const2),           # cls_token
        pl.BlockSpec((S, D), const2),           # pos_emb
        pl.BlockSpec((1, 1, D), layer3),        # ln1_g
        pl.BlockSpec((1, 1, D), layer3),        # ln1_b
        pl.BlockSpec((1, D, D3), layer3),       # wqkv
        pl.BlockSpec((1, 1, D3), layer3),       # bqkv
        pl.BlockSpec((1, D, D), layer3),        # wo
        pl.BlockSpec((1, 1, D), layer3),        # bo
        pl.BlockSpec((1, 1, D), layer3),        # ln2_g
        pl.BlockSpec((1, 1, D), layer3),        # ln2_b
        pl.BlockSpec((1, D, F), layer3),        # w1
        pl.BlockSpec((1, 1, F), layer3),        # b1
        pl.BlockSpec((1, F, D), layer3),        # w2
        pl.BlockSpec((1, 1, D), layer3),        # b2
        pl.BlockSpec((1, D), const2),           # head_ln_g
        pl.BlockSpec((1, D), const2),           # head_ln_b
        pl.BlockSpec((D, cpad), const2),        # head_w
        pl.BlockSpec((1, cpad), const2),        # head_b
    ]

    out = pl.pallas_call(
        kernel,
        out_shape=jax.ShapeDtypeStruct((M, cpad), jnp.float32),
        grid=(L,),
        in_specs=in_specs,
        out_specs=pl.BlockSpec((M, cpad), const2),
        scratch_shapes=[pltpu.VMEM((M, D), jnp.float32)],  # resident activation
        compiler_params=pltpu.CompilerParams(
            dimension_semantics=("arbitrary",)),
    )(patches, params["conv_w"], params["conv_b"], params["cls_token"],
      params["pos_emb"], params["ln1_g"], params["ln1_b"], params["wqkv"],
      params["bqkv"], params["wo"], params["bo"], params["ln2_g"],
      params["ln2_b"], params["w1"], params["b1"], params["w2"], params["b2"],
      params["head_ln_g"], params["head_ln_b"], params["head_w"],
      params["head_b"])

    # drop sequence padding and class-lane padding
    return out.reshape(B, S_pad, cpad)[:, :S, :num_classes]


# ---------------------------------------------------------------------------
if __name__ == "__main__":
    # small shapes: batch=2, 3x16x16 images, patch 4 -> 16 patches, embed 32
    B, C, H, W = 2, 3, 16, 16
    patch_size, embed_dim = 4, 32
    num_heads, num_encoders, num_classes, dim_ff = 4, 2, 10, 64
    num_patches = (H // patch_size) * (W // patch_size)

    key = jax.random.PRNGKey(0)
    k_params, k_x = jax.random.split(key)
    params = init_vit_params(
        k_params, in_channels=C, patch_size=patch_size, embed_dim=embed_dim,
        num_patches=num_patches, num_encoders=num_encoders,
        num_classes=num_classes, dim_ff=dim_ff)
    x = jax.random.normal(k_x, (B, C, H, W), jnp.float32)

    fwd = jax.jit(functools.partial(
        vit_forward, patch_size=patch_size, num_heads=num_heads,
        num_classes=num_classes))
    out = fwd(params, x)
    jax.block_until_ready(out)

    assert out.shape == (B, num_patches + 1, num_classes), out.shape
    assert bool(jnp.all(jnp.isfinite(out)))
    print("KERNEL_OK")
</pallas_src>

<mosaic_0001>
module attributes {stable_mosaic.version = 11 : i64} {
  func.func @_vit_kernel(%arg0: i32, %arg1: memref<32x48xbf16, #tpu.memory_space<vmem>>, %arg2: memref<48x32xbf16, #tpu.memory_space<vmem>>, %arg3: memref<1x32xf32, #tpu.memory_space<vmem>>, %arg4: memref<1x32xf32, #tpu.memory_space<vmem>>, %arg5: memref<17x32xf32, #tpu.memory_space<vmem>>, %arg6: memref<1x1x32xf32, #tpu.memory_space<vmem>>, %arg7: memref<1x1x32xf32, #tpu.memory_space<vmem>>, %arg8: memref<1x32x96xbf16, #tpu.memory_space<vmem>>, %arg9: memref<1x1x96xf32, #tpu.memory_space<vmem>>, %arg10: memref<1x32x32xbf16, #tpu.memory_space<vmem>>, %arg11: memref<1x1x32xf32, #tpu.memory_space<vmem>>, %arg12: memref<1x1x32xf32, #tpu.memory_space<vmem>>, %arg13: memref<1x1x32xf32, #tpu.memory_space<vmem>>, %arg14: memref<1x32x64xbf16, #tpu.memory_space<vmem>>, %arg15: memref<1x1x64xf32, #tpu.memory_space<vmem>>, %arg16: memref<1x64x32xbf16, #tpu.memory_space<vmem>>, %arg17: memref<1x1x32xf32, #tpu.memory_space<vmem>>, %arg18: memref<1x32xf32, #tpu.memory_space<vmem>>, %arg19: memref<1x32xf32, #tpu.memory_space<vmem>>, %arg20: memref<32x128xbf16, #tpu.memory_space<vmem>>, %arg21: memref<1x128xf32, #tpu.memory_space<vmem>>, %arg22: memref<48x128xf32, #tpu.memory_space<vmem>>, %arg23: memref<48x32xf32, #tpu.memory_space<vmem>>) attributes {dimension_semantics = [#tpu.dimension_semantics<arbitrary>], iteration_bounds = array<i64: 2>, scalar_prefetch = 0 : i64, scratch_operands = 1 : i64, tpu.core_type = #tpu.core_type<tc>, window_params = [{pipeline_mode = #tpu.pipeline_mode<synchronous>, transform_indices = @transform_0, window_bounds = array<i64: 32, 48>}, {pipeline_mode = #tpu.pipeline_mode<synchronous>, transform_indices = @transform_1, window_bounds = array<i64: 48, 32>}, {pipeline_mode = #tpu.pipeline_mode<synchronous>, transform_indices = @transform_2, window_bounds = array<i64: 1, 32>}, {pipeline_mode = #tpu.pipeline_mode<synchronous>, transform_indices = @transform_3, window_bounds = array<i64: 1, 32>}, {pipeline_mode = #tpu.pipeline_mode<synchronous>, transform_indices = @transform_4, window_bounds = array<i64: 17, 32>}, {transform_indices = @transform_5, window_bounds = array<i64: 1, 1, 32>}, {transform_indices = @transform_6, window_bounds = array<i64: 1, 1, 32>}, {transform_indices = @transform_7, window_bounds = array<i64: 1, 32, 96>}, {transform_indices = @transform_8, window_bounds = array<i64: 1, 1, 96>}, {transform_indices = @transform_9, window_bounds = array<i64: 1, 32, 32>}, {transform_indices = @transform_10, window_bounds = array<i64: 1, 1, 32>}, {transform_indices = @transform_11, window_bounds = array<i64: 1, 1, 32>}, {transform_indices = @transform_12, window_bounds = array<i64: 1, 1, 32>}, {transform_indices = @transform_13, window_bounds = array<i64: 1, 32, 64>}, {transform_indices = @transform_14, window_bounds = array<i64: 1, 1, 64>}, {transform_indices = @transform_15, window_bounds = array<i64: 1, 64, 32>}, {transform_indices = @transform_16, window_bounds = array<i64: 1, 1, 32>}, {pipeline_mode = #tpu.pipeline_mode<synchronous>, transform_indices = @transform_17, window_bounds = array<i64: 1, 32>}, {pipeline_mode = #tpu.pipeline_mode<synchronous>, transform_indices = @transform_18, window_bounds = array<i64: 1, 32>}, {pipeline_mode = #tpu.pipeline_mode<synchronous>, transform_indices = @transform_19, window_bounds = array<i64: 32, 128>}, {pipeline_mode = #tpu.pipeline_mode<synchronous>, transform_indices = @transform_20, window_bounds = array<i64: 1, 128>}, {pipeline_mode = #tpu.pipeline_mode<synchronous>, transform_indices = @transform_21, window_bounds = array<i64: 48, 128>}]} {
    %c0_i32 = arith.constant 0 : i32
    %0 = arith.cmpi eq, %arg0, %c0_i32 : i32
    %1 = arith.extui %0 : i1 to i32
    %c0_i32_0 = arith.constant 0 : i32
    %2 = arith.cmpi ne, %1, %c0_i32_0 : i32
    scf.if %2 {
      %c0_84 = arith.constant 0 : index
      %c0_85 = arith.constant 0 : index
      %230 = vector.load %arg1[%c0_84, %c0_85] : memref<32x48xbf16, #tpu.memory_space<vmem>>, vector<32x48xbf16>
      %c0_86 = arith.constant 0 : index
      %c0_87 = arith.constant 0 : index
      %231 = vector.load %arg2[%c0_86, %c0_87] : memref<48x32xbf16, #tpu.memory_space<vmem>>, vector<48x32xbf16>
      %cst_88 = arith.constant dense<0.000000e+00> : vector<32x32xf32>
      %232 = tpu.matmul %230, %231, %cst_88 {dimension_numbers = #tpu.dot_dimension_numbers<[1], [0], [0], [1], [0, 0, 1, 1], [], []>} : vector<32x48xbf16>, vector<48x32xbf16>, vector<32x32xf32> -> vector<32x32xf32>
      %c0_89 = arith.constant 0 : index
      %c0_90 = arith.constant 0 : index
      %233 = vector.load %arg3[%c0_89, %c0_90] : memref<1x32xf32, #tpu.memory_space<vmem>>, vector<1x32xf32>
      %234 = vector.broadcast %233 : vector<1x32xf32> to vector<32x32xf32>
      %235 = arith.addf %232, %234 : vector<32x32xf32>
      %c0_91 = arith.constant 0 : index
      %c0_92 = arith.constant 0 : index
      %236 = vector.load %arg5[%c0_91, %c0_92] : memref<17x32xf32, #tpu.memory_space<vmem>>, vector<16x32xf32>
      %c0_93 = arith.constant 0 : index
      %c0_94 = arith.constant 0 : index
      %237 = vector.load %arg4[%c0_93, %c0_94] : memref<1x32xf32, #tpu.memory_space<vmem>>, vector<1x32xf32>
      %c16 = arith.constant 16 : index
      %c0_95 = arith.constant 0 : index
      %238 = vector.load %arg5[%c16, %c0_95] : memref<17x32xf32, #tpu.memory_space<vmem>>, vector<1x32xf32>
      %239 = arith.addf %237, %238 : vector<1x32xf32>
      %cst_96 = arith.constant 0.000000e+00 : f32
      %240 = vector.broadcast %cst_96 : f32 to vector<48x32xf32>
      %c0_97 = arith.constant 0 : index
      %c0_98 = arith.constant 0 : index
      %241 = vector.load %arg23[%c0_97, %c0_98] : memref<48x32xf32, #tpu.memory_space<vmem>>, vector<48x32xf32>
      tpu.vector_store %arg23[%c0_97, %c0_98], %240 {strides = array<i32>} : memref<48x32xf32, #tpu.memory_space<vmem>>, vector<48x32xf32>,
      %242 = vector.extract_strided_slice %235 {offsets = [0, 0], sizes = [16, 32], strides = [1, 1]} : vector<32x32xf32> to vector<16x32xf32>
      %243 = arith.addf %242, %236 : vector<16x32xf32>
      %c0_99 = arith.constant 0 : index
      %c0_100 = arith.constant 0 : index
      %244 = vector.load %arg23[%c0_99, %c0_100] : memref<48x32xf32, #tpu.memory_space<vmem>>, vector<16x32xf32>
      tpu.vector_store %arg23[%c0_99, %c0_100], %243 {strides = array<i32>} : memref<48x32xf32, #tpu.memory_space<vmem>>, vector<16x32xf32>,
      %c16_101 = arith.constant 16 : index
      %c0_102 = arith.constant 0 : index
      %245 = vector.load %arg23[%c16_101, %c0_102] : memref<48x32xf32, #tpu.memory_space<vmem>>, vector<1x32xf32>
      tpu.vector_store %arg23[%c16_101, %c0_102], %239 {strides = array<i32>} : memref<48x32xf32, #tpu.memory_space<vmem>>, vector<1x32xf32>,
      %246 = vector.extract_strided_slice %235 {offsets = [16, 0], sizes = [16, 32], strides = [1, 1]} : vector<32x32xf32> to vector<16x32xf32>
      %247 = arith.addf %246, %236 : vector<16x32xf32>
      %c24 = arith.constant 24 : index
      %c0_103 = arith.constant 0 : index
      %248 = vector.load %arg23[%c24, %c0_103] : memref<48x32xf32, #tpu.memory_space<vmem>>, vector<16x32xf32>
      tpu.vector_store %arg23[%c24, %c0_103], %247 {strides = array<i32>} : memref<48x32xf32, #tpu.memory_space<vmem>>, vector<16x32xf32>,
      %c40 = arith.constant 40 : index
      %c0_104 = arith.constant 0 : index
      %249 = vector.load %arg23[%c40, %c0_104] : memref<48x32xf32, #tpu.memory_space<vmem>>, vector<1x32xf32>
      tpu.vector_store %arg23[%c40, %c0_104], %239 {strides = array<i32>} : memref<48x32xf32, #tpu.memory_space<vmem>>, vector<1x32xf32>,
    } else {
    }
    %c0 = arith.constant 0 : index
    %c0_1 = arith.constant 0 : index
    %3 = vector.load %arg23[%c0, %c0_1] : memref<48x32xf32, #tpu.memory_space<vmem>>, vector<48x32xf32>
    %c0_2 = arith.constant 0 : index
    %c0_3 = arith.constant 0 : index
    %c0_4 = arith.constant 0 : index
    %4 = vector.load %arg6[%c0_2, %c0_3, %c0_4] : memref<1x1x32xf32, #tpu.memory_space<vmem>>, vector<1x1x32xf32>
    %5 = vector.shape_cast %4 : vector<1x1x32xf32> to vector<1x32xf32>
    %c0_5 = arith.constant 0 : index
    %c0_6 = arith.constant 0 : index
    %c0_7 = arith.constant 0 : index
    %6 = vector.load %arg7[%c0_5, %c0_6, %c0_7] : memref<1x1x32xf32, #tpu.memory_space<vmem>>, vector<1x1x32xf32>
    %7 = vector.shape_cast %6 : vector<1x1x32xf32> to vector<1x32xf32>
    %cst = arith.constant dense<0.000000e+00> : vector<48xf32>
    %8 = vector.multi_reduction <add>, %3, %cst [1] : vector<48x32xf32> to vector<48xf32>
    %9 = vector.shape_cast %8 : vector<48xf32> to vector<48x1xf32>
    %cst_8 = arith.constant 3.200000e+01 : f32
    %10 = vector.broadcast %cst_8 : f32 to vector<48x1xf32>
    %11 = arith.divf %9, %10 : vector<48x1xf32>
    %12 = vector.broadcast %11 : vector<48x1xf32> to vector<48x32xf32>
    %13 = arith.subf %3, %12 : vector<48x32xf32>
    %14 = arith.mulf %13, %13 : vector<48x32xf32>
    %cst_9 = arith.constant dense<0.000000e+00> : vector<48xf32>
    %15 = vector.multi_reduction <add>, %14, %cst_9 [1] : vector<48x32xf32> to vector<48xf32>
    %16 = vector.shape_cast %15 : vector<48xf32> to vector<48x1xf32>
    %cst_10 = arith.constant 3.200000e+01 : f32
    %17 = vector.broadcast %cst_10 : f32 to vector<48x1xf32>
    %18 = arith.divf %16, %17 : vector<48x1xf32>
    %19 = vector.broadcast %11 : vector<48x1xf32> to vector<48x32xf32>
    %20 = arith.subf %3, %19 : vector<48x32xf32>
    %cst_11 = arith.constant 9.99999974E-6 : f32
    %21 = vector.broadcast %cst_11 : f32 to vector<48x1xf32>
    %22 = arith.addf %18, %21 : vector<48x1xf32>
    %23 = math.rsqrt %22 : vector<48x1xf32>
    %24 = vector.broadcast %23 : vector<48x1xf32> to vector<48x32xf32>
    %25 = arith.mulf %20, %24 : vector<48x32xf32>
    %26 = vector.broadcast %5 : vector<1x32xf32> to vector<48x32xf32>
    %27 = arith.mulf %25, %26 : vector<48x32xf32>
    %28 = vector.broadcast %7 : vector<1x32xf32> to vector<48x32xf32>
    %29 = arith.addf %27, %28 : vector<48x32xf32>
    %30 = arith.truncf %29 : vector<48x32xf32> to vector<48x32xbf16>
    %c0_12 = arith.constant 0 : index
    %c0_13 = arith.constant 0 : index
    %c0_14 = arith.constant 0 : index
    %31 = vector.load %arg8[%c0_12, %c0_13, %c0_14] : memref<1x32x96xbf16, #tpu.memory_space<vmem>>, vector<1x32x96xbf16>
    %32 = vector.shape_cast %31 : vector<1x32x96xbf16> to vector<32x96xbf16>
    %cst_15 = arith.constant dense<0.000000e+00> : vector<48x96xf32>
    %33 = tpu.matmul %30, %32, %cst_15 {dimension_numbers = #tpu.dot_dimension_numbers<[1], [0], [0], [1], [0, 0, 1, 1], [], []>} : vector<48x32xbf16>, vector<32x96xbf16>, vector<48x96xf32> -> vector<48x96xf32>
    %c0_16 = arith.constant 0 : index
    %c0_17 = arith.constant 0 : index
    %c0_18 = arith.constant 0 : index
    %34 = vector.load %arg9[%c0_16, %c0_17, %c0_18] : memref<1x1x96xf32, #tpu.memory_space<vmem>>, vector<1x1x96xf32>
    %35 = vector.shape_cast %34 : vector<1x1x96xf32> to vector<1x96xf32>
    %36 = vector.broadcast %35 : vector<1x96xf32> to vector<48x96xf32>
    %37 = arith.addf %33, %36 : vector<48x96xf32>
    %38 = vector.extract_strided_slice %37 {offsets = [0, 0], sizes = [48, 32], strides = [1, 1]} : vector<48x96xf32> to vector<48x32xf32>
    %39 = vector.shape_cast %38 : vector<48x32xf32> to vector<2x24x32xf32>
    %40 = vector.extract_strided_slice %37 {offsets = [0, 32], sizes = [48, 32], strides = [1, 1]} : vector<48x96xf32> to vector<48x32xf32>
    %41 = vector.shape_cast %40 : vector<48x32xf32> to vector<2x24x32xf32>
    %42 = vector.extract_strided_slice %37 {offsets = [0, 64], sizes = [48, 32], strides = [1, 1]} : vector<48x96xf32> to vector<48x32xf32>
    %43 = vector.shape_cast %42 : vector<48x32xf32> to vector<2x24x32xf32>
    %44 = tpu.iota {dimensions = array<i32: 2>} : vector<1x1x24xi32>
    %c17_i32 = arith.constant 17 : i32
    %45 = vector.broadcast %c17_i32 : i32 to vector<1x1x24xi32>
    %46 = arith.cmpi slt, %44, %45 : vector<1x1x24xi32>
    %cst_19 = arith.constant 0.000000e+00 : f32
    %cst_20 = arith.constant -1.000000e+30 : f32
    %47 = vector.broadcast %cst_19 : f32 to vector<1x1x24xf32>
    %48 = vector.broadcast %cst_20 : f32 to vector<1x1x24xf32>
    %49 = arith.select %46, %47, %48 : vector<1x1x24xi1>, vector<1x1x24xf32>
    %c0_21 = arith.constant 0 : index
    %c0_22 = arith.constant 0 : index
    %c0_23 = arith.constant 0 : index
    %50 = vector.load %arg10[%c0_21, %c0_22, %c0_23] : memref<1x32x32xbf16, #tpu.memory_space<vmem>>, vector<1x32x32xbf16>
    %51 = vector.shape_cast %50 : vector<1x32x32xbf16> to vector<32x32xbf16>
    %cst_24 = arith.constant 0.000000e+00 : f32
    %52 = vector.broadcast %cst_24 : f32 to vector<48x32xf32>
    %53 = vector.extract_strided_slice %39 {offsets = [0, 0, 0], sizes = [2, 24, 8], strides = [1, 1, 1]} : vector<2x24x32xf32> to vector<2x24x8xf32>
    %54 = arith.truncf %53 : vector<2x24x8xf32> to vector<2x24x8xbf16>
    %55 = vector.extract_strided_slice %41 {offsets = [0, 0, 0], sizes = [2, 24, 8], strides = [1, 1, 1]} : vector<2x24x32xf32> to vector<2x24x8xf32>
    %56 = arith.truncf %55 : vector<2x24x8xf32> to vector<2x24x8xbf16>
    %57 = vector.extract_strided_slice %43 {offsets = [0, 0, 0], sizes = [2, 24, 8], strides = [1, 1, 1]} : vector<2x24x32xf32> to vector<2x24x8xf32>
    %58 = arith.truncf %57 : vector<2x24x8xf32> to vector<2x24x8xbf16>
    "tpu.trace_start"() <{level = 10 : i32, message = "bqd,bkd->bqk"}> : () -> ()
    %cst_25 = arith.constant dense<0.000000e+00> : vector<2x24x24xf32>
    %59 = tpu.matmul %54, %56, %cst_25 {dimension_numbers = #tpu.dot_dimension_numbers<[2], [2], [1], [1], [0, 0, 0, 1, 1, 1], [0], [0]>} : vector<2x24x8xbf16>, vector<2x24x8xbf16>, vector<2x24x24xf32> -> vector<2x24x24xf32>
    "tpu.trace_stop"() : () -> ()
    %cst_26 = arith.constant 0.353553385 : f32
    %60 = vector.broadcast %cst_26 : f32 to vector<2x24x24xf32>
    %61 = arith.mulf %59, %60 : vector<2x24x24xf32>
    %62 = vector.broadcast %49 : vector<1x1x24xf32> to vector<2x24x24xf32>
    %63 = arith.addf %61, %62 : vector<2x24x24xf32>
    %cst_27 = arith.constant dense<0xFF800000> : vector<2x24xf32>
    %64 = vector.multi_reduction <maximumf>, %63, %cst_27 [2] : vector<2x24x24xf32> to vector<2x24xf32>
    %65 = vector.shape_cast %64 : vector<2x24xf32> to vector<2x24x1xf32>
    %66 = vector.broadcast %65 : vector<2x24x1xf32> to vector<2x24x24xf32>
    %67 = arith.subf %63, %66 : vector<2x24x24xf32>
    %68 = math.exp %67 : vector<2x24x24xf32>
    %cst_28 = arith.constant dense<0.000000e+00> : vector<2x24xf32>
    %69 = vector.multi_reduction <add>, %68, %cst_28 [2] : vector<2x24x24xf32> to vector<2x24xf32>
    %70 = vector.shape_cast %69 : vector<2x24xf32> to vector<2x24x1xf32>
    %71 = tpu.reciprocal %70 {approx = true} : vector<2x24x1xf32> -> vector<2x24x1xf32>
    %72 = vector.broadcast %71 : vector<2x24x1xf32> to vector<2x24x24xf32>
    %73 = arith.mulf %68, %72 : vector<2x24x24xf32>
    %74 = arith.truncf %73 : vector<2x24x24xf32> to vector<2x24x24xbf16>
    "tpu.trace_start"() <{level = 10 : i32, message = "bqk,bkd->bqd"}> : () -> ()
    %cst_29 = arith.constant dense<0.000000e+00> : vector<2x24x8xf32>
    %75 = tpu.matmul %74, %58, %cst_29 {dimension_numbers = #tpu.dot_dimension_numbers<[2], [1], [1], [2], [0, 0, 0, 1, 1, 2], [0], [0]>} : vector<2x24x24xbf16>, vector<2x24x8xbf16>, vector<2x24x8xf32> -> vector<2x24x8xf32>
    "tpu.trace_stop"() : () -> ()
    %76 = vector.shape_cast %75 : vector<2x24x8xf32> to vector<48x8xf32>
    %77 = arith.truncf %76 : vector<48x8xf32> to vector<48x8xbf16>
    %78 = vector.extract_strided_slice %51 {offsets = [0, 0], sizes = [8, 32], strides = [1, 1]} : vector<32x32xbf16> to vector<8x32xbf16>
    %cst_30 = arith.constant dense<0.000000e+00> : vector<48x32xf32>
    %79 = tpu.matmul %77, %78, %cst_30 {dimension_numbers = #tpu.dot_dimension_numbers<[1], [0], [0], [1], [0, 0, 1, 1], [], []>} : vector<48x8xbf16>, vector<8x32xbf16>, vector<48x32xf32> -> vector<48x32xf32>
    %80 = arith.addf %52, %79 : vector<48x32xf32>
    %81 = vector.extract_strided_slice %39 {offsets = [0, 0, 8], sizes = [2, 24, 8], strides = [1, 1, 1]} : vector<2x24x32xf32> to vector<2x24x8xf32>
    %82 = arith.truncf %81 : vector<2x24x8xf32> to vector<2x24x8xbf16>
    %83 = vector.extract_strided_slice %41 {offsets = [0, 0, 8], sizes = [2, 24, 8], strides = [1, 1, 1]} : vector<2x24x32xf32> to vector<2x24x8xf32>
    %84 = arith.truncf %83 : vector<2x24x8xf32> to vector<2x24x8xbf16>
    %85 = vector.extract_strided_slice %43 {offsets = [0, 0, 8], sizes = [2, 24, 8], strides = [1, 1, 1]} : vector<2x24x32xf32> to vector<2x24x8xf32>
    %86 = arith.truncf %85 : vector<2x24x8xf32> to vector<2x24x8xbf16>
    "tpu.trace_start"() <{level = 10 : i32, message = "bqd,bkd->bqk"}> : () -> ()
    %cst_31 = arith.constant dense<0.000000e+00> : vector<2x24x24xf32>
    %87 = tpu.matmul %82, %84, %cst_31 {dimension_numbers = #tpu.dot_dimension_numbers<[2], [2], [1], [1], [0, 0, 0, 1, 1, 1], [0], [0]>} : vector<2x24x8xbf16>, vector<2x24x8xbf16>, vector<2x24x24xf32> -> vector<2x24x24xf32>
    "tpu.trace_stop"() : () -> ()
    %cst_32 = arith.constant 0.353553385 : f32
    %88 = vector.broadcast %cst_32 : f32 to vector<2x24x24xf32>
    %89 = arith.mulf %87, %88 : vector<2x24x24xf32>
    %90 = vector.broadcast %49 : vector<1x1x24xf32> to vector<2x24x24xf32>
    %91 = arith.addf %89, %90 : vector<2x24x24xf32>
    %cst_33 = arith.constant dense<0xFF800000> : vector<2x24xf32>
    %92 = vector.multi_reduction <maximumf>, %91, %cst_33 [2] : vector<2x24x24xf32> to vector<2x24xf32>
    %93 = vector.shape_cast %92 : vector<2x24xf32> to vector<2x24x1xf32>
    %94 = vector.broadcast %93 : vector<2x24x1xf32> to vector<2x24x24xf32>
    %95 = arith.subf %91, %94 : vector<2x24x24xf32>
    %96 = math.exp %95 : vector<2x24x24xf32>
    %cst_34 = arith.constant dense<0.000000e+00> : vector<2x24xf32>
    %97 = vector.multi_reduction <add>, %96, %cst_34 [2] : vector<2x24x24xf32> to vector<2x24xf32>
    %98 = vector.shape_cast %97 : vector<2x24xf32> to vector<2x24x1xf32>
    %99 = tpu.reciprocal %98 {approx = true} : vector<2x24x1xf32> -> vector<2x24x1xf32>
    %100 = vector.broadcast %99 : vector<2x24x1xf32> to vector<2x24x24xf32>
    %101 = arith.mulf %96, %100 : vector<2x24x24xf32>
    %102 = arith.truncf %101 : vector<2x24x24xf32> to vector<2x24x24xbf16>
    "tpu.trace_start"() <{level = 10 : i32, message = "bqk,bkd->bqd"}> : () -> ()
    %cst_35 = arith.constant dense<0.000000e+00> : vector<2x24x8xf32>
    %103 = tpu.matmul %102, %86, %cst_35 {dimension_numbers = #tpu.dot_dimension_numbers<[2], [1], [1], [2], [0, 0, 0, 1, 1, 2], [0], [0]>} : vector<2x24x24xbf16>, vector<2x24x8xbf16>, vector<2x24x8xf32> -> vector<2x24x8xf32>
    "tpu.trace_stop"() : () -> ()
    %104 = vector.shape_cast %103 : vector<2x24x8xf32> to vector<48x8xf32>
    %105 = arith.truncf %104 : vector<48x8xf32> to vector<48x8xbf16>
    %106 = vector.extract_strided_slice %51 {offsets = [8, 0], sizes = [8, 32], strides = [1, 1]} : vector<32x32xbf16> to vector<8x32xbf16>
    %cst_36 = arith.constant dense<0.000000e+00> : vector<48x32xf32>
    %107 = tpu.matmul %105, %106, %cst_36 {dimension_numbers = #tpu.dot_dimension_numbers<[1], [0], [0], [1], [0, 0, 1, 1], [], []>} : vector<48x8xbf16>, vector<8x32xbf16>, vector<48x32xf32> -> vector<48x32xf32>
    %108 = arith.addf %80, %107 : vector<48x32xf32>
    %109 = vector.extract_strided_slice %39 {offsets = [0, 0, 16], sizes = [2, 24, 8], strides = [1, 1, 1]} : vector<2x24x32xf32> to vector<2x24x8xf32>
    %110 = arith.truncf %109 : vector<2x24x8xf32> to vector<2x24x8xbf16>
    %111 = vector.extract_strided_slice %41 {offsets = [0, 0, 16], sizes = [2, 24, 8], strides = [1, 1, 1]} : vector<2x24x32xf32> to vector<2x24x8xf32>
    %112 = arith.truncf %111 : vector<2x24x8xf32> to vector<2x24x8xbf16>
    %113 = vector.extract_strided_slice %43 {offsets = [0, 0, 16], sizes = [2, 24, 8], strides = [1, 1, 1]} : vector<2x24x32xf32> to vector<2x24x8xf32>
    %114 = arith.truncf %113 : vector<2x24x8xf32> to vector<2x24x8xbf16>
    "tpu.trace_start"() <{level = 10 : i32, message = "bqd,bkd->bqk"}> : () -> ()
    %cst_37 = arith.constant dense<0.000000e+00> : vector<2x24x24xf32>
    %115 = tpu.matmul %110, %112, %cst_37 {dimension_numbers = #tpu.dot_dimension_numbers<[2], [2], [1], [1], [0, 0, 0, 1, 1, 1], [0], [0]>} : vector<2x24x8xbf16>, vector<2x24x8xbf16>, vector<2x24x24xf32> -> vector<2x24x24xf32>
    "tpu.trace_stop"() : () -> ()
    %cst_38 = arith.constant 0.353553385 : f32
    %116 = vector.broadcast %cst_38 : f32 to vector<2x24x24xf32>
    %117 = arith.mulf %115, %116 : vector<2x24x24xf32>
    %118 = vector.broadcast %49 : vector<1x1x24xf32> to vector<2x24x24xf32>
    %119 = arith.addf %117, %118 : vector<2x24x24xf32>
    %cst_39 = arith.constant dense<0xFF800000> : vector<2x24xf32>
    %120 = vector.multi_reduction <maximumf>, %119, %cst_39 [2] : vector<2x24x24xf32> to vector<2x24xf32>
    %121 = vector.shape_cast %120 : vector<2x24xf32> to vector<2x24x1xf32>
    %122 = vector.broadcast %121 : vector<2x24x1xf32> to vector<2x24x24xf32>
    %123 = arith.subf %119, %122 : vector<2x24x24xf32>
    %124 = math.exp %123 : vector<2x24x24xf32>
    %cst_40 = arith.constant dense<0.000000e+00> : vector<2x24xf32>
    %125 = vector.multi_reduction <add>, %124, %cst_40 [2] : vector<2x24x24xf32> to vector<2x24xf32>
    %126 = vector.shape_cast %125 : vector<2x24xf32> to vector<2x24x1xf32>
    %127 = tpu.reciprocal %126 {approx = true} : vector<2x24x1xf32> -> vector<2x24x1xf32>
    %128 = vector.broadcast %127 : vector<2x24x1xf32> to vector<2x24x24xf32>
    %129 = arith.mulf %124, %128 : vector<2x24x24xf32>
    %130 = arith.truncf %129 : vector<2x24x24xf32> to vector<2x24x24xbf16>
    "tpu.trace_start"() <{level = 10 : i32, message = "bqk,bkd->bqd"}> : () -> ()
    %cst_41 = arith.constant dense<0.000000e+00> : vector<2x24x8xf32>
    %131 = tpu.matmul %130, %114, %cst_41 {dimension_numbers = #tpu.dot_dimension_numbers<[2], [1], [1], [2], [0, 0, 0, 1, 1, 2], [0], [0]>} : vector<2x24x24xbf16>, vector<2x24x8xbf16>, vector<2x24x8xf32> -> vector<2x24x8xf32>
    "tpu.trace_stop"() : () -> ()
    %132 = vector.shape_cast %131 : vector<2x24x8xf32> to vector<48x8xf32>
    %133 = arith.truncf %132 : vector<48x8xf32> to vector<48x8xbf16>
    %134 = vector.extract_strided_slice %51 {offsets = [16, 0], sizes = [8, 32], strides = [1, 1]} : vector<32x32xbf16> to vector<8x32xbf16>
    %cst_42 = arith.constant dense<0.000000e+00> : vector<48x32xf32>
    %135 = tpu.matmul %133, %134, %cst_42 {dimension_numbers = #tpu.dot_dimension_numbers<[1], [0], [0], [1], [0, 0, 1, 1], [], []>} : vector<48x8xbf16>, vector<8x32xbf16>, vector<48x32xf32> -> vector<48x32xf32>
    %136 = arith.addf %108, %135 : vector<48x32xf32>
    %137 = vector.extract_strided_slice %39 {offsets = [0, 0, 24], sizes = [2, 24, 8], strides = [1, 1, 1]} : vector<2x24x32xf32> to vector<2x24x8xf32>
    %138 = arith.truncf %137 : vector<2x24x8xf32> to vector<2x24x8xbf16>
    %139 = vector.extract_strided_slice %41 {offsets = [0, 0, 24], sizes = [2, 24, 8], strides = [1, 1, 1]} : vector<2x24x32xf32> to vector<2x24x8xf32>
    %140 = arith.truncf %139 : vector<2x24x8xf32> to vector<2x24x8xbf16>
    %141 = vector.extract_strided_slice %43 {offsets = [0, 0, 24], sizes = [2, 24, 8], strides = [1, 1, 1]} : vector<2x24x32xf32> to vector<2x24x8xf32>
    %142 = arith.truncf %141 : vector<2x24x8xf32> to vector<2x24x8xbf16>
    "tpu.trace_start"() <{level = 10 : i32, message = "bqd,bkd->bqk"}> : () -> ()
    %cst_43 = arith.constant dense<0.000000e+00> : vector<2x24x24xf32>
    %143 = tpu.matmul %138, %140, %cst_43 {dimension_numbers = #tpu.dot_dimension_numbers<[2], [2], [1], [1], [0, 0, 0, 1, 1, 1], [0], [0]>} : vector<2x24x8xbf16>, vector<2x24x8xbf16>, vector<2x24x24xf32> -> vector<2x24x24xf32>
    "tpu.trace_stop"() : () -> ()
    %cst_44 = arith.constant 0.353553385 : f32
    %144 = vector.broadcast %cst_44 : f32 to vector<2x24x24xf32>
    %145 = arith.mulf %143, %144 : vector<2x24x24xf32>
    %146 = vector.broadcast %49 : vector<1x1x24xf32> to vector<2x24x24xf32>
    %147 = arith.addf %145, %146 : vector<2x24x24xf32>
    %cst_45 = arith.constant dense<0xFF800000> : vector<2x24xf32>
    %148 = vector.multi_reduction <maximumf>, %147, %cst_45 [2] : vector<2x24x24xf32> to vector<2x24xf32>
    %149 = vector.shape_cast %148 : vector<2x24xf32> to vector<2x24x1xf32>
    %150 = vector.broadcast %149 : vector<2x24x1xf32> to vector<2x24x24xf32>
    %151 = arith.subf %147, %150 : vector<2x24x24xf32>
    %152 = math.exp %151 : vector<2x24x24xf32>
    %cst_46 = arith.constant dense<0.000000e+00> : vector<2x24xf32>
    %153 = vector.multi_reduction <add>, %152, %cst_46 [2] : vector<2x24x24xf32> to vector<2x24xf32>
    %154 = vector.shape_cast %153 : vector<2x24xf32> to vector<2x24x1xf32>
    %155 = tpu.reciprocal %154 {approx = true} : vector<2x24x1xf32> -> vector<2x24x1xf32>
    %156 = vector.broadcast %155 : vector<2x24x1xf32> to vector<2x24x24xf32>
    %157 = arith.mulf %152, %156 : vector<2x24x24xf32>
    %158 = arith.truncf %157 : vector<2x24x24xf32> to vector<2x24x24xbf16>
    "tpu.trace_start"() <{level = 10 : i32, message = "bqk,bkd->bqd"}> : () -> ()
    %cst_47 = arith.constant dense<0.000000e+00> : vector<2x24x8xf32>
    %159 = tpu.matmul %158, %142, %cst_47 {dimension_numbers = #tpu.dot_dimension_numbers<[2], [1], [1], [2], [0, 0, 0, 1, 1, 2], [0], [0]>} : vector<2x24x24xbf16>, vector<2x24x8xbf16>, vector<2x24x8xf32> -> vector<2x24x8xf32>
    "tpu.trace_stop"() : () -> ()
    %160 = vector.shape_cast %159 : vector<2x24x8xf32> to vector<48x8xf32>
    %161 = arith.truncf %160 : vector<48x8xf32> to vector<48x8xbf16>
    %162 = vector.extract_strided_slice %51 {offsets = [24, 0], sizes = [8, 32], strides = [1, 1]} : vector<32x32xbf16> to vector<8x32xbf16>
    %cst_48 = arith.constant dense<0.000000e+00> : vector<48x32xf32>
    %163 = tpu.matmul %161, %162, %cst_48 {dimension_numbers = #tpu.dot_dimension_numbers<[1], [0], [0], [1], [0, 0, 1, 1], [], []>} : vector<48x8xbf16>, vector<8x32xbf16>, vector<48x32xf32> -> vector<48x32xf32>
    %164 = arith.addf %136, %163 : vector<48x32xf32>
    %165 = arith.addf %3, %164 : vector<48x32xf32>
    %c0_49 = arith.constant 0 : index
    %c0_50 = arith.constant 0 : index
    %c0_51 = arith.constant 0 : index
    %166 = vector.load %arg11[%c0_49, %c0_50, %c0_51] : memref<1x1x32xf32, #tpu.memory_space<vmem>>, vector<1x1x32xf32>
    %167 = vector.shape_cast %166 : vector<1x1x32xf32> to vector<1x32xf32>
    %168 = vector.broadcast %167 : vector<1x32xf32> to vector<48x32xf32>
    %169 = arith.addf %165, %168 : vector<48x32xf32>
    %c0_52 = arith.constant 0 : index
    %c0_53 = arith.constant 0 : index
    %c0_54 = arith.constant 0 : index
    %170 = vector.load %arg12[%c0_52, %c0_53, %c0_54] : memref<1x1x32xf32, #tpu.memory_space<vmem>>, vector<1x1x32xf32>
    %171 = vector.shape_cast %170 : vector<1x1x32xf32> to vector<1x32xf32>
    %c0_55 = arith.constant 0 : index
    %c0_56 = arith.constant 0 : index
    %c0_57 = arith.constant 0 : index
    %172 = vector.load %arg13[%c0_55, %c0_56, %c0_57] : memref<1x1x32xf32, #tpu.memory_space<vmem>>, vector<1x1x32xf32>
    %173 = vector.shape_cast %172 : vector<1x1x32xf32> to vector<1x32xf32>
    %cst_58 = arith.constant dense<0.000000e+00> : vector<48xf32>
    %174 = vector.multi_reduction <add>, %169, %cst_58 [1] : vector<48x32xf32> to vector<48xf32>
    %175 = vector.shape_cast %174 : vector<48xf32> to vector<48x1xf32>
    %cst_59 = arith.constant 3.200000e+01 : f32
    %176 = vector.broadcast %cst_59 : f32 to vector<48x1xf32>
    %177 = arith.divf %175, %176 : vector<48x1xf32>
    %178 = vector.broadcast %177 : vector<48x1xf32> to vector<48x32xf32>
    %179 = arith.subf %169, %178 : vector<48x32xf32>
    %180 = arith.mulf %179, %179 : vector<48x32xf32>
    %cst_60 = arith.constant dense<0.000000e+00> : vector<48xf32>
    %181 = vector.multi_reduction <add>, %180, %cst_60 [1] : vector<48x32xf32> to vector<48xf32>
    %182 = vector.shape_cast %181 : vector<48xf32> to vector<48x1xf32>
    %cst_61 = arith.constant 3.200000e+01 : f32
    %183 = vector.broadcast %cst_61 : f32 to vector<48x1xf32>
    %184 = arith.divf %182, %183 : vector<48x1xf32>
    %185 = vector.broadcast %177 : vector<48x1xf32> to vector<48x32xf32>
    %186 = arith.subf %169, %185 : vector<48x32xf32>
    %cst_62 = arith.constant 9.99999974E-6 : f32
    %187 = vector.broadcast %cst_62 : f32 to vector<48x1xf32>
    %188 = arith.addf %184, %187 : vector<48x1xf32>
    %189 = math.rsqrt %188 : vector<48x1xf32>
    %190 = vector.broadcast %189 : vector<48x1xf32> to vector<48x32xf32>
    %191 = arith.mulf %186, %190 : vector<48x32xf32>
    %192 = vector.broadcast %171 : vector<1x32xf32> to vector<48x32xf32>
    %193 = arith.mulf %191, %192 : vector<48x32xf32>
    %194 = vector.broadcast %173 : vector<1x32xf32> to vector<48x32xf32>
    %195 = arith.addf %193, %194 : vector<48x32xf32>
    %196 = arith.truncf %195 : vector<48x32xf32> to vector<48x32xbf16>
    %c0_63 = arith.constant 0 : index
    %c0_64 = arith.constant 0 : index
    %c0_65 = arith.constant 0 : index
    %197 = vector.load %arg14[%c0_63, %c0_64, %c0_65] : memref<1x32x64xbf16, #tpu.memory_space<vmem>>, vector<1x32x64xbf16>
    %198 = vector.shape_cast %197 : vector<1x32x64xbf16> to vector<32x64xbf16>
    %cst_66 = arith.constant dense<0.000000e+00> : vector<48x64xf32>
    %199 = tpu.matmul %196, %198, %cst_66 {dimension_numbers = #tpu.dot_dimension_numbers<[1], [0], [0], [1], [0, 0, 1, 1], [], []>} : vector<48x32xbf16>, vector<32x64xbf16>, vector<48x64xf32> -> vector<48x64xf32>
    %c0_67 = arith.constant 0 : index
    %c0_68 = arith.constant 0 : index
    %c0_69 = arith.constant 0 : index
    %200 = vector.load %arg15[%c0_67, %c0_68, %c0_69] : memref<1x1x64xf32, #tpu.memory_space<vmem>>, vector<1x1x64xf32>
    %201 = vector.shape_cast %200 : vector<1x1x64xf32> to vector<1x64xf32>
    %202 = vector.broadcast %201 : vector<1x64xf32> to vector<48x64xf32>
    %203 = arith.addf %199, %202 : vector<48x64xf32>
    %204 = arith.mulf %203, %203 : vector<48x64xf32>
    %205 = arith.mulf %203, %204 : vector<48x64xf32>
    %cst_70 = arith.constant 4.471500e-02 : f32
    %206 = vector.broadcast %cst_70 : f32 to vector<48x64xf32>
    %207 = arith.mulf %206, %205 : vector<48x64xf32>
    %208 = arith.addf %203, %207 : vector<48x64xf32>
    %cst_71 = arith.constant 0.797884583 : f32
    %209 = vector.broadcast %cst_71 : f32 to vector<48x64xf32>
    %210 = arith.mulf %209, %208 : vector<48x64xf32>
    %211 = math.tanh %210 : vector<48x64xf32>
    %cst_72 = arith.constant 1.000000e+00 : f32
    %212 = vector.broadcast %cst_72 : f32 to vector<48x64xf32>
    %213 = arith.addf %212, %211 : vector<48x64xf32>
    %cst_73 = arith.constant 5.000000e-01 : f32
    %214 = vector.broadcast %cst_73 : f32 to vector<48x64xf32>
    %215 = arith.mulf %214, %213 : vector<48x64xf32>
    %216 = arith.mulf %203, %215 : vector<48x64xf32>
    %217 = arith.truncf %216 : vector<48x64xf32> to vector<48x64xbf16>
    %c0_74 = arith.constant 0 : index
    %c0_75 = arith.constant 0 : index
    %c0_76 = arith.constant 0 : index
    %218 = vector.load %arg16[%c0_74, %c0_75, %c0_76] : memref<1x64x32xbf16, #tpu.memory_space<vmem>>, vector<1x64x32xbf16>
    %219 = vector.shape_cast %218 : vector<1x64x32xbf16> to vector<64x32xbf16>
    %cst_77 = arith.constant dense<0.000000e+00> : vector<48x32xf32>
    %220 = tpu.matmul %217, %219, %cst_77 {dimension_numbers = #tpu.dot_dimension_numbers<[1], [0], [0], [1], [0, 0, 1, 1], [], []>} : vector<48x64xbf16>, vector<64x32xbf16>, vector<48x32xf32> -> vector<48x32xf32>
    %c0_78 = arith.constant 0 : index
    %c0_79 = arith.constant 0 : index
    %c0_80 = arith.constant 0 : index
    %221 = vector.load %arg17[%c0_78, %c0_79, %c0_80] : memref<1x1x32xf32, #tpu.memory_space<vmem>>, vector<1x1x32xf32>
    %222 = vector.shape_cast %221 : vector<1x1x32xf32> to vector<1x32xf32>
    %223 = vector.broadcast %222 : vector<1x32xf32> to vector<48x32xf32>
    %224 = arith.addf %220, %223 : vector<48x32xf32>
    %225 = arith.addf %169, %224 : vector<48x32xf32>
    %c0_81 = arith.constant 0 : index
    %c0_82 = arith.constant 0 : index
    %226 = vector.load %arg23[%c0_81, %c0_82] : memref<48x32xf32, #tpu.memory_space<vmem>>, vector<48x32xf32>
    tpu.vector_store %arg23[%c0_81, %c0_82], %225 {strides = array<i32>} : memref<48x32xf32, #tpu.memory_space<vmem>>, vector<48x32xf32>,
    %c1_i32 = arith.constant 1 : i32
    %227 = arith.cmpi eq, %arg0, %c1_i32 : i32
    %228 = arith.extui %227 : i1 to i32
    %c0_i32_83 = arith.constant 0 : i32
    %229 = arith.cmpi ne, %228, %c0_i32_83 : i32
    scf.if %229 {
      %c0_84 = arith.constant 0 : index
      %c0_85 = arith.constant 0 : index
      %230 = vector.load %arg18[%c0_84, %c0_85] : memref<1x32xf32, #tpu.memory_space<vmem>>, vector<1x32xf32>
      %c0_86 = arith.constant 0 : index
      %c0_87 = arith.constant 0 : index
      %231 = vector.load %arg19[%c0_86, %c0_87] : memref<1x32xf32, #tpu.memory_space<vmem>>, vector<1x32xf32>
      %cst_88 = arith.constant dense<0.000000e+00> : vector<48xf32>
      %232 = vector.multi_reduction <add>, %225, %cst_88 [1] : vector<48x32xf32> to vector<48xf32>
      %233 = vector.shape_cast %232 : vector<48xf32> to vector<48x1xf32>
      %cst_89 = arith.constant 3.200000e+01 : f32
      %234 = vector.broadcast %cst_89 : f32 to vector<48x1xf32>
      %235 = arith.divf %233, %234 : vector<48x1xf32>
      %236 = vector.broadcast %235 : vector<48x1xf32> to vector<48x32xf32>
      %237 = arith.subf %225, %236 : vector<48x32xf32>
      %238 = arith.mulf %237, %237 : vector<48x32xf32>
      %cst_90 = arith.constant dense<0.000000e+00> : vector<48xf32>
      %239 = vector.multi_reduction <add>, %238, %cst_90 [1] : vector<48x32xf32> to vector<48xf32>
      %240 = vector.shape_cast %239 : vector<48xf32> to vector<48x1xf32>
      %cst_91 = arith.constant 3.200000e+01 : f32
      %241 = vector.broadcast %cst_91 : f32 to vector<48x1xf32>
      %242 = arith.divf %240, %241 : vector<48x1xf32>
      %243 = vector.broadcast %235 : vector<48x1xf32> to vector<48x32xf32>
      %244 = arith.subf %225, %243 : vector<48x32xf32>
      %cst_92 = arith.constant 9.99999974E-6 : f32
      %245 = vector.broadcast %cst_92 : f32 to vector<48x1xf32>
      %246 = arith.addf %242, %245 : vector<48x1xf32>
      %247 = math.rsqrt %246 : vector<48x1xf32>
      %248 = vector.broadcast %247 : vector<48x1xf32> to vector<48x32xf32>
      %249 = arith.mulf %244, %248 : vector<48x32xf32>
      %250 = vector.broadcast %230 : vector<1x32xf32> to vector<48x32xf32>
      %251 = arith.mulf %249, %250 : vector<48x32xf32>
      %252 = vector.broadcast %231 : vector<1x32xf32> to vector<48x32xf32>
      %253 = arith.addf %251, %252 : vector<48x32xf32>
      %254 = arith.truncf %253 : vector<48x32xf32> to vector<48x32xbf16>
      %c0_93 = arith.constant 0 : index
      %c0_94 = arith.constant 0 : index
      %255 = vector.load %arg20[%c0_93, %c0_94] : memref<32x128xbf16, #tpu.memory_space<vmem>>, vector<32x128xbf16>
      %cst_95 = arith.constant dense<0.000000e+00> : vector<48x128xf32>
      %256 = tpu.matmul %254, %255, %cst_95 {dimension_numbers = #tpu.dot_dimension_numbers<[1], [0], [0], [1], [0, 0, 1, 1], [], []>} : vector<48x32xbf16>, vector<32x128xbf16>, vector<48x128xf32> -> vector<48x128xf32>
      %c0_96 = arith.constant 0 : index
      %c0_97 = arith.constant 0 : index
      %257 = vector.load %arg21[%c0_96, %c0_97] : memref<1x128xf32, #tpu.memory_space<vmem>>, vector<1x128xf32>
      %258 = vector.broadcast %257 : vector<1x128xf32> to vector<48x128xf32>
      %259 = arith.addf %256, %258 : vector<48x128xf32>
      %c0_98 = arith.constant 0 : index
      %c0_99 = arith.constant 0 : index
      %260 = vector.load %arg22[%c0_98, %c0_99] : memref<48x128xf32, #tpu.memory_space<vmem>>, vector<48x128xf32>
      tpu.vector_store %arg22[%c0_98, %c0_99], %259 {strides = array<i32>} : memref<48x128xf32, #tpu.memory_space<vmem>>, vector<48x128xf32>,
    } else {
    }
    return
  }
  func.func @transform_0(%arg0: i32) -> (i32, i32) {
    %c0_i32 = arith.constant 0 : i32
    %c0_i32_0 = arith.constant 0 : i32
    %c0_i32_1 = arith.constant 0 : i32
    return %c0_i32, %c0_i32_0 : i32, i32
  }
  func.func @transform_1(%arg0: i32) -> (i32, i32) {
    %c0_i32 = arith.constant 0 : i32
    %c0_i32_0 = arith.constant 0 : i32
    %c0_i32_1 = arith.constant 0 : i32
    return %c0_i32, %c0_i32_0 : i32, i32
  }
  func.func @transform_2(%arg0: i32) -> (i32, i32) {
    %c0_i32 = arith.constant 0 : i32
    %c0_i32_0 = arith.constant 0 : i32
    %c0_i32_1 = arith.constant 0 : i32
    return %c0_i32, %c0_i32_0 : i32, i32
  }
  func.func @transform_3(%arg0: i32) -> (i32, i32) {
    %c0_i32 = arith.constant 0 : i32
    %c0_i32_0 = arith.constant 0 : i32
    %c0_i32_1 = arith.constant 0 : i32
    return %c0_i32, %c0_i32_0 : i32, i32
  }
  func.func @transform_4(%arg0: i32) -> (i32, i32) {
    %c0_i32 = arith.constant 0 : i32
    %c0_i32_0 = arith.constant 0 : i32
    %c0_i32_1 = arith.constant 0 : i32
    return %c0_i32, %c0_i32_0 : i32, i32
  }
  func.func @transform_5(%arg0: i32) -> (i32, i32, i32) {
    %c0_i32 = arith.constant 0 : i32
    %c0_i32_0 = arith.constant 0 : i32
    %c0_i32_1 = arith.constant 0 : i32
    return %arg0, %c0_i32, %c0_i32_0 : i32, i32, i32
  }
  func.func @transform_6(%arg0: i32) -> (i32, i32, i32) {
    %c0_i32 = arith.constant 0 : i32
    %c0_i32_0 = arith.constant 0 : i32
    %c0_i32_1 = arith.constant 0 : i32
    return %arg0, %c0_i32, %c0_i32_0 : i32, i32, i32
  }
  func.func @transform_7(%arg0: i32) -> (i32, i32, i32) {
    %c0_i32 = arith.constant 0 : i32
    %c0_i32_0 = arith.constant 0 : i32
    %c0_i32_1 = arith.constant 0 : i32
    return %arg0, %c0_i32, %c0_i32_0 : i32, i32, i32
  }
  func.func @transform_8(%arg0: i32) -> (i32, i32, i32) {
    %c0_i32 = arith.constant 0 : i32
    %c0_i32_0 = arith.constant 0 : i32
    %c0_i32_1 = arith.constant 0 : i32
    return %arg0, %c0_i32, %c0_i32_0 : i32, i32, i32
  }
  func.func @transform_9(%arg0: i32) -> (i32, i32, i32) {
    %c0_i32 = arith.constant 0 : i32
    %c0_i32_0 = arith.constant 0 : i32
    %c0_i32_1 = arith.constant 0 : i32
    return %arg0, %c0_i32, %c0_i32_0 : i32, i32, i32
  }
  func.func @transform_10(%arg0: i32) -> (i32, i32, i32) {
    %c0_i32 = arith.constant 0 : i32
    %c0_i32_0 = arith.constant 0 : i32
    %c0_i32_1 = arith.constant 0 : i32
    return %arg0, %c0_i32, %c0_i32_0 : i32, i32, i32
  }
  func.func @transform_11(%arg0: i32) -> (i32, i32, i32) {
    %c0_i32 = arith.constant 0 : i32
    %c0_i32_0 = arith.constant 0 : i32
    %c0_i32_1 = arith.constant 0 : i32
    return %arg0, %c0_i32, %c0_i32_0 : i32, i32, i32
  }
  func.func @transform_12(%arg0: i32) -> (i32, i32, i32) {
    %c0_i32 = arith.constant 0 : i32
    %c0_i32_0 = arith.constant 0 : i32
    %c0_i32_1 = arith.constant 0 : i32
    return %arg0, %c0_i32, %c0_i32_0 : i32, i32, i32
  }
  func.func @transform_13(%arg0: i32) -> (i32, i32, i32) {
    %c0_i32 = arith.constant 0 : i32
    %c0_i32_0 = arith.constant 0 : i32
    %c0_i32_1 = arith.constant 0 : i32
    return %arg0, %c0_i32, %c0_i32_0 : i32, i32, i32
  }
  func.func @transform_14(%arg0: i32) -> (i32, i32, i32) {
    %c0_i32 = arith.constant 0 : i32
    %c0_i32_0 = arith.constant 0 : i32
    %c0_i32_1 = arith.constant 0 : i32
    return %arg0, %c0_i32, %c0_i32_0 : i32, i32, i32
  }
  func.func @transform_15(%arg0: i32) -> (i32, i32, i32) {
    %c0_i32 = arith.constant 0 : i32
    %c0_i32_0 = arith.constant 0 : i32
    %c0_i32_1 = arith.constant 0 : i32
    return %arg0, %c0_i32, %c0_i32_0 : i32, i32, i32
  }
  func.func @transform_16(%arg0: i32) -> (i32, i32, i32) {
    %c0_i32 = arith.constant 0 : i32
    %c0_i32_0 = arith.constant 0 : i32
    %c0_i32_1 = arith.constant 0 : i32
    return %arg0, %c0_i32, %c0_i32_0 : i32, i32, i32
  }
  func.func @transform_17(%arg0: i32) -> (i32, i32) {
    %c0_i32 = arith.constant 0 : i32
    %c0_i32_0 = arith.constant 0 : i32
    %c0_i32_1 = arith.constant 0 : i32
    return %c0_i32, %c0_i32_0 : i32, i32
  }
  func.func @transform_18(%arg0: i32) -> (i32, i32) {
    %c0_i32 = arith.constant 0 : i32
    %c0_i32_0 = arith.constant 0 : i32
    %c0_i32_1 = arith.constant 0 : i32
    return %c0_i32, %c0_i32_0 : i32, i32
  }
  func.func @transform_19(%arg0: i32) -> (i32, i32) {
    %c0_i32 = arith.constant 0 : i32
    %c0_i32_0 = arith.constant 0 : i32
    %c0_i32_1 = arith.constant 0 : i32
    return %c0_i32, %c0_i32_0 : i32, i32
  }
  func.func @transform_20(%arg0: i32) -> (i32, i32) {
    %c0_i32 = arith.constant 0 : i32
    %c0_i32_0 = arith.constant 0 : i32
    %c0_i32_1 = arith.constant 0 : i32
    return %c0_i32, %c0_i32_0 : i32, i32
  }
  func.func @transform_21(%arg0: i32) -> (i32, i32) {
    %c0_i32 = arith.constant 0 : i32
    %c0_i32_0 = arith.constant 0 : i32
    %c0_i32_1 = arith.constant 0 : i32
    return %c0_i32, %c0_i32_0 : i32, i32
  }
}

</mosaic_0001>

<llo_original>
// kernel: vit_forward.1
$region0: #{vit_forward.1}
  #allocation0 [shape = 'u32[]', space=smem, size = 0x4, offset = 0x4, fixed_abs, tag = 'smem constant byte address 0x4 - core index']
  #allocation1 [shape = 'u32[72,128]{1,0:T(1,128)}', space=vmem, size = 0x9000, scoped, tag = 'internal scratch']
  #allocation2 [shape = 'f32[48,32]{1,0:T(8,128)}', space=vmem, size = 0x6000, scoped, tag = 'scratch operand']
  %s0 = inlined_call_operand.vmem [shape: bf16[32,48], index: 0, kind: input, shape index: {}]
  %s1 = inlined_call_operand.vmem [shape: bf16[48,32], index: 1, kind: input, shape index: {}]
  %s2 = inlined_call_operand.vmem [shape: f32[1,32], index: 2, kind: input, shape index: {}]
  %s3 = inlined_call_operand.vmem [shape: f32[1,32], index: 3, kind: input, shape index: {}]
  %s4 = inlined_call_operand.vmem [shape: f32[17,32], index: 4, kind: input, shape index: {}]
  %s5 = inlined_call_operand.vmem [shape: f32[2,1,32], index: 5, kind: input, shape index: {}]
  %s6 = inlined_call_operand.vmem [shape: f32[2,1,32], index: 6, kind: input, shape index: {}]
  %s7 = inlined_call_operand.vmem [shape: bf16[2,32,96], index: 7, kind: input, shape index: {}]
  %s8 = inlined_call_operand.vmem [shape: f32[2,1,96], index: 8, kind: input, shape index: {}]
  %s9 = inlined_call_operand.vmem [shape: bf16[2,32,32], index: 9, kind: input, shape index: {}]
  %s10 = inlined_call_operand.vmem [shape: f32[2,1,32], index: 10, kind: input, shape index: {}]
  %s11 = inlined_call_operand.vmem [shape: f32[2,1,32], index: 11, kind: input, shape index: {}]
  %s12 = inlined_call_operand.vmem [shape: f32[2,1,32], index: 12, kind: input, shape index: {}]
  %s13 = inlined_call_operand.vmem [shape: bf16[2,32,64], index: 13, kind: input, shape index: {}]
  %s14 = inlined_call_operand.vmem [shape: f32[2,1,64], index: 14, kind: input, shape index: {}]
  %s15 = inlined_call_operand.vmem [shape: bf16[2,64,32], index: 15, kind: input, shape index: {}]
  %s16 = inlined_call_operand.vmem [shape: f32[2,1,32], index: 16, kind: input, shape index: {}]
  %s17 = inlined_call_operand.vmem [shape: f32[1,32], index: 17, kind: input, shape index: {}]
  %s18 = inlined_call_operand.vmem [shape: f32[1,32], index: 18, kind: input, shape index: {}]
  %s19 = inlined_call_operand.vmem [shape: bf16[32,128], index: 19, kind: input, shape index: {}]
  %s20 = inlined_call_operand.vmem [shape: f32[1,128], index: 20, kind: input, shape index: {}]
  %s21 = inlined_call_operand.vmem [shape: f32[48,128], index: 21, kind: output, shape index: {}]
  %s22 = sld [smem:[#allocation0]]
  $region125: #{vit_forward.1} parent=0
    _
  %s24 = ssub.s32 1, %s22
  %s25 = scalar_select 0, %s24, %s22
  loop: start=0, step=1, limit=4
  $region2: #{vit_forward.1} parent=0 // loop_pre_header
    _
  $region3: #{vit_forward.1} parent=0 // loop_header
    %s27 = sphi 0, %s31
    %p28 = scmp.ge.s32.totalorder %s27, 4
    %s35 = sphi 0, %s35
    %s37 = sphi 0, %s35
    %s38 = sphi 0, %s37
    %s52 = sphi 0, %s38
    %s56 = sphi 0, %s56
    %s58 = sphi 0, %s56
    %s59 = sphi 0, %s58
    %s73 = sphi 0, %s59
    %s77 = sphi 0, %s77
    %s79 = sphi 0, %s77
    %s80 = sphi 0, %s79
    %s94 = sphi 0, %s80
    %s98 = sphi 0, %s98
    %s100 = sphi 0, %s98
    %s101 = sphi 0, %s100
    %s115 = sphi 0, %s101
    %s119 = sphi 0, %s119
    %s121 = sphi 0, %s119
    %s122 = sphi 0, %s121
    %s136 = sphi 0, %s122
    %s142 = sphi 0, %s144
    %s145 = sphi 0, %s142
    %s146 = sphi 0, %s145
    %s162 = sphi 0, %s146
    %s168 = sphi 0, %s170
    %s171 = sphi 0, %s168
    %s172 = sphi 0, %s171
    %s188 = sphi 0, %s172
    %s194 = sphi 0, %s196
    %s197 = sphi 0, %s194
    %s198 = sphi 0, %s197
    %s214 = sphi 0, %s198
    %s220 = sphi 0, %s222
    %s223 = sphi 0, %s220
    %s224 = sphi 0, %s223
    %s240 = sphi 0, %s224
    %s246 = sphi 0, %s248
    %s249 = sphi 0, %s246
    %s250 = sphi 0, %s249
    %s266 = sphi 0, %s250
    %s272 = sphi 0, %s274
    %s275 = sphi 0, %s272
    %s276 = sphi 0, %s275
    %s292 = sphi 0, %s276
    %s298 = sphi 0, %s300
    %s301 = sphi 0, %s298
    %s302 = sphi 0, %s301
    %s318 = sphi 0, %s302
    %s324 = sphi 0, %s326
    %s327 = sphi 0, %s324
    %s328 = sphi 0, %s327
    %s344 = sphi 0, %s328
    %s350 = sphi 0, %s352
    %s353 = sphi 0, %s350
    %s354 = sphi 0, %s353
    %s370 = sphi 0, %s354
    %s376 = sphi 0, %s378
    %s379 = sphi 0, %s376
    %s380 = sphi 0, %s379
    %s396 = sphi 0, %s380
    %s402 = sphi 0, %s404
    %s405 = sphi 0, %s402
    %s406 = sphi 0, %s405
    %s422 = sphi 0, %s406
    %s428 = sphi 0, %s430
    %s431 = sphi 0, %s428
    %s432 = sphi 0, %s431
    %s448 = sphi 0, %s432
    %s452 = sphi 0, %s452
    %s454 = sphi 0, %s452
    %s455 = sphi 0, %s454
    %s469 = sphi 0, %s455
    %s473 = sphi 0, %s473
    %s475 = sphi 0, %s473
    %s476 = sphi 0, %s475
    %s490 = sphi 0, %s476
    %s494 = sphi 0, %s494
    %s496 = sphi 0, %s494
    %s497 = sphi 0, %s496
    %s511 = sphi 0, %s497
    %s515 = sphi 0, %s515
    %s517 = sphi 0, %s515
    %s518 = sphi 0, %s517
    %s532 = sphi 0, %s518
    %s536 = sphi 0, %s536
    %s538 = sphi 0, %s536
    %s539 = sphi 0, %s538
    %s553 = sphi 0, %s539
  $region4: #{vit_forward.1} parent=0 // loop_header_branch
    %30 = sbr.rel (%p28) target = $region8
  $region5: #{vit_forward.1} parent=0 // loop_body
    %s32 = ssub.s32 %s27, 1
    %s33 = ssub.s32 %s27, 2
    %s34 = sadd.s32 %s27, 1
    %s36 = sadd.s32 %s35, 1
    %p39 = scmp.eq.s32.totalorder %s27, 1
    %p40 = scmp.ne.s32.totalorder %s35, %s37
    %p41 = scmp.eq.s32.totalorder %s27, 0
    %p42 = por %p40, %p41
    %p43 = scmp.ne.s32.totalorder %s35, %s37
    %p44 = scmp.eq.s32.totalorder %s32, 1
    %p45 = por %p43, %p44
    %p46 = scmp.ne.s32.totalorder %s37, %s38
    %p47 = scmp.eq.s32.totalorder %s32, 0
    %p48 = por %p46, %p47
    %p49 = scmp.ne.s32.totalorder %s37, %s38
    %p50 = scmp.eq.s32.totalorder %s33, 1
    %p51 = por %p49, %p50
    %p53 = scmp.ne.s32.totalorder %s38, %s52
    %p54 = scmp.eq.s32.totalorder %s33, 0
    %p55 = por %p53, %p54
    %s57 = sadd.s32 %s56, 1
    %p60 = scmp.eq.s32.totalorder %s27, 1
    %p61 = scmp.ne.s32.totalorder %s56, %s58
    %p62 = scmp.eq.s32.totalorder %s27, 0
    %p63 = por %p61, %p62
    %p64 = scmp.ne.s32.totalorder %s56, %s58
    %p65 = scmp.eq.s32.totalorder %s32, 1
    %p66 = por %p64, %p65
    %p67 = scmp.ne.s32.totalorder %s58, %s59
    %p68 = scmp.eq.s32.totalorder %s32, 0
    %p69 = por %p67, %p68
    %p70 = scmp.ne.s32.totalorder %s58, %s59
    %p71 = scmp.eq.s32.totalorder %s33, 1
    %p72 = por %p70, %p71
    %p74 = scmp.ne.s32.totalorder %s59, %s73
    %p75 = scmp.eq.s32.totalorder %s33, 0
    %p76 = por %p74, %p75
    %s78 = sadd.s32 %s77, 1
    %p81 = scmp.eq.s32.totalorder %s27, 1
    %p82 = scmp.ne.s32.totalorder %s77, %s79
    %p83 = scmp.eq.s32.totalorder %s27, 0
    %p84 = por %p82, %p83
    %p85 = scmp.ne.s32.totalorder %s77, %s79
    %p86 = scmp.eq.s32.totalorder %s32, 1
    %p87 = por %p85, %p86
    %p88 = scmp.ne.s32.totalorder %s79, %s80
    %p89 = scmp.eq.s32.totalorder %s32, 0
    %p90 = por %p88, %p89
    %p91 = scmp.ne.s32.totalorder %s79, %s80
    %p92 = scmp.eq.s32.totalorder %s33, 1
    %p93 = por %p91, %p92
    %p95 = scmp.ne.s32.totalorder %s80, %s94
    %p96 = scmp.eq.s32.totalorder %s33, 0
    %p97 = por %p95, %p96
    %s99 = sadd.s32 %s98, 1
    %p102 = scmp.eq.s32.totalorder %s27, 1
    %p103 = scmp.ne.s32.totalorder %s98, %s100
    %p104 = scmp.eq.s32.totalorder %s27, 0
    %p105 = por %p103, %p104
    %p106 = scmp.ne.s32.totalorder %s98, %s100
    %p107 = scmp.eq.s32.totalorder %s32, 1
    %p108 = por %p106, %p107
    %p109 = scmp.ne.s32.totalorder %s100, %s101
    %p110 = scmp.eq.s32.totalorder %s32, 0
    %p111 = por %p109, %p110
    %p112 = scmp.ne.s32.totalorder %s100, %s101
    %p113 = scmp.eq.s32.totalorder %s33, 1
    %p114 = por %p112, %p113
    %p116 = scmp.ne.s32.totalorder %s101, %s115
    %p117 = scmp.eq.s32.totalorder %s33, 0
    %p118 = por %p116, %p117
    %s120 = sadd.s32 %s119, 1
    %p123 = scmp.eq.s32.totalorder %s27, 1
    %p124 = scmp.ne.s32.totalorder %s119, %s121
    %p125 = scmp.eq.s32.totalorder %s27, 0
    %p126 = por %p124, %p125
    %p127 = scmp.ne.s32.totalorder %s119, %s121
    %p128 = scmp.eq.s32.totalorder %s32, 1
    %p129 = por %p127, %p128
    %p130 = scmp.ne.s32.totalorder %s121, %s122
    %p131 = scmp.eq.s32.totalorder %s32, 0
    %p132 = por %p130, %p131
    %p133 = scmp.ne.s32.totalorder %s121, %s122
    %p134 = scmp.eq.s32.totalorder %s33, 1
    %p135 = por %p133, %p134
    %p137 = scmp.ne.s32.totalorder %s122, %s136
    %p138 = scmp.eq.s32.totalorder %s33, 0
    %p139 = por %p137, %p138
    %s140 = ssub.s32 %s27, %s34
    %p141 = scmp.eq.s32.totalorder %s140, 0
    %s143 = sadd.s32 %s142, 1
    %s144 = scalar_select %p141, %s142, %s143
    %p147 = pneg %p141
    %p148 = scmp.eq.s32.totalorder %s27, 1
    %p149 = por %p147, %p148
    %p150 = scmp.ne.s32.totalorder %s142, %s145
    %p151 = scmp.eq.s32.totalorder %s27, 0
    %p152 = por %p150, %p151
    %p153 = scmp.ne.s32.totalorder %s142, %s145
    %p154 = scmp.eq.s32.totalorder %s32, 1
    %p155 = por %p153, %p154
    %p156 = scmp.ne.s32.totalorder %s145, %s146
    %p157 = scmp.eq.s32.totalorder %s32, 0
    %p158 = por %p156, %p157
    %p159 = scmp.ne.s32.totalorder %s145, %s146
    %p160 = scmp.eq.s32.totalorder %s33, 1
    %p161 = por %p159, %p160
    %p163 = scmp.ne.s32.totalorder %s146, %s162
    %p164 = scmp.eq.s32.totalorder %s33, 0
    %p165 = por %p163, %p164
    %s166 = ssub.s32 %s27, %s34
    %p167 = scmp.eq.s32.totalorder %s166, 0
    %s169 = sadd.s32 %s168, 1
    %s170 = scalar_select %p167, %s168, %s169
    %p173 = pneg %p167
    %p174 = scmp.eq.s32.totalorder %s27, 1
    %p175 = por %p173, %p174
    %p176 = scmp.ne.s32.totalorder %s168, %s171
    %p177 = scmp.eq.s32.totalorder %s27, 0
    %p178 = por %p176, %p177
    %p179 = scmp.ne.s32.totalorder %s168, %s171
    %p180 = scmp.eq.s32.totalorder %s32, 1
    %p181 = por %p179, %p180
    %p182 = scmp.ne.s32.totalorder %s171, %s172
    %p183 = scmp.eq.s32.totalorder %s32, 0
    %p184 = por %p182, %p183
    %p185 = scmp.ne.s32.totalorder %s171, %s172
    %p186 = scmp.eq.s32.totalorder %s33, 1
    %p187 = por %p185, %p186
    %p189 = scmp.ne.s32.totalorder %s172, %s188
    %p190 = scmp.eq.s32.totalorder %s33, 0
    %p191 = por %p189, %p190
    %s192 = ssub.s32 %s27, %s34
    %p193 = scmp.eq.s32.totalorder %s192, 0
    %s195 = sadd.s32 %s194, 1
    %s196 = scalar_select %p193, %s194, %s195
    %p199 = pneg %p193
    %p200 = scmp.eq.s32.totalorder %s27, 1
    %p201 = por %p199, %p200
    %p202 = scmp.ne.s32.totalorder %s194, %s197
    %p203 = scmp.eq.s32.totalorder %s27, 0
    %p204 = por %p202, %p203
    %p205 = scmp.ne.s32.totalorder %s194, %s197
    %p206 = scmp.eq.s32.totalorder %s32, 1
    %p207 = por %p205, %p206
    %p208 = scmp.ne.s32.totalorder %s197, %s198
    %p209 = scmp.eq.s32.totalorder %s32, 0
    %p210 = por %p208, %p209
    %p211 = scmp.ne.s32.totalorder %s197, %s198
    %p212 = scmp.eq.s32.totalorder %s33, 1
    %p213 = por %p211, %p212
    %p215 = scmp.ne.s32.totalorder %s198, %s214
    %p216 = scmp.eq.s32.totalorder %s33, 0
    %p217 = por %p215, %p216
    %s218 = ssub.s32 %s27, %s34
    %p219 = scmp.eq.s32.totalorder %s218, 0
    %s221 = sadd.s32 %s220, 1
    %s222 = scalar_select %p219, %s220, %s221
    %p225 = pneg %p219
    %p226 = scmp.eq.s32.totalorder %s27, 1
    %p227 = por %p225, %p226
    %p228 = scmp.ne.s32.totalorder %s220, %s223
    %p229 = scmp.eq.s32.totalorder %s27, 0
    %p230 = por %p228, %p229
    %p231 = scmp.ne.s32.totalorder %s220, %s223
    %p232 = scmp.eq.s32.totalorder %s32, 1
    %p233 = por %p231, %p232
    %p234 = scmp.ne.s32.totalorder %s223, %s224
    %p235 = scmp.eq.s32.totalorder %s32, 0
    %p236 = por %p234, %p235
    %p237 = scmp.ne.s32.totalorder %s223, %s224
    %p238 = scmp.eq.s32.totalorder %s33, 1
    %p239 = por %p237, %p238
    %p241 = scmp.ne.s32.totalorder %s224, %s240
    %p242 = scmp.eq.s32.totalorder %s33, 0
    %p243 = por %p241, %p242
    %s244 = ssub.s32 %s27, %s34
    %p245 = scmp.eq.s32.totalorder %s244, 0
    %s247 = sadd.s32 %s246, 1
    %s248 = scalar_select %p245, %s246, %s247
    %p251 = pneg %p245
    %p252 = scmp.eq.s32.totalorder %s27, 1
    %p253 = por %p251, %p252
    %p254 = scmp.ne.s32.totalorder %s246, %s249
    %p255 = scmp.eq.s32.totalorder %s27, 0
    %p256 = por %p254, %p255
    %p257 = scmp.ne.s32.totalorder %s246, %s249
    %p258 = scmp.eq.s32.totalorder %s32, 1
    %p259 = por %p257, %p258
    %p260 = scmp.ne.s32.totalorder %s249, %s250
    %p261 = scmp.eq.s32.totalorder %s32, 0
    %p262 = por %p260, %p261
    %p263 = scmp.ne.s32.totalorder %s249, %s250
    %p264 = scmp.eq.s32.totalorder %s33, 1
    %p265 = por %p263, %p264
    %p267 = scmp.ne.s32.totalorder %s250, %s266
    %p268 = scmp.eq.s32.totalorder %s33, 0
    %p269 = por %p267, %p268
    %s270 = ssub.s32 %s27, %s34
    %p271 = scmp.eq.s32.totalorder %s270, 0
    %s273 = sadd.s32 %s272, 1
    %s274 = scalar_select %p271, %s272, %s273
    %p277 = pneg %p271
    %p278 = scmp.eq.s32.totalorder %s27, 1
    %p279 = por %p277, %p278
    %p280 = scmp.ne.s32.totalorder %s272, %s275
    %p281 = scmp.eq.s32.totalorder %s27, 0
    %p282 = por %p280, %p281
    %p283 = scmp.ne.s32.totalorder %s272, %s275
    %p284 = scmp.eq.s32.totalorder %s32, 1
    %p285 = por %p283, %p284
    %p286 = scmp.ne.s32.totalorder %s275, %s276
    %p287 = scmp.eq.s32.totalorder %s32, 0
    %p288 = por %p286, %p287
    %p289 = scmp.ne.s32.totalorder %s275, %s276
    %p290 = scmp.eq.s32.totalorder %s33, 1
    %p291 = por %p289, %p290
    %p293 = scmp.ne.s32.totalorder %s276, %s292
    %p294 = scmp.eq.s32.totalorder %s33, 0
    %p295 = por %p293, %p294
    %s296 = ssub.s32 %s27, %s34
    %p297 = scmp.eq.s32.totalorder %s296, 0
    %s299 = sadd.s32 %s298, 1
    %s300 = scalar_select %p297, %s298, %s299
    %p303 = pneg %p297
    %p304 = scmp.eq.s32.totalorder %s27, 1
    %p305 = por %p303, %p304
    %p306 = scmp.ne.s32.totalorder %s298, %s301
    %p307 = scmp.eq.s32.totalorder %s27, 0
    %p308 = por %p306, %p307
    %p309 = scmp.ne.s32.totalorder %s298, %s301
    %p310 = scmp.eq.s32.totalorder %s32, 1
    %p311 = por %p309, %p310
    %p312 = scmp.ne.s32.totalorder %s301, %s302
    %p313 = scmp.eq.s32.totalorder %s32, 0
    %p314 = por %p312, %p313
    %p315 = scmp.ne.s32.totalorder %s301, %s302
    %p316 = scmp.eq.s32.totalorder %s33, 1
    %p317 = por %p315, %p316
    %p319 = scmp.ne.s32.totalorder %s302, %s318
    %p320 = scmp.eq.s32.totalorder %s33, 0
    %p321 = por %p319, %p320
    %s322 = ssub.s32 %s27, %s34
    %p323 = scmp.eq.s32.totalorder %s322, 0
    %s325 = sadd.s32 %s324, 1
    %s326 = scalar_select %p323, %s324, %s325
    %p329 = pneg %p323
    %p330 = scmp.eq.s32.totalorder %s27, 1
    %p331 = por %p329, %p330
    %p332 = scmp.ne.s32.totalorder %s324, %s327
    %p333 = scmp.eq.s32.totalorder %s27, 0
    %p334 = por %p332, %p333
    %p335 = scmp.ne.s32.totalorder %s324, %s327
    %p336 = scmp.eq.s32.totalorder %s32, 1
    %p337 = por %p335, %p336
    %p338 = scmp.ne.s32.totalorder %s327, %s328
    %p339 = scmp.eq.s32.totalorder %s32, 0
    %p340 = por %p338, %p339
    %p341 = scmp.ne.s32.totalorder %s327, %s328
    %p342 = scmp.eq.s32.totalorder %s33, 1
    %p343 = por %p341, %p342
    %p345 = scmp.ne.s32.totalorder %s328, %s344
    %p346 = scmp.eq.s32.totalorder %s33, 0
    %p347 = por %p345, %p346
    %s348 = ssub.s32 %s27, %s34
    %p349 = scmp.eq.s32.totalorder %s348, 0
    %s351 = sadd.s32 %s350, 1
    %s352 = scalar_select %p349, %s350, %s351
    %p355 = pneg %p349
    %p356 = scmp.eq.s32.totalorder %s27, 1
    %p357 = por %p355, %p356
    %p358 = scmp.ne.s32.totalorder %s350, %s353
    %p359 = scmp.eq.s32.totalorder %s27, 0
    %p360 = por %p358, %p359
    %p361 = scmp.ne.s32.totalorder %s350, %s353
    %p362 = scmp.eq.s32.totalorder %s32, 1
    %p363 = por %p361, %p362
    %p364 = scmp.ne.s32.totalorder %s353, %s354
    %p365 = scmp.eq.s32.totalorder %s32, 0
    %p366 = por %p364, %p365
    %p367 = scmp.ne.s32.totalorder %s353, %s354
    %p368 = scmp.eq.s32.totalorder %s33, 1
    %p369 = por %p367, %p368
    %p371 = scmp.ne.s32.totalorder %s354, %s370
    %p372 = scmp.eq.s32.totalorder %s33, 0
    %p373 = por %p371, %p372
    %s374 = ssub.s32 %s27, %s34
    %p375 = scmp.eq.s32.totalorder %s374, 0
    %s377 = sadd.s32 %s376, 1
    %s378 = scalar_select %p375, %s376, %s377
    %p381 = pneg %p375
    %p382 = scmp.eq.s32.totalorder %s27, 1
    %p383 = por %p381, %p382
    %p384 = scmp.ne.s32.totalorder %s376, %s379
    %p385 = scmp.eq.s32.totalorder %s27, 0
    %p386 = por %p384, %p385
    %p387 = scmp.ne.s32.totalorder %s376, %s379
    %p388 = scmp.eq.s32.totalorder %s32, 1
    %p389 = por %p387, %p388
    %p390 = scmp.ne.s32.totalorder %s379, %s380
    %p391 = scmp.eq.s32.totalorder %s32, 0
    %p392 = por %p390, %p391
    %p393 = scmp.ne.s32.totalorder %s379, %s380
    %p394 = scmp.eq.s32.totalorder %s33, 1
    %p395 = por %p393, %p394
    %p397 = scmp.ne.s32.totalorder %s380, %s396
    %p398 = scmp.eq.s32.totalorder %s33, 0
    %p399 = por %p397, %p398
    %s400 = ssub.s32 %s27, %s34
    %p401 = scmp.eq.s32.totalorder %s400, 0
    %s403 = sadd.s32 %s402, 1
    %s404 = scalar_select %p401, %s402, %s403
    %p407 = pneg %p401
    %p408 = scmp.eq.s32.totalorder %s27, 1
    %p409 = por %p407, %p408
    %p410 = scmp.ne.s32.totalorder %s402, %s405
    %p411 = scmp.eq.s32.totalorder %s27, 0
    %p412 = por %p410, %p411
    %p413 = scmp.ne.s32.totalorder %s402, %s405
    %p414 = scmp.eq.s32.totalorder %s32, 1
    %p415 = por %p413, %p414
    %p416 = scmp.ne.s32.totalorder %s405, %s406
    %p417 = scmp.eq.s32.totalorder %s32, 0
    %p418 = por %p416, %p417
    %p419 = scmp.ne.s32.totalorder %s405, %s406
    %p420 = scmp.eq.s32.totalorder %s33, 1
    %p421 = por %p419, %p420
    %p423 = scmp.ne.s32.totalorder %s406, %s422
    %p424 = scmp.eq.s32.totalorder %s33, 0
    %p425 = por %p423, %p424
    %s426 = ssub.s32 %s27, %s34
    %p427 = scmp.eq.s32.totalorder %s426, 0
    %s429 = sadd.s32 %s428, 1
    %s430 = scalar_select %p427, %s428, %s429
    %p433 = pneg %p427
    %p434 = scmp.eq.s32.totalorder %s27, 1
    %p435 = por %p433, %p434
    %p436 = scmp.ne.s32.totalorder %s428, %s431
    %p437 = scmp.eq.s32.totalorder %s27, 0
    %p438 = por %p436, %p437
    %p439 = scmp.ne.s32.totalorder %s428, %s431
    %p440 = scmp.eq.s32.totalorder %s32, 1
    %p441 = por %p439, %p440
    %p442 = scmp.ne.s32.totalorder %s431, %s432
    %p443 = scmp.eq.s32.totalorder %s32, 0
    %p444 = por %p442, %p443
    %p445 = scmp.ne.s32.totalorder %s431, %s432
    %p446 = scmp.eq.s32.totalorder %s33, 1
    %p447 = por %p445, %p446
    %p449 = scmp.ne.s32.totalorder %s432, %s448
    %p450 = scmp.eq.s32.totalorder %s33, 0
    %p451 = por %p449, %p450
    %s453 = sadd.s32 %s452, 1
    %p456 = scmp.eq.s32.totalorder %s27, 1
    %p457 = scmp.ne.s32.totalorder %s452, %s454
    %p458 = scmp.eq.s32.totalorder %s27, 0
    %p459 = por %p457, %p458
    %p460 = scmp.ne.s32.totalorder %s452, %s454
    %p461 = scmp.eq.s32.totalorder %s32, 1
    %p462 = por %p460, %p461
    %p463 = scmp.ne.s32.totalorder %s454, %s455
    %p464 = scmp.eq.s32.totalorder %s32, 0
    %p465 = por %p463, %p464
    %p466 = scmp.ne.s32.totalorder %s454, %s455
    %p467 = scmp.eq.s32.totalorder %s33, 1
    %p468 = por %p466, %p467
    %p470 = scmp.ne.s32.totalorder %s455, %s469
    %p471 = scmp.eq.s32.totalorder %s33, 0
    %p472 = por %p470, %p471
    %s474 = sadd.s32 %s473, 1
    %p477 = scmp.eq.s32.totalorder %s27, 1
    %p478 = scmp.ne.s32.totalorder %s473, %s475
    %p479 = scmp.eq.s32.totalorder %s27, 0
    %p480 = por %p478, %p479
    %p481 = scmp.ne.s32.totalorder %s473, %s475
    %p482 = scmp.eq.s32.totalorder %s32, 1
    %p483 = por %p481, %p482
    %p484 = scmp.ne.s32.totalorder %s475, %s476
    %p485 = scmp.eq.s32.totalorder %s32, 0
    %p486 = por %p484, %p485
    %p487 = scmp.ne.s32.totalorder %s475, %s476
    %p488 = scmp.eq.s32.totalorder %s33, 1
    %p489 = por %p487, %p488
    %p491 = scmp.ne.s32.totalorder %s476, %s490
    %p492 = scmp.eq.s32.totalorder %s33, 0
    %p493 = por %p491, %p492
    %s495 = sadd.s32 %s494, 1
    %p498 = scmp.eq.s32.totalorder %s27, 1
    %p499 = scmp.ne.s32.totalorder %s494, %s496
    %p500 = scmp.eq.s32.totalorder %s27, 0
    %p501 = por %p499, %p500
    %p502 = scmp.ne.s32.totalorder %s494, %s496
    %p503 = scmp.eq.s32.totalorder %s32, 1
    %p504 = por %p502, %p503
    %p505 = scmp.ne.s32.totalorder %s496, %s497
    %p506 = scmp.eq.s32.totalorder %s32, 0
    %p507 = por %p505, %p506
    %p508 = scmp.ne.s32.totalorder %s496, %s497
    %p509 = scmp.eq.s32.totalorder %s33, 1
    %p510 = por %p508, %p509
    %p512 = scmp.ne.s32.totalorder %s497, %s511
    %p513 = scmp.eq.s32.totalorder %s33, 0
    %p514 = por %p512, %p513
    %s516 = sadd.s32 %s515, 1
    %p519 = scmp.eq.s32.totalorder %s27, 1
    %p520 = scmp.ne.s32.totalorder %s515, %s517
    %p521 = scmp.eq.s32.totalorder %s27, 0
    %p522 = por %p520, %p521
    %p523 = scmp.ne.s32.totalorder %s515, %s517
    %p524 = scmp.eq.s32.totalorder %s32, 1
    %p525 = por %p523, %p524
    %p526 = scmp.ne.s32.totalorder %s517, %s518
    %p527 = scmp.eq.s32.totalorder %s32, 0
    %p528 = por %p526, %p527
    %p529 = scmp.ne.s32.totalorder %s517, %s518
    %p530 = scmp.eq.s32.totalorder %s33, 1
    %p531 = por %p529, %p530
    %p533 = scmp.ne.s32.totalorder %s518, %s532
    %p534 = scmp.eq.s32.totalorder %s33, 0
    %p535 = por %p533, %p534
    %s537 = sadd.s32 %s536, 1
    %p540 = scmp.eq.s32.totalorder %s27, 1
    %p541 = scmp.ne.s32.totalorder %s536, %s538
    %p542 = scmp.eq.s32.totalorder %s27, 0
    %p543 = por %p541, %p542
    %p544 = scmp.ne.s32.totalorder %s536, %s538
    %p545 = scmp.eq.s32.totalorder %s32, 1
    %p546 = por %p544, %p545
    %p547 = scmp.ne.s32.totalorder %s538, %s539
    %p548 = scmp.eq.s32.totalorder %s32, 0
    %p549 = por %p547, %p548
    %p550 = scmp.ne.s32.totalorder %s538, %s539
    %p551 = scmp.eq.s32.totalorder %s33, 1
    %p552 = por %p550, %p551
    %p554 = scmp.ne.s32.totalorder %s539, %s553
    %p555 = scmp.eq.s32.totalorder %s33, 0
    %p556 = por %p554, %p555
    %p557 = scmp.le.s32.totalorder 1, %s27
    %p558 = scmp.lt.s32.totalorder %s27, 3
    %p559 = pnand %p557, %p558
    %p560 = pneg %p559
    // Predicated region
    $region9: #{vit_forward.1} parent=5 // pred_check
      _
    $region10: #{vit_forward.1} parent=5 // pred_check_branch
      %562 = sbr.rel (%p559) target = $region12
    $region11: #{vit_forward.1} parent=5 // pred_region
      %s563 = ssub.s32 %s27, 1
      // Predicated region
      $region13: #{vit_forward.1} parent=11 // pred_check
        %p564 = pneg %p48
      $region14: #{vit_forward.1} parent=11 // pred_check_branch
        %566 = sbr.rel (%p564) target = $region16
      $region15: #{vit_forward.1} parent=11 // pred_region
        _
      $region16: #{vit_forward.1} parent=11 // pred_fallthru
        _
      // Predicated region
      $region17: #{vit_forward.1} parent=11 // pred_check
        %p567 = pneg %p69
      $region18: #{vit_forward.1} parent=11 // pred_check_branch
        %569 = sbr.rel (%p567) target = $region20
      $region19: #{vit_forward.1} parent=11 // pred_region
        _
      $region20: #{vit_forward.1} parent=11 // pred_fallthru
        _
      // Predicated region
      $region21: #{vit_forward.1} parent=11 // pred_check
        %p570 = pneg %p90
      $region22: #{vit_forward.1} parent=11 // pred_check_branch
        %572 = sbr.rel (%p570) target = $region24
      $region23: #{vit_forward.1} parent=11 // pred_region
        _
      $region24: #{vit_forward.1} parent=11 // pred_fallthru
        _
      // Predicated region
      $region25: #{vit_forward.1} parent=11 // pred_check
        %p573 = pneg %p111
      $region26: #{vit_forward.1} parent=11 // pred_check_branch
        %575 = sbr.rel (%p573) target = $region28
      $region27: #{vit_forward.1} parent=11 // pred_region
        _
      $region28: #{vit_forward.1} parent=11 // pred_fallthru
        _
      // Predicated region
      $region29: #{vit_forward.1} parent=11 // pred_check
        %p576 = pneg %p132
      $region30: #{vit_forward.1} parent=11 // pred_check_branch
        %578 = sbr.rel (%p576) target = $region32
      $region31: #{vit_forward.1} parent=11 // pred_region
        _
      $region32: #{vit_forward.1} parent=11 // pred_fallthru
        _
      // Predicated region
      $region33: #{vit_forward.1} parent=11 // pred_check
        %p579 = pneg %p465
      $region34: #{vit_forward.1} parent=11 // pred_check_branch
        %581 = sbr.rel (%p579) target = $region36
      $region35: #{vit_forward.1} parent=11 // pred_region
        _
      $region36: #{vit_forward.1} parent=11 // pred_fallthru
        _
      // Predicated region
      $region37: #{vit_forward.1} parent=11 // pred_check
        %p582 = pneg %p486
      $region38: #{vit_forward.1} parent=11 // pred_check_branch
        %584 = sbr.rel (%p582) target = $region40
      $region39: #{vit_forward.1} parent=11 // pred_region
        _
      $region40: #{vit_forward.1} parent=11 // pred_fallthru
        _
      // Predicated region
      $region41: #{vit_forward.1} parent=11 // pred_check
        %p585 = pneg %p507
      $region42: #{vit_forward.1} parent=11 // pred_check_branch
        %587 = sbr.rel (%p585) target = $region44
      $region43: #{vit_forward.1} parent=11 // pred_region
        _
      $region44: #{vit_forward.1} parent=11 // pred_fallthru
        _
      // Predicated region
      $region45: #{vit_forward.1} parent=11 // pred_check
        %p588 = pneg %p528
      $region46: #{vit_forward.1} parent=11 // pred_check_branch
        %590 = sbr.rel (%p588) target = $region48
      $region47: #{vit_forward.1} parent=11 // pred_region
        _
      $region48: #{vit_forward.1} parent=11 // pred_fallthru
        _
    $region12: #{vit_forward.1} parent=5 // pred_fallthru
      _
    %p591 = scmp.lt.s32.totalorder %s27, 2
    // Predicated region
    $region49: #{vit_forward.1} parent=5 // pred_check
      %p592 = pneg %p591
    $region50: #{vit_forward.1} parent=5 // pred_check_branch
      %594 = sbr.rel (%p592) target = $region52
    $region51: #{vit_forward.1} parent=5 // pred_region
      // Predicated region
      $region53: #{vit_forward.1} parent=51 // pred_check
        %p595 = pneg %p152
      $region54: #{vit_forward.1} parent=51 // pred_check_branch
        %597 = sbr.rel (%p595) target = $region56
      $region55: #{vit_forward.1} parent=51 // pred_region
        %p598 = scmp.lt.s32.totalorder %s27, 1
        %s599 = scalar_select %p598, %s27, 1
        %s600 = scalar_lea.vmem %s5, %s599
      $region56: #{vit_forward.1} parent=51 // pred_fallthru
        _
      // Predicated region
      $region57: #{vit_forward.1} parent=51 // pred_check
        %p601 = pneg %p178
      $region58: #{vit_forward.1} parent=51 // pred_check_branch
        %603 = sbr.rel (%p601) target = $region60
      $region59: #{vit_forward.1} parent=51 // pred_region
        %p604 = scmp.lt.s32.totalorder %s27, 1
        %s605 = scalar_select %p604, %s27, 1
        %s606 = scalar_lea.vmem %s6, %s605
      $region60: #{vit_forward.1} parent=51 // pred_fallthru
        _
      // Predicated region
      $region61: #{vit_forward.1} parent=51 // pred_check
        %p607 = pneg %p204
      $region62: #{vit_forward.1} parent=51 // pred_check_branch
        %609 = sbr.rel (%p607) target = $region64
      $region63: #{vit_forward.1} parent=51 // pred_region
        %p610 = scmp.lt.s32.totalorder %s27, 1
        %s611 = scalar_select %p610, %s27, 1
        %s612 = smul.addr %s611, 4
        %s613 = smul.addr %s612, 4
        %s614 = scalar_lea.vmem %s7, %s613
      $region64: #{vit_forward.1} parent=51 // pred_fallthru
        _
      // Predicated region
      $region65: #{vit_forward.1} parent=51 // pred_check
        %p615 = pneg %p230
      $region66: #{vit_forward.1} parent=51 // pred_check_branch
        %617 = sbr.rel (%p615) target = $region68
      $region67: #{vit_forward.1} parent=51 // pred_region
        %p618 = scmp.lt.s32.totalorder %s27, 1
        %s619 = scalar_select %p618, %s27, 1
        %s620 = scalar_lea.vmem %s8, %s619
      $region68: #{vit_forward.1} parent=51 // pred_fallthru
        _
      // Predicated region
      $region69: #{vit_forward.1} parent=51 // pred_check
        %p621 = pneg %p256
      $region70: #{vit_forward.1} parent=51 // pred_check_branch
        %623 = sbr.rel (%p621) target = $region72
      $region71: #{vit_forward.1} parent=51 // pred_region
        %p624 = scmp.lt.s32.totalorder %s27, 1
        %s625 = scalar_select %p624, %s27, 1
        %s626 = smul.addr %s625, 4
        %s627 = smul.addr %s626, 4
        %s628 = scalar_lea.vmem %s9, %s627
      $region72: #{vit_forward.1} parent=51 // pred_fallthru
        _
      // Predicated region
      $region73: #{vit_forward.1} parent=51 // pred_check
        %p629 = pneg %p282
      $region74: #{vit_forward.1} parent=51 // pred_check_branch
        %631 = sbr.rel (%p629) target = $region76
      $region75: #{vit_forward.1} parent=51 // pred_region
        %p632 = scmp.lt.s32.totalorder %s27, 1
        %s633 = scalar_select %p632, %s27, 1
        %s634 = scalar_lea.vmem %s10, %s633
      $region76: #{vit_forward.1} parent=51 // pred_fallthru
        _
      // Predicated region
      $region77: #{vit_forward.1} parent=51 // pred_check
        %p635 = pneg %p308
      $region78: #{vit_forward.1} parent=51 // pred_check_branch
        %637 = sbr.rel (%p635) target = $region80
      $region79: #{vit_forward.1} parent=51 // pred_region
        %p638 = scmp.lt.s32.totalorder %s27, 1
        %s639 = scalar_select %p638, %s27, 1
        %s640 = scalar_lea.vmem %s11, %s639
      $region80: #{vit_forward.1} parent=51 // pred_fallthru
        _
      // Predicated region
      $region81: #{vit_forward.1} parent=51 // pred_check
        %p641 = pneg %p334
      $region82: #{vit_forward.1} parent=51 // pred_check_branch
        %643 = sbr.rel (%p641) target = $region84
      $region83: #{vit_forward.1} parent=51 // pred_region
        %p644 = scmp.lt.s32.totalorder %s27, 1
        %s645 = scalar_select %p644, %s27, 1
        %s646 = scalar_lea.vmem %s12, %s645
      $region84: #{vit_forward.1} parent=51 // pred_fallthru
        _
      // Predicated region
      $region85: #{vit_forward.1} parent=51 // pred_check
        %p647 = pneg %p360
      $region86: #{vit_forward.1} parent=51 // pred_check_branch
        %649 = sbr.rel (%p647) target = $region88
      $region87: #{vit_forward.1} parent=51 // pred_region
        %p650 = scmp.lt.s32.totalorder %s27, 1
        %s651 = scalar_select %p650, %s27, 1
        %s652 = smul.addr %s651, 4
        %s653 = smul.addr %s652, 4
        %s654 = scalar_lea.vmem %s13, %s653
      $region88: #{vit_forward.1} parent=51 // pred_fallthru
        _
      // Predicated region
      $region89: #{vit_forward.1} parent=51 // pred_check
        %p655 = pneg %p386
      $region90: #{vit_forward.1} parent=51 // pred_check_branch
        %657 = sbr.rel (%p655) target = $region92
      $region91: #{vit_forward.1} parent=51 // pred_region
        %p658 = scmp.lt.s32.totalorder %s27, 1
        %s659 = scalar_select %p658, %s27, 1
        %s660 = scalar_lea.vmem %s14, %s659
      $region92: #{vit_forward.1} parent=51 // pred_fallthru
        _
      // Predicated region
      $region93: #{vit_forward.1} parent=51 // pred_check
        %p661 = pneg %p412
      $region94: #{vit_forward.1} parent=51 // pred_check_branch
        %663 = sbr.rel (%p661) target = $region96
      $region95: #{vit_forward.1} parent=51 // pred_region
        %p664 = scmp.lt.s32.totalorder %s27, 1
        %s665 = scalar_select %p664, %s27, 1
        %s666 = smul.addr %s665, 8
        %s667 = smul.addr %s666, 4
        %s668 = scalar_lea.vmem %s15, %s667
      $region96: #{vit_forward.1} parent=51 // pred_fallthru
        _
      // Predicated region
      $region97: #{vit_forward.1} parent=51 // pred_check
        %p669 = pneg %p438
      $region98: #{vit_forward.1} parent=51 // pred_check_branch
        %671 = sbr.rel (%p669) target = $region100
      $region99: #{vit_forward.1} parent=51 // pred_region
        %p672 = scmp.lt.s32.totalorder %s27, 1
        %s673 = scalar_select %p672, %s27, 1
        %s674 = scalar_lea.vmem %s16, %s673
      $region100: #{vit_forward.1} parent=51 // pred_fallthru
        _
    $region52: #{vit_forward.1} parent=5 // pred_fallthru
      _
    %p675 = scmp.le.s32.totalorder 1, %s27
    %p676 = scmp.lt.s32.totalorder %s27, 3
    %p677 = pnand %p675, %p676
    %p678 = pneg %p677
    // Predicated region
    $region101: #{vit_forward.1} parent=5 // pred_check
      _
    $region102: #{vit_forward.1} parent=5 // pred_check_branch
      %680 = sbr.rel (%p677) target = $region104
    $region103: #{vit_forward.1} parent=5 // pred_region
      %s681 = ssub.s32 %s27, 1
      %p682 = pneg %p48
      %p683 = pneg %p45
      %p684 = pneg %p69
      %p685 = pneg %p66
      %p686 = pneg %p90
      %p687 = pneg %p87
      %p688 = pneg %p111
      %p689 = pneg %p108
      %p690 = pneg %p132
      %p691 = pneg %p129
      %p692 = scmp.lt.s32.totalorder %s32, 1
      %s693 = scalar_select %p692, %s32, 1
      %s694 = scalar_lea.vmem %s5, %s693
      %p695 = pneg %p158
      %p696 = pneg %p155
      %p697 = scmp.lt.s32.totalorder %s32, 1
      %s698 = scalar_select %p697, %s32, 1
      %s699 = scalar_lea.vmem %s6, %s698
      %p700 = pneg %p184
      %p701 = pneg %p181
      %p702 = scmp.lt.s32.totalorder %s32, 1
      %s703 = scalar_select %p702, %s32, 1
      %s704 = smul.addr %s703, 4
      %s705 = smul.addr %s704, 4
      %s706 = scalar_lea.vmem %s7, %s705
      %p707 = pneg %p210
      %p708 = pneg %p207
      %p709 = scmp.lt.s32.totalorder %s32, 1
      %s710 = scalar_select %p709, %s32, 1
      %s711 = scalar_lea.vmem %s8, %s710
      %p712 = pneg %p236
      %p713 = pneg %p233
      %p714 = scmp.lt.s32.totalorder %s32, 1
      %s715 = scalar_select %p714, %s32, 1
      %s716 = smul.addr %s715, 4
      %s717 = smul.addr %s716, 4
      %s718 = scalar_lea.vmem %s9, %s717
      %p719 = pneg %p262
      %p720 = pneg %p259
      %p721 = scmp.lt.s32.totalorder %s32, 1
      %s722 = scalar_select %p721, %s32, 1
      %s723 = scalar_lea.vmem %s10, %s722
      %p724 = pneg %p288
      %p725 = pneg %p285
      %p726 = scmp.lt.s32.totalorder %s32, 1
      %s727 = scalar_select %p726, %s32, 1
      %s728 = scalar_lea.vmem %s11, %s727
      %p729 = pneg %p314
      %p730 = pneg %p311
      %p731 = scmp.lt.s32.totalorder %s32, 1
      %s732 = scalar_select %p731, %s32, 1
      %s733 = scalar_lea.vmem %s12, %s732
      %p734 = pneg %p340
      %p735 = pneg %p337
      %p736 = scmp.lt.s32.totalorder %s32, 1
      %s737 = scalar_select %p736, %s32, 1
      %s738 = smul.addr %s737, 4
      %s739 = smul.addr %s738, 4
      %s740 = scalar_lea.vmem %s13, %s739
      %p741 = pneg %p366
      %p742 = pneg %p363
      %p743 = scmp.lt.s32.totalorder %s32, 1
      %s744 = scalar_select %p743, %s32, 1
      %s745 = scalar_lea.vmem %s14, %s744
      %p746 = pneg %p392
      %p747 = pneg %p389
      %p748 = scmp.lt.s32.totalorder %s32, 1
      %s749 = scalar_select %p748, %s32, 1
      %s750 = smul.addr %s749, 8
      %s751 = smul.addr %s750, 4
      %s752 = scalar_lea.vmem %s15, %s751
      %p753 = pneg %p418
      %p754 = pneg %p415
      %p755 = scmp.lt.s32.totalorder %s32, 1
      %s756 = scalar_select %p755, %s32, 1
      %s757 = scalar_lea.vmem %s16, %s756
      %p758 = pneg %p444
      %p759 = pneg %p441
      %p760 = pneg %p465
      %p761 = pneg %p462
      %p762 = pneg %p486
      %p763 = pneg %p483
      %p764 = pneg %p507
      %p765 = pneg %p504
      %p766 = pneg %p528
      %p767 = pneg %p525
      %p768 = pneg %p549
      %p769 = pneg %p546
      %p770 = scmp.lt.s32.totalorder %s32, 1
      %s771 = scalar_select %p770, %s32, 1
      %s772 = scalar_lea.vmem %s5, %s771
      %p773 = scmp.lt.s32.totalorder %s32, 1
      %s774 = scalar_select %p773, %s32, 1
      %s775 = scalar_lea.vmem %s6, %s774
      %p776 = scmp.lt.s32.totalorder %s32, 1
      %s777 = scalar_select %p776, %s32, 1
      %s778 = smul.addr %s777, 4
      %s779 = smul.addr %s778, 4
      %s780 = scalar_lea.vmem %s7, %s779
      %p781 = scmp.lt.s32.totalorder %s32, 1
      %s782 = scalar_select %p781, %s32, 1
      %s783 = scalar_lea.vmem %s8, %s782
      %p784 = scmp.lt.s32.totalorder %s32, 1
      %s785 = scalar_select %p784, %s32, 1
      %s786 = smul.addr %s785, 4
      %s787 = smul.addr %s786, 4
      %s788 = scalar_lea.vmem %s9, %s787
      %p789 = scmp.lt.s32.totalorder %s32, 1
      %s790 = scalar_select %p789, %s32, 1
      %s791 = scalar_lea.vmem %s10, %s790
      %p792 = scmp.lt.s32.totalorder %s32, 1
      %s793 = scalar_select %p792, %s32, 1
      %s794 = scalar_lea.vmem %s11, %s793
      %p795 = scmp.lt.s32.totalorder %s32, 1
      %s796 = scalar_select %p795, %s32, 1
      %s797 = scalar_lea.vmem %s12, %s796
      %p798 = scmp.lt.s32.totalorder %s32, 1
      %s799 = scalar_select %p798, %s32, 1
      %s800 = smul.addr %s799, 4
      %s801 = smul.addr %s800, 4
      %s802 = scalar_lea.vmem %s13, %s801
      %p803 = scmp.lt.s32.totalorder %s32, 1
      %s804 = scalar_select %p803, %s32, 1
      %s805 = scalar_lea.vmem %s14, %s804
      %p806 = scmp.lt.s32.totalorder %s32, 1
      %s807 = scalar_select %p806, %s32, 1
      %s808 = smul.addr %s807, 8
      %s809 = smul.addr %s808, 4
      %s810 = scalar_lea.vmem %s15, %s809
      %p811 = scmp.lt.s32.totalorder %s32, 1
      %s812 = scalar_select %p811, %s32, 1
      %s813 = scalar_lea.vmem %s16, %s812
      %p815 = scmp.eq.s32.totalorder %s32, 0
      // Predicated region
      $region105: #{vit_forward.1} parent=103 // pred_check
        %p816 = pneg %p815
      $region106: #{vit_forward.1} parent=103 // pred_check_branch
        %818 = sbr.rel (%p816) target = $region108
      $region107: #{vit_forward.1} parent=103 // pred_region
        %v819 = vld [vmem:[%s0] sm:$0xf]
        %v820 = vld [vmem:[%s0 + $0x4] sm:$0xf]
        %v821 = vld [vmem:[%s0 + $0x8] sm:$0xf]
        %v822 = vld [vmem:[%s0 + $0xc] sm:$0xf]
        %v823 = vld [vmem:[%s1] sm:$0xf]
        %v824 = vld [vmem:[%s1 + $0x4] sm:$0xf]
        %v825 = vld [vmem:[%s1 + $0x8] sm:$0xf]
        %v826 = vld [vmem:[%s1 + $0xc] sm:$0xf]
        %v827 = vld [vmem:[%s1 + $0x10] sm:$0xf]
        %v828 = vld [vmem:[%s1 + $0x14] sm:$0xf]
        %v829 = vld [vmem:[%s2] sm:$0x1]
        %v831 = vperm.slane %v829, 0
        %v837 = vunpack.c.l.b16 %v819
        %v838 = vunpack.c.l.b16 %v820
        %v839 = vunpack.c.l.b16 %v821
        %v840 = vunpack.c.l.b16 %v822
        %v841 = vpack.c.b16 %v838, %v837
        %v842 = vpack.c.b16 %v840, %v839
        %v849 = vunpack.c.l.b16 %v823
        %v850 = vunpack.c.l.b16 %v824
        %v851 = vunpack.c.l.b16 %v825
        %v852 = vunpack.c.l.b16 %v826
        %v853 = vunpack.c.l.b16 %v827
        %v854 = vunpack.c.l.b16 %v828
        %v855 = vpack.c.b16 %v850, %v849
        %v856 = vpack.c.b16 %v852, %v851
        %v857 = vpack.c.b16 %v854, %v853
        %vm861 = vcmask 392192
        %v863 = vsel %vm861, %v841, 0
        %v866 = vsel %vm861, %v842, 0
        %868 = vmatpush.bf16.msra.mxu0 0
        %869 = vmatpush.bf16.msra.mxu0 0
        %870 = vmatpush.bf16.msra.mxu0 0
        %871 = vmatpush.bf16.msra.mxu0 0
        %872 = vmatpush.bf16.msra.mxu0 0
        %873 = vmatpush.bf16.msra.mxu0 %v857
        %874 = vmatpush.bf16.msra.mxu0 %v856
        %875 = vmatpush.bf16.msra.mxu0 %v855
        %876 = vmatmul.bf16.gmra.mxu0 %v863
        %v877 = vpop.f32.mrf.mxu0
        %v878 = vadd.f32 %v831, %v877
        %v879 = vpop.f32.mrf.mxu0
        %v880 = vadd.f32 %v831, %v879
        %881 = vmatmul.bf16.gmra.mxu0 %v866
        %v882 = vpop.f32.mrf.mxu0
        %v883 = vadd.f32 %v831, %v882
        %v884 = vpop.f32.mrf.mxu0
        %v885 = vadd.f32 %v831, %v884
        %886 = vdwg.mxu0
        %v887 = vld [vmem:[%s4] sm:$0xff]
        %v888 = vld [vmem:[%s4 + $0x8] sm:$0xff]
        %v889 = vld [vmem:[%s3] sm:$0x1]
        %v890 = vld [vmem:[%s4 + $0x10] sm:$0x1]
        %v891 = vadd.f32 %v889, %v890
        %vm892 = vcmask 261120
        %893 = vst.msk [vmem:[#allocation2] sm:$0xff] %vm892, 0.0
        %894 = vst.msk [vmem:[#allocation2 + $0x8] sm:$0xff] %vm892, 0.0
        %895 = vst.msk [vmem:[#allocation2 + $0x10] sm:$0xff] %vm892, 0.0
        %896 = vst.msk [vmem:[#allocation2 + $0x18] sm:$0xff] %vm892, 0.0
        %897 = vst.msk [vmem:[#allocation2 + $0x20] sm:$0xff] %vm892, 0.0
        %898 = vst.msk [vmem:[#allocation2 + $0x28] sm:$0xff] %vm892, 0.0
        %v899 = vadd.f32 %v878, %v887
        %v900 = vadd.f32 %v880, %v888
        %901 = vst.msk [vmem:[#allocation2] sm:$0xff] %vm892, %v899
        %902 = vst.msk [vmem:[#allocation2 + $0x8] sm:$0xff] %vm892, %v900
        %vm903 = vcmask 253952
        %904 = vst.msk [vmem:[#allocation2 + $0x10] sm:$0x1] %vm903, %v891
        %v905 = vadd.f32 %v883, %v887
        %v906 = vadd.f32 %v885, %v888
        %907 = vst.msk [vmem:[#allocation2 + $0x18] sm:$0xff] %vm892, %v905
        %908 = vst.msk [vmem:[#allocation2 + $0x20] sm:$0xff] %vm892, %v906
        %909 = vst.msk [vmem:[#allocation2 + $0x28] sm:$0x1] %vm903, %v891
      $region108: #{vit_forward.1} parent=103 // pred_fallthru
        _
      %v910 = vld [vmem:[#allocation2] sm:$0xff]
      %v911 = vld [vmem:[#allocation2 + $0x8] sm:$0xff]
      %v912 = vld [vmem:[#allocation2 + $0x10] sm:$0xff]
      %v913 = vld [vmem:[#allocation2 + $0x18] sm:$0xff]
      %v914 = vld [vmem:[#allocation2 + $0x20] sm:$0xff]
      %v915 = vld [vmem:[#allocation2 + $0x28] sm:$0xff]
      %v916 = vld [vmem:[%s772] sm:$0x1]
      %v917 = vld [vmem:[%s775] sm:$0x1]
      %vm918 = vcmask 261120
      %v919 = vsel %vm918, %v910, 0.0
      %920 = vadd.xlane.f32.xlu0 %v919
      %v921 = vpop.xlane.xlu0 %920
      %v922 = vsel %vm918, %v911, 0.0
      %923 = vadd.xlane.f32.xlu0 %v922
      %v924 = vpop.xlane.xlu0 %923
      %v925 = vsel %vm918, %v912, 0.0
      %926 = vadd.xlane.f32.xlu0 %v925
      %v927 = vpop.xlane.xlu0 %926
      %v928 = vsel %vm918, %v913, 0.0
      %929 = vadd.xlane.f32.xlu0 %v928
      %v930 = vpop.xlane.xlu0 %929
      %v931 = vsel %vm918, %v914, 0.0
      %932 = vadd.xlane.f32.xlu0 %v931
      %v933 = vpop.xlane.xlu0 %932
      %v934 = vsel %vm918, %v915, 0.0
      %935 = vadd.xlane.f32.xlu0 %v934
      %v936 = vpop.xlane.xlu0 %935
      %v937 = vrcp.pop 32.0
      %v938 = vmul.f32 32.0, %v937
      %v939 = vsub.f32 1.0, %v938
      %v940 = vmul.f32 %v937, %v939
      %v941 = vadd.f32 %v937, %v940
      %vm942 = vweird.f32 %v937
      %v943 = vsel %vm942, %v937, %v941
      %v944 = vmul.f32 %v921, %v943
      %v945 = vmul.f32 %v924, %v943
      %v946 = vmul.f32 %v927, %v943
      %v947 = vmul.f32 %v930, %v943
      %v948 = vmul.f32 %v933, %v943
      %v949 = vmul.f32 %v936, %v943
      %v950 = vsub.f32 %v910, %v944
      %v951 = vsub.f32 %v911, %v945
      %v952 = vsub.f32 %v912, %v946
      %v953 = vsub.f32 %v913, %v947
      %v954 = vsub.f32 %v914, %v948
      %v955 = vsub.f32 %v915, %v949
      %v956 = vmul.f32 %v950, %v950
      %v957 = vmul.f32 %v951, %v951
      %v958 = vmul.f32 %v952, %v952
      %v959 = vmul.f32 %v953, %v953
      %v960 = vmul.f32 %v954, %v954
      %v961 = vmul.f32 %v955, %v955
      %v962 = vsel %vm918, %v956, 0.0
      %963 = vadd.xlane.f32.xlu0 %v962
      %v964 = vpop.xlane.xlu0 %963
      %v965 = vsel %vm918, %v957, 0.0
      %966 = vadd.xlane.f32.xlu0 %v965
      %v967 = vpop.xlane.xlu0 %966
      %v968 = vsel %vm918, %v958, 0.0
      %969 = vadd.xlane.f32.xlu0 %v968
      %v970 = vpop.xlane.xlu0 %969
      %v971 = vsel %vm918, %v959, 0.0
      %972 = vadd.xlane.f32.xlu0 %v971
      %v973 = vpop.xlane.xlu0 %972
      %v974 = vsel %vm918, %v960, 0.0
      %975 = vadd.xlane.f32.xlu0 %v974
      %v976 = vpop.xlane.xlu0 %975
      %v977 = vsel %vm918, %v961, 0.0
      %978 = vadd.xlane.f32.xlu0 %v977
      %v979 = vpop.xlane.xlu0 %978
      %v980 = vmul.f32 %v964, %v943
      %v981 = vmul.f32 %v967, %v943
      %v982 = vmul.f32 %v970, %v943
      %v983 = vmul.f32 %v973, %v943
      %v984 = vmul.f32 %v976, %v943
      %v985 = vmul.f32 %v979, %v943
      %v986 = vadd.f32 %v980, 1e-05
      %v987 = vadd.f32 %v981, 1e-05
      %v988 = vadd.f32 %v982, 1e-05
      %v989 = vadd.f32 %v983, 1e-05
      %v990 = vadd.f32 %v984, 1e-05
      %v991 = vadd.f32 %v985, 1e-05
      %v992 = vrsqrt.pop %v986
      %v993 = vmul.f32 %v992, %v986
      %v994 = vmul.f32 %v993, %v992
      %v995 = vmul.f32 0.5, %v994
      %v996 = vsub.f32 1.5, %v995
      %v997 = vmul.f32 %v992, %v996
      %vm998 = vweird.f32 %v986
      %vm999 = vweird.f32 %v992
      %vm1000 = vmor %vm998, %vm999
      %v1001 = vsel %vm1000, %v992, %v997
      %v1002 = vrsqrt.pop %v987
      %v1003 = vmul.f32 %v1002, %v987
      %v1004 = vmul.f32 %v1003, %v1002
      %v1005 = vmul.f32 0.5, %v1004
      %v1006 = vsub.f32 1.5, %v1005
      %v1007 = vmul.f32 %v1002, %v1006
      %vm1008 = vweird.f32 %v987
      %vm1009 = vweird.f32 %v1002
      %vm1010 = vmor %vm1008, %vm1009
      %v1011 = vsel %vm1010, %v1002, %v1007
      %v1012 = vrsqrt.pop %v988
      %v1013 = vmul.f32 %v1012, %v988
      %v1014 = vmul.f32 %v1013, %v1012
      %v1015 = vmul.f32 0.5, %v1014
      %v1016 = vsub.f32 1.5, %v1015
      %v1017 = vmul.f32 %v1012, %v1016
      %vm1018 = vweird.f32 %v988
      %vm1019 = vweird.f32 %v1012
      %vm1020 = vmor %vm1018, %vm1019
      %v1021 = vsel %vm1020, %v1012, %v1017
      %v1022 = vrsqrt.pop %v989
      %v1023 = vmul.f32 %v1022, %v989
      %v1024 = vmul.f32 %v1023, %v1022
      %v1025 = vmul.f32 0.5, %v1024
      %v1026 = vsub.f32 1.5, %v1025
      %v1027 = vmul.f32 %v1022, %v1026
      %vm1028 = vweird.f32 %v989
      %vm1029 = vweird.f32 %v1022
      %vm1030 = vmor %vm1028, %vm1029
      %v1031 = vsel %vm1030, %v1022, %v1027
      %v1032 = vrsqrt.pop %v990
      %v1033 = vmul.f32 %v1032, %v990
      %v1034 = vmul.f32 %v1033, %v1032
      %v1035 = vmul.f32 0.5, %v1034
      %v1036 = vsub.f32 1.5, %v1035
      %v1037 = vmul.f32 %v1032, %v1036
      %vm1038 = vweird.f32 %v990
      %vm1039 = vweird.f32 %v1032
      %vm1040 = vmor %vm1038, %vm1039
      %v1041 = vsel %vm1040, %v1032, %v1037
      %v1042 = vrsqrt.pop %v991
      %v1043 = vmul.f32 %v1042, %v991
      %v1044 = vmul.f32 %v1043, %v1042
      %v1045 = vmul.f32 0.5, %v1044
      %v1046 = vsub.f32 1.5, %v1045
      %v1047 = vmul.f32 %v1042, %v1046
      %vm1048 = vweird.f32 %v991
      %vm1049 = vweird.f32 %v1042
      %vm1050 = vmor %vm1048, %vm1049
      %v1051 = vsel %vm1050, %v1042, %v1047
      %v1052 = vmul.f32 %v950, %v1001
      %v1053 = vmul.f32 %v951, %v1011
      %v1054 = vmul.f32 %v952, %v1021
      %v1055 = vmul.f32 %v953, %v1031
      %v1056 = vmul.f32 %v954, %v1041
      %v1057 = vmul.f32 %v955, %v1051
      %v1059 = vperm.slane %v916, 0
      %v1061 = vmul.f32 %v1052, %v1059
      %v1062 = vmul.f32 %v1053, %v1059
      %v1063 = vmul.f32 %v1054, %v1059
      %v1064 = vmul.f32 %v1055, %v1059
      %v1065 = vmul.f32 %v1056, %v1059
      %v1066 = vmul.f32 %v1057, %v1059
      %v1068 = vperm.slane %v917, 0
      %v1070 = vadd.f32 %v1061, %v1068
      %v1071 = vadd.f32 %v1062, %v1068
      %v1072 = vadd.f32 %v1063, %v1068
      %v1073 = vadd.f32 %v1064, %v1068
      %v1074 = vadd.f32 %v1065, %v1068
      %v1075 = vadd.f32 %v1066, %v1068
      %v1076 = vpack.c.bf16 %v1071, %v1070
      %v1077 = vpack.c.bf16 %v1073, %v1072
      %v1078 = vpack.c.bf16 %v1075, %v1074
      %v1079 = vld [vmem:[%s780] sm:$0xf]
      %v1080 = vld [vmem:[%s780 + $0x4] sm:$0xf]
      %v1081 = vld [vmem:[%s780 + $0x8] sm:$0xf]
      %v1082 = vld [vmem:[%s780 + $0xc] sm:$0xf]
      %v1083 = vld [vmem:[%s783] sm:$0x1]
      %v1085 = vperm.slane %v1083, 0
      %v1091 = vunpack.c.l.b16 %v1079
      %v1092 = vunpack.c.l.b16 %v1080
      %v1093 = vunpack.c.l.b16 %v1081
      %v1094 = vunpack.c.l.b16 %v1082
      %v1095 = vpack.c.b16 %v1092, %v1091
      %v1096 = vpack.c.b16 %v1094, %v1093
      %v1100 = vsel %vm918, %v1076, 0
      %v1103 = vsel %vm918, %v1077, 0
      %v1106 = vsel %vm918, %v1078, 0
      %1108 = vmatpush.bf16.msra.mxu0 0
      %1109 = vmatpush.bf16.msra.mxu0 0
      %1110 = vmatpush.bf16.msra.mxu0 0
      %1111 = vmatpush.bf16.msra.mxu0 0
      %1112 = vmatpush.bf16.msra.mxu0 0
      %1113 = vmatpush.bf16.msra.mxu0 0
      %1114 = vmatpush.bf16.msra.mxu0 %v1096
      %1115 = vmatpush.bf16.msra.mxu0 %v1095
      %1116 = vmatmul.bf16.gmra.mxu0 %v1100
      %v1117 = vpop.f32.mrf.mxu0
      %v1118 = vadd.f32 %v1085, %v1117
      %v1119 = vpop.f32.mrf.mxu0
      %v1120 = vadd.f32 %v1085, %v1119
      %1121 = vmatmul.bf16.gmra.mxu0 %v1103
      %v1122 = vpop.f32.mrf.mxu0
      %v1123 = vadd.f32 %v1085, %v1122
      %v1124 = vpop.f32.mrf.mxu0
      %v1125 = vadd.f32 %v1085, %v1124
      %1126 = vmatmul.bf16.gmra.mxu0 %v1106
      %v1127 = vpop.f32.mrf.mxu0
      %v1128 = vadd.f32 %v1085, %v1127
      %v1129 = vpop.f32.mrf.mxu0
      %v1130 = vadd.f32 %v1085, %v1129
      %1131 = vdwg.mxu0
      %v1132 = vlaneseq
      %v1133 = vand.u32 %v1132, 127
      %vm1134 = vcmp.lt.s32.totalorder %v1133, 17
      %v1135 = vsel %vm1134, 0.0, -1e+30
      %v1136 = vld [vmem:[%s788] sm:$0xf]
      %v1137 = vld [vmem:[%s788 + $0x4] sm:$0xf]
      %v1138 = vld [vmem:[%s788 + $0x8] sm:$0xf]
      %v1139 = vld [vmem:[%s788 + $0xc] sm:$0xf]
      %v1140 = vpack.c.bf16 %v1118, %v1118
      %v1141 = vpack.c.bf16 %v1120, %v1120
      %v1142 = vpack.c.bf16 %v1123, %v1123
      %v1143 = vpack.c.bf16 %v1125, %v1125
      %v1144 = vpack.c.bf16 %v1128, %v1128
      %v1145 = vpack.c.bf16 %v1130, %v1130
      %v1149 = vunpack.c.l.b16 %v1140
      %v1150 = vunpack.c.l.b16 %v1141
      %v1151 = vunpack.c.l.b16 %v1142
      %v1152 = vpack.c.b16 %v1150, %v1149
      %v1153 = vpack.c.b16 %v1151, %v1151
      %1154 = vrot.lane.b32.xlu0 %v1152, 96
      %v1155 = vpop.permute.xlu0 %1154
      %1156 = vrot.lane.b32.xlu0 %v1153, 96
      %v1157 = vpop.permute.xlu0 %1156
      %vm1158 = vcmask 64512
      %v1160 = vsel %vm1158, %v1152, 0
      %v1163 = vsel %vm1158, %v1153, 0
      %v1166 = vsel %vm1158, %v1155, 0
      %v1169 = vsel %vm1158, %v1157, 0
      %1171 = vmatpush.bf16.xpose.msra.mxu0 0
      %1172 = vmatpush.bf16.xpose.msra.mxu0 0
      %1173 = vmatpush.bf16.xpose.msra.mxu0 0
      %1174 = vmatpush.bf16.xpose.msra.mxu0 0
      %1175 = vmatpush.bf16.xpose.msra.mxu0 0
      %1176 = vmatpush.bf16.xpose.msra.mxu0 0
      %1177 = vmatpush.bf16.xpose.msra.mxu0 %v1169
      %1178 = vmatpush.bf16.xpose.msra.mxu0 %v1166
      %1179 = vmatmul.bf16.gmra.mxu0 %v1160
      %v1180 = vpop.f32.mrf.mxu0
      %v1181 = vadd.f32 0.0, %v1180
      %v1182 = vpop.f32.mrf.mxu0
      %v1183 = vadd.f32 0.0, %v1182
      %1184 = vmatmul.bf16.gmra.mxu0 %v1163
      %v1185 = vpop.f32.mrf.mxu0
      %v1186 = vadd.f32 0.0, %v1185
      %v1187 = vpop.f32.mrf.mxu0
      %1188 = vdwg.mxu0
      %v1192 = vunpack.c.l.b16 %v1143
      %v1193 = vunpack.c.l.b16 %v1144
      %v1194 = vunpack.c.l.b16 %v1145
      %v1195 = vpack.c.b16 %v1193, %v1192
      %v1196 = vpack.c.b16 %v1194, %v1194
      %1197 = vrot.lane.b32.xlu0 %v1195, 96
      %v1198 = vpop.permute.xlu0 %1197
      %1199 = vrot.lane.b32.xlu0 %v1196, 96
      %v1200 = vpop.permute.xlu0 %1199
      %v1202 = vsel %vm1158, %v1195, 0
      %v1205 = vsel %vm1158, %v1196, 0
      %v1208 = vsel %vm1158, %v1198, 0
      %v1211 = vsel %vm1158, %v1200, 0
      %1213 = vmatpush.bf16.xpose.msra.mxu0 0
      %1214 = vmatpush.bf16.xpose.msra.mxu0 0
      %1215 = vmatpush.bf16.xpose.msra.mxu0 0
      %1216 = vmatpush.bf16.xpose.msra.mxu0 0
      %1217 = vmatpush.bf16.xpose.msra.mxu0 0
      %1218 = vmatpush.bf16.xpose.msra.mxu0 0
      %1219 = vmatpush.bf16.xpose.msra.mxu0 %v1211
      %1220 = vmatpush.bf16.xpose.msra.mxu0 %v1208
      %1221 = vmatmul.bf16.gmra.mxu0 %v1202
      %v1222 = vpop.f32.mrf.mxu0
      %v1223 = vadd.f32 0.0, %v1222
      %v1224 = vpop.f32.mrf.mxu0
      %v1225 = vadd.f32 0.0, %v1224
      %1226 = vmatmul.bf16.gmra.mxu0 %v1205
      %v1227 = vpop.f32.mrf.mxu0
      %v1228 = vadd.f32 0.0, %v1227
      %v1229 = vpop.f32.mrf.mxu0
      %1230 = vdwg.mxu0
      %v1231 = vmul.f32 %v1181, 0.35355338
      %v1232 = vmul.f32 %v1183, 0.35355338
      %v1233 = vmul.f32 %v1186, 0.35355338
      %v1234 = vmul.f32 %v1223, 0.35355338
      %v1235 = vmul.f32 %v1225, 0.35355338
      %v1236 = vmul.f32 %v1228, 0.35355338
      %v1237 = vadd.f32 %v1231, %v1135
      %v1238 = vadd.f32 %v1232, %v1135
      %v1239 = vadd.f32 %v1233, %v1135
      %v1240 = vadd.f32 %v1234, %v1135
      %v1241 = vadd.f32 %v1235, %v1135
      %v1242 = vadd.f32 %v1236, %v1135
      %vm1243 = vcmask 195584
      %v1244 = vsel %vm1243, %v1237, -inf
      %1245 = vmax.xlane.f32.xlu0 %v1244
      %v1246 = vpop.xlane.xlu0 %1245
      %v1247 = vsel %vm1243, %v1238, -inf
      %1248 = vmax.xlane.f32.xlu0 %v1247
      %v1249 = vpop.xlane.xlu0 %1248
      %v1250 = vsel %vm1243, %v1239, -inf
      %1251 = vmax.xlane.f32.xlu0 %v1250
      %v1252 = vpop.xlane.xlu0 %1251
      %v1253 = vsel %vm1243, %v1240, -inf
      %1254 = vmax.xlane.f32.xlu0 %v1253
      %v1255 = vpop.xlane.xlu0 %1254
      %v1256 = vsel %vm1243, %v1241, -inf
      %1257 = vmax.xlane.f32.xlu0 %v1256
      %v1258 = vpop.xlane.xlu0 %1257
      %v1259 = vsel %vm1243, %v1242, -inf
      %1260 = vmax.xlane.f32.xlu0 %v1259
      %v1261 = vpop.xlane.xlu0 %1260
      %v1262 = vsub.f32 %v1237, %v1246
      %v1263 = vsub.f32 %v1238, %v1249
      %v1264 = vsub.f32 %v1239, %v1252
      %v1265 = vsub.f32 %v1240, %v1255
      %v1266 = vsub.f32 %v1241, %v1258
      %v1267 = vsub.f32 %v1242, %v1261
      %v1268 = vmul.f32 %v1262, 1.442695
      %v1269 = vpow.pop %v1268
      %v1270 = vmul.f32 %v1263, 1.442695
      %v1271 = vpow.pop %v1270
      %v1272 = vmul.f32 %v1264, 1.442695
      %v1273 = vpow.pop %v1272
      %v1274 = vmul.f32 %v1265, 1.442695
      %v1275 = vpow.pop %v1274
      %v1276 = vmul.f32 %v1266, 1.442695
      %v1277 = vpow.pop %v1276
      %v1278 = vmul.f32 %v1267, 1.442695
      %v1279 = vpow.pop %v1278
      %v1280 = vsel %vm1243, %v1269, 0.0
      %1281 = vadd.xlane.f32.xlu0 %v1280
      %v1282 = vpop.xlane.xlu0 %1281
      %v1283 = vsel %vm1243, %v1271, 0.0
      %1284 = vadd.xlane.f32.xlu0 %v1283
      %v1285 = vpop.xlane.xlu0 %1284
      %v1286 = vsel %vm1243, %v1273, 0.0
      %1287 = vadd.xlane.f32.xlu0 %v1286
      %v1288 = vpop.xlane.xlu0 %1287
      %v1289 = vsel %vm1243, %v1275, 0.0
      %1290 = vadd.xlane.f32.xlu0 %v1289
      %v1291 = vpop.xlane.xlu0 %1290
      %v1292 = vsel %vm1243, %v1277, 0.0
      %1293 = vadd.xlane.f32.xlu0 %v1292
      %v1294 = vpop.xlane.xlu0 %1293
      %v1295 = vsel %vm1243, %v1279, 0.0
      %1296 = vadd.xlane.f32.xlu0 %v1295
      %v1297 = vpop.xlane.xlu0 %1296
      %v1298 = vrcp.pop %v1282
      %v1299 = vrcp.pop %v1285
      %v1300 = vrcp.pop %v1288
      %v1301 = vrcp.pop %v1291
      %v1302 = vrcp.pop %v1294
      %v1303 = vrcp.pop %v1297
      %v1304 = vmul.f32 %v1269, %v1298
      %v1305 = vmul.f32 %v1271, %v1299
      %v1306 = vmul.f32 %v1273, %v1300
      %v1307 = vmul.f32 %v1275, %v1301
      %v1308 = vmul.f32 %v1277, %v1302
      %v1309 = vmul.f32 %v1279, %v1303
      %v1310 = vpack.c.bf16 %v1304, %v1304
      %v1311 = vpack.c.bf16 %v1305, %v1305
      %v1312 = vpack.c.bf16 %v1306, %v1306
      %v1313 = vpack.c.bf16 %v1307, %v1307
      %v1314 = vpack.c.bf16 %v1308, %v1308
      %v1315 = vpack.c.bf16 %v1309, %v1309
      %v1319 = vunpack.c.l.b16 %v1310
      %v1320 = vunpack.c.l.b16 %v1311
      %v1321 = vunpack.c.l.b16 %v1312
      %v1322 = vpack.c.b16 %v1320, %v1319
      %v1323 = vpack.c.b16 %v1321, %v1321
      %1324 = vrot.lane.b32.xlu0 %v1152, 64
      %v1325 = vpop.permute.xlu0 %1324
      %1326 = vrot.lane.b32.xlu0 %v1153, 64
      %v1327 = vpop.permute.xlu0 %1326
      %v1330 = vsel %vm1243, %v1322, 0
      %v1333 = vsel %vm1243, %v1323, 0
      %vm1335 = vcmask 1043456
      %v1337 = vsel %vm1335, %v1327, 0
      %1339 = vmatpush.bf16.msra.mxu0 0
      %1340 = vmatpush.bf16.msra.mxu0 0
      %1341 = vmatpush.bf16.msra.mxu0 0
      %1342 = vmatpush.bf16.msra.mxu0 0
      %1343 = vmatpush.bf16.msra.mxu0 0
      %1344 = vmatpush.bf16.msra.mxu0 0
      %1345 = vmatpush.bf16.msra.mxu0 %v1337
      %1346 = vmatpush.bf16.msra.mxu0 %v1325
      %1347 = vmatmul.bf16.gmra.mxu0 %v1330
      %v1348 = vpop.f32.mrf.mxu0
      %v1349 = vadd.f32 0.0, %v1348
      %v1350 = vpop.f32.mrf.mxu0
      %v1351 = vadd.f32 0.0, %v1350
      %1352 = vmatmul.bf16.gmra.mxu0 %v1333
      %v1353 = vpop.f32.mrf.mxu0
      %v1354 = vadd.f32 0.0, %v1353
      %v1355 = vpop.f32.mrf.mxu0
      %1356 = vdwg.mxu0
      %v1360 = vunpack.c.l.b16 %v1313
      %v1361 = vunpack.c.l.b16 %v1314
      %v1362 = vunpack.c.l.b16 %v1315
      %v1363 = vpack.c.b16 %v1361, %v1360
      %v1364 = vpack.c.b16 %v1362, %v1362
      %1365 = vrot.lane.b32.xlu0 %v1195, 64
      %v1366 = vpop.permute.xlu0 %1365
      %1367 = vrot.lane.b32.xlu0 %v1196, 64
      %v1368 = vpop.permute.xlu0 %1367
      %v1371 = vsel %vm1243, %v1363, 0
      %v1374 = vsel %vm1243, %v1364, 0
      %v1377 = vsel %vm1335, %v1368, 0
      %1379 = vmatpush.bf16.msra.mxu0 0
      %1380 = vmatpush.bf16.msra.mxu0 0
      %1381 = vmatpush.bf16.msra.mxu0 0
      %1382 = vmatpush.bf16.msra.mxu0 0
      %1383 = vmatpush.bf16.msra.mxu0 0
      %1384 = vmatpush.bf16.msra.mxu0 0
      %1385 = vmatpush.bf16.msra.mxu0 %v1377
      %1386 = vmatpush.bf16.msra.mxu0 %v1366
      %1387 = vmatmul.bf16.gmra.mxu0 %v1371
      %v1388 = vpop.f32.mrf.mxu0
      %v1389 = vadd.f32 0.0, %v1388
      %v1390 = vpop.f32.mrf.mxu0
      %v1391 = vadd.f32 0.0, %v1390
      %1392 = vmatmul.bf16.gmra.mxu0 %v1374
      %v1393 = vpop.f32.mrf.mxu0
      %v1394 = vadd.f32 0.0, %v1393
      %v1395 = vpop.f32.mrf.mxu0
      %1396 = vdwg.mxu0
      %v1397 = vpack.c.bf16 %v1351, %v1349
      %v1398 = vpack.c.bf16 %v1389, %v1354
      %v1399 = vpack.c.bf16 %v1394, %v1391
      %1400 = vrot.lane.b32.xlu0 %v1152, 120
      %v1401 = vpop.permute.xlu0 %1400
      %1402 = vrot.lane.b32.xlu0 %v1153, 120
      %v1403 = vpop.permute.xlu0 %1402
      %1404 = vrot.lane.b32.xlu0 %v1152, 88
      %v1405 = vpop.permute.xlu0 %1404
      %1406 = vrot.lane.b32.xlu0 %v1153, 88
      %v1407 = vpop.permute.xlu0 %1406
      %v1409 = vsel %vm1158, %v1401, 0
      %v1412 = vsel %vm1158, %v1403, 0
      %v1415 = vsel %vm1158, %v1405, 0
      %v1418 = vsel %vm1158, %v1407, 0
      %1420 = vmatpush.bf16.xpose.msra.mxu0 0
      %1421 = vmatpush.bf16.xpose.msra.mxu0 0
      %1422 = vmatpush.bf16.xpose.msra.mxu0 0
      %1423 = vmatpush.bf16.xpose.msra.mxu0 0
      %1424 = vmatpush.bf16.xpose.msra.mxu0 0
      %1425 = vmatpush.bf16.xpose.msra.mxu0 0
      %1426 = vmatpush.bf16.xpose.msra.mxu0 %v1418
      %1427 = vmatpush.bf16.xpose.msra.mxu0 %v1415
      %1428 = vmatmul.bf16.gmra.mxu0 %v1409
      %v1429 = vpop.f32.mrf.mxu0
      %v1430 = vadd.f32 0.0, %v1429
      %v1431 = vpop.f32.mrf.mxu0
      %v1432 = vadd.f32 0.0, %v1431
      %1433 = vmatmul.bf16.gmra.mxu0 %v1412
      %v1434 = vpop.f32.mrf.mxu0
      %v1435 = vadd.f32 0.0, %v1434
      %v1436 = vpop.f32.mrf.mxu0
      %1437 = vdwg.mxu0
      %1438 = vrot.lane.b32.xlu0 %v1195, 120
      %v1439 = vpop.permute.xlu0 %1438
      %1440 = vrot.lane.b32.xlu0 %v1196, 120
      %v1441 = vpop.permute.xlu0 %1440
      %1442 = vrot.lane.b32.xlu0 %v1195, 88
      %v1443 = vpop.permute.xlu0 %1442
      %1444 = vrot.lane.b32.xlu0 %v1196, 88
      %v1445 = vpop.permute.xlu0 %1444
      %v1447 = vsel %vm1158, %v1439, 0
      %v1450 = vsel %vm1158, %v1441, 0
      %v1453 = vsel %vm1158, %v1443, 0
      %v1456 = vsel %vm1158, %v1445, 0
      %1458 = vmatpush.bf16.xpose.msra.mxu0 0
      %1459 = vmatpush.bf16.xpose.msra.mxu0 0
      %1460 = vmatpush.bf16.xpose.msra.mxu0 0
      %1461 = vmatpush.bf16.xpose.msra.mxu0 0
      %1462 = vmatpush.bf16.xpose.msra.mxu0 0
      %1463 = vmatpush.bf16.xpose.msra.mxu0 0
      %1464 = vmatpush.bf16.xpose.msra.mxu0 %v1456
      %1465 = vmatpush.bf16.xpose.msra.mxu0 %v1453
      %1466 = vmatmul.bf16.gmra.mxu0 %v1447
      %v1467 = vpop.f32.mrf.mxu0
      %v1468 = vadd.f32 0.0, %v1467
      %v1469 = vpop.f32.mrf.mxu0
      %v1470 = vadd.f32 0.0, %v1469
      %1471 = vmatmul.bf16.gmra.mxu0 %v1450
      %v1472 = vpop.f32.mrf.mxu0
      %v1473 = vadd.f32 0.0, %v1472
      %v1474 = vpop.f32.mrf.mxu0
      %1475 = vdwg.mxu0
      %v1476 = vmul.f32 %v1430, 0.35355338
      %v1477 = vmul.f32 %v1432, 0.35355338
      %v1478 = vmul.f32 %v1435, 0.35355338
      %v1479 = vmul.f32 %v1468, 0.35355338
      %v1480 = vmul.f32 %v1470, 0.35355338
      %v1481 = vmul.f32 %v1473, 0.35355338
      %v1482 = vadd.f32 %v1476, %v1135
      %v1483 = vadd.f32 %v1477, %v1135
      %v1484 = vadd.f32 %v1478, %v1135
      %v1485 = vadd.f32 %v1479, %v1135
      %v1486 = vadd.f32 %v1480, %v1135
      %v1487 = vadd.f32 %v1481, %v1135
      %v1488 = vsel %vm1243, %v1482, -inf
      %1489 = vmax.xlane.f32.xlu0 %v1488
      %v1490 = vpop.xlane.xlu0 %1489
      %v1491 = vsel %vm1243, %v1483, -inf
      %1492 = vmax.xlane.f32.xlu0 %v1491
      %v1493 = vpop.xlane.xlu0 %1492
      %v1494 = vsel %vm1243, %v1484, -inf
      %1495 = vmax.xlane.f32.xlu0 %v1494
      %v1496 = vpop.xlane.xlu0 %1495
      %v1497 = vsel %vm1243, %v1485, -inf
      %1498 = vmax.xlane.f32.xlu0 %v1497
      %v1499 = vpop.xlane.xlu0 %1498
      %v1500 = vsel %vm1243, %v1486, -inf
      %1501 = vmax.xlane.f32.xlu0 %v1500
      %v1502 = vpop.xlane.xlu0 %1501
      %v1503 = vsel %vm1243, %v1487, -inf
      %1504 = vmax.xlane.f32.xlu0 %v1503
      %v1505 = vpop.xlane.xlu0 %1504
      %v1506 = vsub.f32 %v1482, %v1490
      %v1507 = vsub.f32 %v1483, %v1493
      %v1508 = vsub.f32 %v1484, %v1496
      %v1509 = vsub.f32 %v1485, %v1499
      %v1510 = vsub.f32 %v1486, %v1502
      %v1511 = vsub.f32 %v1487, %v1505
      %v1512 = vmul.f32 %v1506, 1.442695
      %v1513 = vpow.pop %v1512
      %v1514 = vmul.f32 %v1507, 1.442695
      %v1515 = vpow.pop %v1514
      %v1516 = vmul.f32 %v1508, 1.442695
      %v1517 = vpow.pop %v1516
      %v1518 = vmul.f32 %v1509, 1.442695
      %v1519 = vpow.pop %v1518
      %v1520 = vmul.f32 %v1510, 1.442695
      %v1521 = vpow.pop %v1520
      %v1522 = vmul.f32 %v1511, 1.442695
      %v1523 = vpow.pop %v1522
      %v1524 = vsel %vm1243, %v1513, 0.0
      %1525 = vadd.xlane.f32.xlu0 %v1524
      %v1526 = vpop.xlane.xlu0 %1525
      %v1527 = vsel %vm1243, %v1515, 0.0
      %1528 = vadd.xlane.f32.xlu0 %v1527
      %v1529 = vpop.xlane.xlu0 %1528
      %v1530 = vsel %vm1243, %v1517, 0.0
      %1531 = vadd.xlane.f32.xlu0 %v1530
      %v1532 = vpop.xlane.xlu0 %1531
      %v1533 = vsel %vm1243, %v1519, 0.0
      %1534 = vadd.xlane.f32.xlu0 %v1533
      %v1535 = vpop.xlane.xlu0 %1534
      %v1536 = vsel %vm1243, %v1521, 0.0
      %1537 = vadd.xlane.f32.xlu0 %v1536
      %v1538 = vpop.xlane.xlu0 %1537
      %v1539 = vsel %vm1243, %v1523, 0.0
      %1540 = vadd.xlane.f32.xlu0 %v1539
      %v1541 = vpop.xlane.xlu0 %1540
      %v1542 = vrcp.pop %v1526
      %v1543 = vrcp.pop %v1529
      %v1544 = vrcp.pop %v1532
      %v1545 = vrcp.pop %v1535
      %v1546 = vrcp.pop %v1538
      %v1547 = vrcp.pop %v1541
      %v1548 = vmul.f32 %v1513, %v1542
      %v1549 = vmul.f32 %v1515, %v1543
      %v1550 = vmul.f32 %v1517, %v1544
      %v1551 = vmul.f32 %v1519, %v1545
      %v1552 = vmul.f32 %v1521, %v1546
      %v1553 = vmul.f32 %v1523, %v1547
      %v1554 = vpack.c.bf16 %v1548, %v1548
      %v1555 = vpack.c.bf16 %v1549, %v1549
      %v1556 = vpack.c.bf16 %v1550, %v1550
      %v1557 = vpack.c.bf16 %v1551, %v1551
      %v1558 = vpack.c.bf16 %v1552, %v1552
      %v1559 = vpack.c.bf16 %v1553, %v1553
      %v1563 = vunpack.c.l.b16 %v1554
      %v1564 = vunpack.c.l.b16 %v1555
      %v1565 = vunpack.c.l.b16 %v1556
      %v1566 = vpack.c.b16 %v1564, %v1563
      %v1567 = vpack.c.b16 %v1565, %v1565
      %1568 = vrot.lane.b32.xlu0 %v1152, 56
      %v1569 = vpop.permute.xlu0 %1568
      %1570 = vrot.lane.b32.xlu0 %v1153, 56
      %v1571 = vpop.permute.xlu0 %1570
      %v1574 = vsel %vm1243, %v1566, 0
      %v1577 = vsel %vm1243, %v1567, 0
      %v1580 = vsel %vm1335, %v1571, 0
      %1582 = vmatpush.bf16.msra.mxu0 0
      %1583 = vmatpush.bf16.msra.mxu0 0
      %1584 = vmatpush.bf16.msra.mxu0 0
      %1585 = vmatpush.bf16.msra.mxu0 0
      %1586 = vmatpush.bf16.msra.mxu0 0
      %1587 = vmatpush.bf16.msra.mxu0 0
      %1588 = vmatpush.bf16.msra.mxu0 %v1580
      %1589 = vmatpush.bf16.msra.mxu0 %v1569
      %1590 = vmatmul.bf16.gmra.mxu0 %v1574
      %v1591 = vpop.f32.mrf.mxu0
      %v1592 = vadd.f32 0.0, %v1591
      %v1593 = vpop.f32.mrf.mxu0
      %v1594 = vadd.f32 0.0, %v1593
      %1595 = vmatmul.bf16.gmra.mxu0 %v1577
      %v1596 = vpop.f32.mrf.mxu0
      %v1597 = vadd.f32 0.0, %v1596
      %v1598 = vpop.f32.mrf.mxu0
      %1599 = vdwg.mxu0
      %v1603 = vunpack.c.l.b16 %v1557
      %v1604 = vunpack.c.l.b16 %v1558
      %v1605 = vunpack.c.l.b16 %v1559
      %v1606 = vpack.c.b16 %v1604, %v1603
      %v1607 = vpack.c.b16 %v1605, %v1605
      %1608 = vrot.lane.b32.xlu0 %v1195, 56
      %v1609 = vpop.permute.xlu0 %1608
      %1610 = vrot.lane.b32.xlu0 %v1196, 56
      %v1611 = vpop.permute.xlu0 %1610
      %v1614 = vsel %vm1243, %v1606, 0
      %v1617 = vsel %vm1243, %v1607, 0
      %v1620 = vsel %vm1335, %v1611, 0
      %1622 = vmatpush.bf16.msra.mxu0 0
      %1623 = vmatpush.bf16.msra.mxu0 0
      %1624 = vmatpush.bf16.msra.mxu0 0
      %1625 = vmatpush.bf16.msra.mxu0 0
      %1626 = vmatpush.bf16.msra.mxu0 0
      %1627 = vmatpush.bf16.msra.mxu0 0
      %1628 = vmatpush.bf16.msra.mxu0 %v1620
      %1629 = vmatpush.bf16.msra.mxu0 %v1609
      %1630 = vmatmul.bf16.gmra.mxu0 %v1614
      %v1631 = vpop.f32.mrf.mxu0
      %v1632 = vadd.f32 0.0, %v1631
      %v1633 = vpop.f32.mrf.mxu0
      %v1634 = vadd.f32 0.0, %v1633
      %1635 = vmatmul.bf16.gmra.mxu0 %v1617
      %v1636 = vpop.f32.mrf.mxu0
      %v1637 = vadd.f32 0.0, %v1636
      %v1638 = vpop.f32.mrf.mxu0
      %1639 = vdwg.mxu0
      %v1640 = vpack.c.bf16 %v1594, %v1592
      %v1641 = vpack.c.bf16 %v1632, %v1597
      %v1642 = vpack.c.bf16 %v1637, %v1634
      %v1644 = vsel %vm1158, %v1640, 0
      %v1647 = vsel %vm1158, %v1641, 0
      %v1650 = vsel %vm1158, %v1642, 0
      %v1653 = vsel %vm1335, %v1137, 0
      %1655 = vmatpush.bf16.msra.mxu0 0
      %1656 = vmatpush.bf16.msra.mxu0 0
      %1657 = vmatpush.bf16.msra.mxu0 0
      %1658 = vmatpush.bf16.msra.mxu0 0
      %1659 = vmatpush.bf16.msra.mxu0 0
      %1660 = vmatpush.bf16.msra.mxu0 0
      %1661 = vmatpush.bf16.msra.mxu0 0
      %1662 = vmatpush.bf16.msra.mxu0 %v1653
      %1663 = vmatmul.bf16.gmra.mxu0 %v1644
      %v1664 = vpop.f32.mrf.mxu0
      %v1665 = vadd.f32 0.0, %v1664
      %v1666 = vpop.f32.mrf.mxu0
      %v1667 = vadd.f32 0.0, %v1666
      %1668 = vmatmul.bf16.gmra.mxu0 %v1647
      %v1669 = vpop.f32.mrf.mxu0
      %v1670 = vadd.f32 0.0, %v1669
      %v1671 = vpop.f32.mrf.mxu0
      %v1672 = vadd.f32 0.0, %v1671
      %1673 = vmatmul.bf16.gmra.mxu0 %v1650
      %v1674 = vpop.f32.mrf.mxu0
      %v1675 = vadd.f32 0.0, %v1674
      %v1676 = vpop.f32.mrf.mxu0
      %v1677 = vadd.f32 0.0, %v1676
      %1678 = vdwg.mxu0
      %v1680 = vsel %vm1158, %v1397, 0
      %v1683 = vsel %vm1158, %v1398, 0
      %v1686 = vsel %vm1158, %v1399, 0
      %v1689 = vsel %vm1335, %v1136, 0
      %1691 = vmatpush.bf16.msra.mxu0 0
      %1692 = vmatpush.bf16.msra.mxu0 0
      %1693 = vmatpush.bf16.msra.mxu0 0
      %1694 = vmatpush.bf16.msra.mxu0 0
      %1695 = vmatpush.bf16.msra.mxu0 0
      %1696 = vmatpush.bf16.msra.mxu0 0
      %1697 = vmatpush.bf16.msra.mxu0 0
      %1698 = vmatpush.bf16.msra.mxu0 %v1689
      %1699 = vmatmul.bf16.gmra.mxu0 %v1680
      %v1700 = vpop.f32.mrf.mxu0
      %v1701 = vadd.f32 %v1665, %v1700
      %v1702 = vpop.f32.mrf.mxu0
      %v1703 = vadd.f32 %v1667, %v1702
      %1704 = vmatmul.bf16.gmra.mxu0 %v1683
      %v1705 = vpop.f32.mrf.mxu0
      %v1706 = vadd.f32 %v1670, %v1705
      %v1707 = vpop.f32.mrf.mxu0
      %v1708 = vadd.f32 %v1672, %v1707
      %1709 = vmatmul.bf16.gmra.mxu0 %v1686
      %v1710 = vpop.f32.mrf.mxu0
      %v1711 = vadd.f32 %v1675, %v1710
      %v1712 = vpop.f32.mrf.mxu0
      %v1713 = vadd.f32 %v1677, %v1712
      %1714 = vdwg.mxu0
      %1715 = vrot.lane.b32.xlu0 %v1152, 112
      %v1716 = vpop.permute.xlu0 %1715
      %1717 = vrot.lane.b32.xlu0 %v1153, 112
      %v1718 = vpop.permute.xlu0 %1717
      %1719 = vrot.lane.b32.xlu0 %v1152, 80
      %v1720 = vpop.permute.xlu0 %1719
      %1721 = vrot.lane.b32.xlu0 %v1153, 80
      %v1722 = vpop.permute.xlu0 %1721
      %v1724 = vsel %vm1158, %v1716, 0
      %v1727 = vsel %vm1158, %v1718, 0
      %v1730 = vsel %vm1158, %v1720, 0
      %v1733 = vsel %vm1158, %v1722, 0
      %1735 = vmatpush.bf16.xpose.msra.mxu0 0
      %1736 = vmatpush.bf16.xpose.msra.mxu0 0
      %1737 = vmatpush.bf16.xpose.msra.mxu0 0
      %1738 = vmatpush.bf16.xpose.msra.mxu0 0
      %1739 = vmatpush.bf16.xpose.msra.mxu0 0
      %1740 = vmatpush.bf16.xpose.msra.mxu0 0
      %1741 = vmatpush.bf16.xpose.msra.mxu0 %v1733
      %1742 = vmatpush.bf16.xpose.msra.mxu0 %v1730
      %1743 = vmatmul.bf16.gmra.mxu0 %v1724
      %v1744 = vpop.f32.mrf.mxu0
      %v1745 = vadd.f32 0.0, %v1744
      %v1746 = vpop.f32.mrf.mxu0
      %v1747 = vadd.f32 0.0, %v1746
      %1748 = vmatmul.bf16.gmra.mxu0 %v1727
      %v1749 = vpop.f32.mrf.mxu0
      %v1750 = vadd.f32 0.0, %v1749
      %v1751 = vpop.f32.mrf.mxu0
      %1752 = vdwg.mxu0
      %1753 = vrot.lane.b32.xlu0 %v1195, 112
      %v1754 = vpop.permute.xlu0 %1753
      %1755 = vrot.lane.b32.xlu0 %v1196, 112
      %v1756 = vpop.permute.xlu0 %1755
      %1757 = vrot.lane.b32.xlu0 %v1195, 80
      %v1758 = vpop.permute.xlu0 %1757
      %1759 = vrot.lane.b32.xlu0 %v1196, 80
      %v1760 = vpop.permute.xlu0 %1759
      %v1762 = vsel %vm1158, %v1754, 0
      %v1765 = vsel %vm1158, %v1756, 0
      %v1768 = vsel %vm1158, %v1758, 0
      %v1771 = vsel %vm1158, %v1760, 0
      %1773 = vmatpush.bf16.xpose.msra.mxu0 0
      %1774 = vmatpush.bf16.xpose.msra.mxu0 0
      %1775 = vmatpush.bf16.xpose.msra.mxu0 0
      %1776 = vmatpush.bf16.xpose.msra.mxu0 0
      %1777 = vmatpush.bf16.xpose.msra.mxu0 0
      %1778 = vmatpush.bf16.xpose.msra.mxu0 0
      %1779 = vmatpush.bf16.xpose.msra.mxu0 %v1771
      %1780 = vmatpush.bf16.xpose.msra.mxu0 %v1768
      %1781 = vmatmul.bf16.gmra.mxu0 %v1762
      %v1782 = vpop.f32.mrf.mxu0
      %v1783 = vadd.f32 0.0, %v1782
      %v1784 = vpop.f32.mrf.mxu0
      %v1785 = vadd.f32 0.0, %v1784
      %1786 = vmatmul.bf16.gmra.mxu0 %v1765
      %v1787 = vpop.f32.mrf.mxu0
      %v1788 = vadd.f32 0.0, %v1787
      %v1789 = vpop.f32.mrf.mxu0
      %1790 = vdwg.mxu0
      %v1791 = vmul.f32 %v1745, 0.35355338
      %v1792 = vmul.f32 %v1747, 0.35355338
      %v1793 = vmul.f32 %v1750, 0.35355338
      %v1794 = vmul.f32 %v1783, 0.35355338
      %v1795 = vmul.f32 %v1785, 0.35355338
      %v1796 = vmul.f32 %v1788, 0.35355338
      %v1797 = vadd.f32 %v1791, %v1135
      %v1798 = vadd.f32 %v1792, %v1135
      %v1799 = vadd.f32 %v1793, %v1135
      %v1800 = vadd.f32 %v1794, %v1135
      %v1801 = vadd.f32 %v1795, %v1135
      %v1802 = vadd.f32 %v1796, %v1135
      %v1803 = vsel %vm1243, %v1797, -inf
      %1804 = vmax.xlane.f32.xlu0 %v1803
      %v1805 = vpop.xlane.xlu0 %1804
      %v1806 = vsel %vm1243, %v1798, -inf
      %1807 = vmax.xlane.f32.xlu0 %v1806
      %v1808 = vpop.xlane.xlu0 %1807
      %v1809 = vsel %vm1243, %v1799, -inf
      %1810 = vmax.xlane.f32.xlu0 %v1809
      %v1811 = vpop.xlane.xlu0 %1810
      %v1812 = vsel %vm1243, %v1800, -inf
      %1813 = vmax.xlane.f32.xlu0 %v1812
      %v1814 = vpop.xlane.xlu0 %1813
      %v1815 = vsel %vm1243, %v1801, -inf
      %1816 = vmax.xlane.f32.xlu0 %v1815
      %v1817 = vpop.xlane.xlu0 %1816
      %v1818 = vsel %vm1243, %v1802, -inf
      %1819 = vmax.xlane.f32.xlu0 %v1818
      %v1820 = vpop.xlane.xlu0 %1819
      %v1821 = vsub.f32 %v1797, %v1805
      %v1822 = vsub.f32 %v1798, %v1808
      %v1823 = vsub.f32 %v1799, %v1811
      %v1824 = vsub.f32 %v1800, %v1814
      %v1825 = vsub.f32 %v1801, %v1817
      %v1826 = vsub.f32 %v1802, %v1820
      %v1827 = vmul.f32 %v1821, 1.442695
      %v1828 = vpow.pop %v1827
      %v1829 = vmul.f32 %v1822, 1.442695
      %v1830 = vpow.pop %v1829
      %v1831 = vmul.f32 %v1823, 1.442695
      %v1832 = vpow.pop %v1831
      %v1833 = vmul.f32 %v1824, 1.442695
      %v1834 = vpow.pop %v1833
      %v1835 = vmul.f32 %v1825, 1.442695
      %v1836 = vpow.pop %v1835
      %v1837 = vmul.f32 %v1826, 1.442695
      %v1838 = vpow.pop %v1837
      %v1839 = vsel %vm1243, %v1828, 0.0
      %1840 = vadd.xlane.f32.xlu0 %v1839
      %v1841 = vpop.xlane.xlu0 %1840
      %v1842 = vsel %vm1243, %v1830, 0.0
      %1843 = vadd.xlane.f32.xlu0 %v1842
      %v1844 = vpop.xlane.xlu0 %1843
      %v1845 = vsel %vm1243, %v1832, 0.0
      %1846 = vadd.xlane.f32.xlu0 %v1845
      %v1847 = vpop.xlane.xlu0 %1846
      %v1848 = vsel %vm1243, %v1834, 0.0
      %1849 = vadd.xlane.f32.xlu0 %v1848
      %v1850 = vpop.xlane.xlu0 %1849
      %v1851 = vsel %vm1243, %v1836, 0.0
      %1852 = vadd.xlane.f32.xlu0 %v1851
      %v1853 = vpop.xlane.xlu0 %1852
      %v1854 = vsel %vm1243, %v1838, 0.0
      %1855 = vadd.xlane.f32.xlu0 %v1854
      %v1856 = vpop.xlane.xlu0 %1855
      %v1857 = vrcp.pop %v1841
      %v1858 = vrcp.pop %v1844
      %v1859 = vrcp.pop %v1847
      %v1860 = vrcp.pop %v1850
      %v1861 = vrcp.pop %v1853
      %v1862 = vrcp.pop %v1856
      %v1863 = vmul.f32 %v1828, %v1857
      %v1864 = vmul.f32 %v1830, %v1858
      %v1865 = vmul.f32 %v1832, %v1859
      %v1866 = vmul.f32 %v1834, %v1860
      %v1867 = vmul.f32 %v1836, %v1861
      %v1868 = vmul.f32 %v1838, %v1862
      %v1869 = vpack.c.bf16 %v1863, %v1863
      %v1870 = vpack.c.bf16 %v1864, %v1864
      %v1871 = vpack.c.bf16 %v1865, %v1865
      %v1872 = vpack.c.bf16 %v1866, %v1866
      %v1873 = vpack.c.bf16 %v1867, %v1867
      %v1874 = vpack.c.bf16 %v1868, %v1868
      %v1878 = vunpack.c.l.b16 %v1869
      %v1879 = vunpack.c.l.b16 %v1870
      %v1880 = vunpack.c.l.b16 %v1871
      %v1881 = vpack.c.b16 %v1879, %v1878
      %v1882 = vpack.c.b16 %v1880, %v1880
      %1883 = vrot.lane.b32.xlu0 %v1152, 48
      %v1884 = vpop.permute.xlu0 %1883
      %1885 = vrot.lane.b32.xlu0 %v1153, 48
      %v1886 = vpop.permute.xlu0 %1885
      %v1889 = vsel %vm1243, %v1881, 0
      %v1892 = vsel %vm1243, %v1882, 0
      %v1895 = vsel %vm1335, %v1886, 0
      %1897 = vmatpush.bf16.msra.mxu0 0
      %1898 = vmatpush.bf16.msra.mxu0 0
      %1899 = vmatpush.bf16.msra.mxu0 0
      %1900 = vmatpush.bf16.msra.mxu0 0
      %1901 = vmatpush.bf16.msra.mxu0 0
      %1902 = vmatpush.bf16.msra.mxu0 0
      %1903 = vmatpush.bf16.msra.mxu0 %v1895
      %1904 = vmatpush.bf16.msra.mxu0 %v1884
      %1905 = vmatmul.bf16.gmra.mxu0 %v1889
      %v1906 = vpop.f32.mrf.mxu0
      %v1907 = vadd.f32 0.0, %v1906
      %v1908 = vpop.f32.mrf.mxu0
      %v1909 = vadd.f32 0.0, %v1908
      %1910 = vmatmul.bf16.gmra.mxu0 %v1892
      %v1911 = vpop.f32.mrf.mxu0
      %v1912 = vadd.f32 0.0, %v1911
      %v1913 = vpop.f32.mrf.mxu0
      %1914 = vdwg.mxu0
      %v1918 = vunpack.c.l.b16 %v1872
      %v1919 = vunpack.c.l.b16 %v1873
      %v1920 = vunpack.c.l.b16 %v1874
      %v1921 = vpack.c.b16 %v1919, %v1918
      %v1922 = vpack.c.b16 %v1920, %v1920
      %1923 = vrot.lane.b32.xlu0 %v1195, 48
      %v1924 = vpop.permute.xlu0 %1923
      %1925 = vrot.lane.b32.xlu0 %v1196, 48
      %v1926 = vpop.permute.xlu0 %1925
      %v1929 = vsel %vm1243, %v1921, 0
      %v1932 = vsel %vm1243, %v1922, 0
      %v1935 = vsel %vm1335, %v1926, 0
      %1937 = vmatpush.bf16.msra.mxu0 0
      %1938 = vmatpush.bf16.msra.mxu0 0
      %1939 = vmatpush.bf16.msra.mxu0 0
      %1940 = vmatpush.bf16.msra.mxu0 0
      %1941 = vmatpush.bf16.msra.mxu0 0
      %1942 = vmatpush.bf16.msra.mxu0 0
      %1943 = vmatpush.bf16.msra.mxu0 %v1935
      %1944 = vmatpush.bf16.msra.mxu0 %v1924
      %1945 = vmatmul.bf16.gmra.mxu0 %v1929
      %v1946 = vpop.f32.mrf.mxu0
      %v1947 = vadd.f32 0.0, %v1946
      %v1948 = vpop.f32.mrf.mxu0
      %v1949 = vadd.f32 0.0, %v1948
      %1950 = vmatmul.bf16.gmra.mxu0 %v1932
      %v1951 = vpop.f32.mrf.mxu0
      %v1952 = vadd.f32 0.0, %v1951
      %v1953 = vpop.f32.mrf.mxu0
      %1954 = vdwg.mxu0
      %v1955 = vpack.c.bf16 %v1909, %v1907
      %v1956 = vpack.c.bf16 %v1947, %v1912
      %v1957 = vpack.c.bf16 %v1952, %v1949
      %v1959 = vsel %vm1158, %v1955, 0
      %v1962 = vsel %vm1158, %v1956, 0
      %v1965 = vsel %vm1158, %v1957, 0
      %v1968 = vsel %vm1335, %v1138, 0
      %1970 = vmatpush.bf16.msra.mxu0 0
      %1971 = vmatpush.bf16.msra.mxu0 0
      %1972 = vmatpush.bf16.msra.mxu0 0
      %1973 = vmatpush.bf16.msra.mxu0 0
      %1974 = vmatpush.bf16.msra.mxu0 0
      %1975 = vmatpush.bf16.msra.mxu0 0
      %1976 = vmatpush.bf16.msra.mxu0 0
      %1977 = vmatpush.bf16.msra.mxu0 %v1968
      %1978 = vmatmul.bf16.gmra.mxu0 %v1959
      %v1979 = vpop.f32.mrf.mxu0
      %v1980 = vadd.f32 0.0, %v1979
      %v1981 = vpop.f32.mrf.mxu0
      %v1982 = vadd.f32 0.0, %v1981
      %1983 = vmatmul.bf16.gmra.mxu0 %v1962
      %v1984 = vpop.f32.mrf.mxu0
      %v1985 = vadd.f32 0.0, %v1984
      %v1986 = vpop.f32.mrf.mxu0
      %v1987 = vadd.f32 0.0, %v1986
      %1988 = vmatmul.bf16.gmra.mxu0 %v1965
      %v1989 = vpop.f32.mrf.mxu0
      %v1990 = vadd.f32 0.0, %v1989
      %v1991 = vpop.f32.mrf.mxu0
      %v1992 = vadd.f32 0.0, %v1991
      %1993 = vdwg.mxu0
      %v1994 = vadd.f32 %v1701, %v1980
      %v1995 = vadd.f32 %v1703, %v1982
      %v1996 = vadd.f32 %v1706, %v1985
      %v1997 = vadd.f32 %v1708, %v1987
      %v1998 = vadd.f32 %v1711, %v1990
      %v1999 = vadd.f32 %v1713, %v1992
      %2000 = vrot.lane.b32.xlu0 %v1152, 104
      %v2001 = vpop.permute.xlu0 %2000
      %2002 = vrot.lane.b32.xlu0 %v1153, 104
      %v2003 = vpop.permute.xlu0 %2002
      %2004 = vrot.lane.b32.xlu0 %v1152, 72
      %v2005 = vpop.permute.xlu0 %2004
      %2006 = vrot.lane.b32.xlu0 %v1153, 72
      %v2007 = vpop.permute.xlu0 %2006
      %v2009 = vsel %vm1158, %v2001, 0
      %v2012 = vsel %vm1158, %v2003, 0
      %v2015 = vsel %vm1158, %v2005, 0
      %v2018 = vsel %vm1158, %v2007, 0
      %2020 = vmatpush.bf16.xpose.msra.mxu0 0
      %2021 = vmatpush.bf16.xpose.msra.mxu0 0
      %2022 = vmatpush.bf16.xpose.msra.mxu0 0
      %2023 = vmatpush.bf16.xpose.msra.mxu0 0
      %2024 = vmatpush.bf16.xpose.msra.mxu0 0
      %2025 = vmatpush.bf16.xpose.msra.mxu0 0
      %2026 = vmatpush.bf16.xpose.msra.mxu0 %v2018
      %2027 = vmatpush.bf16.xpose.msra.mxu0 %v2015
      %2028 = vmatmul.bf16.gmra.mxu0 %v2009
      %v2029 = vpop.f32.mrf.mxu0
      %v2030 = vadd.f32 0.0, %v2029
      %v2031 = vpop.f32.mrf.mxu0
      %v2032 = vadd.f32 0.0, %v2031
      %2033 = vmatmul.bf16.gmra.mxu0 %v2012
      %v2034 = vpop.f32.mrf.mxu0
      %v2035 = vadd.f32 0.0, %v2034
      %v2036 = vpop.f32.mrf.mxu0
      %2037 = vdwg.mxu0
      %2038 = vrot.lane.b32.xlu0 %v1195, 104
      %v2039 = vpop.permute.xlu0 %2038
      %2040 = vrot.lane.b32.xlu0 %v1196, 104
      %v2041 = vpop.permute.xlu0 %2040
      %2042 = vrot.lane.b32.xlu0 %v1195, 72
      %v2043 = vpop.permute.xlu0 %2042
      %2044 = vrot.lane.b32.xlu0 %v1196, 72
      %v2045 = vpop.permute.xlu0 %2044
      %v2047 = vsel %vm1158, %v2039, 0
      %v2050 = vsel %vm1158, %v2041, 0
      %v2053 = vsel %vm1158, %v2043, 0
      %v2056 = vsel %vm1158, %v2045, 0
      %2058 = vmatpush.bf16.xpose.msra.mxu0 0
      %2059 = vmatpush.bf16.xpose.msra.mxu0 0
      %2060 = vmatpush.bf16.xpose.msra.mxu0 0
      %2061 = vmatpush.bf16.xpose.msra.mxu0 0
      %2062 = vmatpush.bf16.xpose.msra.mxu0 0
      %2063 = vmatpush.bf16.xpose.msra.mxu0 0
      %2064 = vmatpush.bf16.xpose.msra.mxu0 %v2056
      %2065 = vmatpush.bf16.xpose.msra.mxu0 %v2053
      %2066 = vmatmul.bf16.gmra.mxu0 %v2047
      %v2067 = vpop.f32.mrf.mxu0
      %v2068 = vadd.f32 0.0, %v2067
      %v2069 = vpop.f32.mrf.mxu0
      %v2070 = vadd.f32 0.0, %v2069
      %2071 = vmatmul.bf16.gmra.mxu0 %v2050
      %v2072 = vpop.f32.mrf.mxu0
      %v2073 = vadd.f32 0.0, %v2072
      %v2074 = vpop.f32.mrf.mxu0
      %2075 = vdwg.mxu0
      %v2076 = vmul.f32 %v2030, 0.35355338
      %v2077 = vmul.f32 %v2032, 0.35355338
      %v2078 = vmul.f32 %v2035, 0.35355338
      %v2079 = vmul.f32 %v2068, 0.35355338
      %v2080 = vmul.f32 %v2070, 0.35355338
      %v2081 = vmul.f32 %v2073, 0.35355338
      %v2082 = vadd.f32 %v2076, %v1135
      %v2083 = vadd.f32 %v2077, %v1135
      %v2084 = vadd.f32 %v2078, %v1135
      %v2085 = vadd.f32 %v2079, %v1135
      %v2086 = vadd.f32 %v2080, %v1135
      %v2087 = vadd.f32 %v2081, %v1135
      %v2088 = vsel %vm1243, %v2082, -inf
      %2089 = vmax.xlane.f32.xlu0 %v2088
      %v2090 = vpop.xlane.xlu0 %2089
      %v2091 = vsel %vm1243, %v2083, -inf
      %2092 = vmax.xlane.f32.xlu0 %v2091
      %v2093 = vpop.xlane.xlu0 %2092
      %v2094 = vsel %vm1243, %v2084, -inf
      %2095 = vmax.xlane.f32.xlu0 %v2094
      %v2096 = vpop.xlane.xlu0 %2095
      %v2097 = vsel %vm1243, %v2085, -inf
      %2098 = vmax.xlane.f32.xlu0 %v2097
      %v2099 = vpop.xlane.xlu0 %2098
      %v2100 = vsel %vm1243, %v2086, -inf
      %2101 = vmax.xlane.f32.xlu0 %v2100
      %v2102 = vpop.xlane.xlu0 %2101
      %v2103 = vsel %vm1243, %v2087, -inf
      %2104 = vmax.xlane.f32.xlu0 %v2103
      %v2105 = vpop.xlane.xlu0 %2104
      %v2106 = vsub.f32 %v2082, %v2090
      %v2107 = vsub.f32 %v2083, %v2093
      %v2108 = vsub.f32 %v2084, %v2096
      %v2109 = vsub.f32 %v2085, %v2099
      %v2110 = vsub.f32 %v2086, %v2102
      %v2111 = vsub.f32 %v2087, %v2105
      %v2112 = vmul.f32 %v2106, 1.442695
      %v2113 = vpow.pop %v2112
      %v2114 = vmul.f32 %v2107, 1.442695
      %v2115 = vpow.pop %v2114
      %v2116 = vmul.f32 %v2108, 1.442695
      %v2117 = vpow.pop %v2116
      %v2118 = vmul.f32 %v2109, 1.442695
      %v2119 = vpow.pop %v2118
      %v2120 = vmul.f32 %v2110, 1.442695
      %v2121 = vpow.pop %v2120
      %v2122 = vmul.f32 %v2111, 1.442695
      %v2123 = vpow.pop %v2122
      %v2124 = vsel %vm1243, %v2113, 0.0
      %2125 = vadd.xlane.f32.xlu0 %v2124
      %v2126 = vpop.xlane.xlu0 %2125
      %v2127 = vsel %vm1243, %v2115, 0.0
      %2128 = vadd.xlane.f32.xlu0 %v2127
      %v2129 = vpop.xlane.xlu0 %2128
      %v2130 = vsel %vm1243, %v2117, 0.0
      %2131 = vadd.xlane.f32.xlu0 %v2130
      %v2132 = vpop.xlane.xlu0 %2131
      %v2133 = vsel %vm1243, %v2119, 0.0
      %2134 = vadd.xlane.f32.xlu0 %v2133
      %v2135 = vpop.xlane.xlu0 %2134
      %v2136 = vsel %vm1243, %v2121, 0.0
      %2137 = vadd.xlane.f32.xlu0 %v2136
      %v2138 = vpop.xlane.xlu0 %2137
      %v2139 = vsel %vm1243, %v2123, 0.0
      %2140 = vadd.xlane.f32.xlu0 %v2139
      %v2141 = vpop.xlane.xlu0 %2140
      %v2142 = vrcp.pop %v2126
      %v2143 = vrcp.pop %v2129
      %v2144 = vrcp.pop %v2132
      %v2145 = vrcp.pop %v2135
      %v2146 = vrcp.pop %v2138
      %v2147 = vrcp.pop %v2141
      %v2148 = vmul.f32 %v2113, %v2142
      %v2149 = vmul.f32 %v2115, %v2143
      %v2150 = vmul.f32 %v2117, %v2144
      %v2151 = vmul.f32 %v2119, %v2145
      %v2152 = vmul.f32 %v2121, %v2146
      %v2153 = vmul.f32 %v2123, %v2147
      %v2154 = vpack.c.bf16 %v2148, %v2148
      %v2155 = vpack.c.bf16 %v2149, %v2149
      %v2156 = vpack.c.bf16 %v2150, %v2150
      %v2157 = vpack.c.bf16 %v2151, %v2151
      %v2158 = vpack.c.bf16 %v2152, %v2152
      %v2159 = vpack.c.bf16 %v2153, %v2153
      %v2163 = vunpack.c.l.b16 %v2154
      %v2164 = vunpack.c.l.b16 %v2155
      %v2165 = vunpack.c.l.b16 %v2156
      %v2166 = vpack.c.b16 %v2164, %v2163
      %v2167 = vpack.c.b16 %v2165, %v2165
      %2168 = vrot.lane.b32.xlu0 %v1152, 40
      %v2169 = vpop.permute.xlu0 %2168
      %2170 = vrot.lane.b32.xlu0 %v1153, 40
      %v2171 = vpop.permute.xlu0 %2170
      %v2174 = vsel %vm1243, %v2166, 0
      %v2177 = vsel %vm1243, %v2167, 0
      %v2180 = vsel %vm1335, %v2171, 0
      %2182 = vmatpush.bf16.msra.mxu0 0
      %2183 = vmatpush.bf16.msra.mxu0 0
      %2184 = vmatpush.bf16.msra.mxu0 0
      %2185 = vmatpush.bf16.msra.mxu0 0
      %2186 = vmatpush.bf16.msra.mxu0 0
      %2187 = vmatpush.bf16.msra.mxu0 0
      %2188 = vmatpush.bf16.msra.mxu0 %v2180
      %2189 = vmatpush.bf16.msra.mxu0 %v2169
      %2190 = vmatmul.bf16.gmra.mxu0 %v2174
      %v2191 = vpop.f32.mrf.mxu0
      %v2192 = vadd.f32 0.0, %v2191
      %v2193 = vpop.f32.mrf.mxu0
      %v2194 = vadd.f32 0.0, %v2193
      %2195 = vmatmul.bf16.gmra.mxu0 %v2177
      %v2196 = vpop.f32.mrf.mxu0
      %v2197 = vadd.f32 0.0, %v2196
      %v2198 = vpop.f32.mrf.mxu0
      %2199 = vdwg.mxu0
      %v2203 = vunpack.c.l.b16 %v2157
      %v2204 = vunpack.c.l.b16 %v2158
      %v2205 = vunpack.c.l.b16 %v2159
      %v2206 = vpack.c.b16 %v2204, %v2203
      %v2207 = vpack.c.b16 %v2205, %v2205
      %2208 = vrot.lane.b32.xlu0 %v1195, 40
      %v2209 = vpop.permute.xlu0 %2208
      %2210 = vrot.lane.b32.xlu0 %v1196, 40
      %v2211 = vpop.permute.xlu0 %2210
      %v2214 = vsel %vm1243, %v2206, 0
      %v2217 = vsel %vm1243, %v2207, 0
      %v2220 = vsel %vm1335, %v2211, 0
      %2222 = vmatpush.bf16.msra.mxu0 0
      %2223 = vmatpush.bf16.msra.mxu0 0
      %2224 = vmatpush.bf16.msra.mxu0 0
      %2225 = vmatpush.bf16.msra.mxu0 0
      %2226 = vmatpush.bf16.msra.mxu0 0
      %2227 = vmatpush.bf16.msra.mxu0 0
      %2228 = vmatpush.bf16.msra.mxu0 %v2220
      %2229 = vmatpush.bf16.msra.mxu0 %v2209
      %2230 = vmatmul.bf16.gmra.mxu0 %v2214
      %v2231 = vpop.f32.mrf.mxu0
      %v2232 = vadd.f32 0.0, %v2231
      %v2233 = vpop.f32.mrf.mxu0
      %v2234 = vadd.f32 0.0, %v2233
      %2235 = vmatmul.bf16.gmra.mxu0 %v2217
      %v2236 = vpop.f32.mrf.mxu0
      %v2237 = vadd.f32 0.0, %v2236
      %v2238 = vpop.f32.mrf.mxu0
      %2239 = vdwg.mxu0
      %v2240 = vpack.c.bf16 %v2194, %v2192
      %v2241 = vpack.c.bf16 %v2232, %v2197
      %v2242 = vpack.c.bf16 %v2237, %v2234
      %v2244 = vsel %vm1158, %v2240, 0
      %v2247 = vsel %vm1158, %v2241, 0
      %v2250 = vsel %vm1158, %v2242, 0
      %v2253 = vsel %vm1335, %v1139, 0
      %2255 = vmatpush.bf16.msra.mxu0 0
      %2256 = vmatpush.bf16.msra.mxu0 0
      %2257 = vmatpush.bf16.msra.mxu0 0
      %2258 = vmatpush.bf16.msra.mxu0 0
      %2259 = vmatpush.bf16.msra.mxu0 0
      %2260 = vmatpush.bf16.msra.mxu0 0
      %2261 = vmatpush.bf16.msra.mxu0 0
      %2262 = vmatpush.bf16.msra.mxu0 %v2253
      %2263 = vmatmul.bf16.gmra.mxu0 %v2244
      %v2264 = vpop.f32.mrf.mxu0
      %v2265 = vadd.f32 0.0, %v2264
      %v2266 = vpop.f32.mrf.mxu0
      %v2267 = vadd.f32 0.0, %v2266
      %2268 = vmatmul.bf16.gmra.mxu0 %v2247
      %v2269 = vpop.f32.mrf.mxu0
      %v2270 = vadd.f32 0.0, %v2269
      %v2271 = vpop.f32.mrf.mxu0
      %v2272 = vadd.f32 0.0, %v2271
      %2273 = vmatmul.bf16.gmra.mxu0 %v2250
      %v2274 = vpop.f32.mrf.mxu0
      %v2275 = vadd.f32 0.0, %v2274
      %v2276 = vpop.f32.mrf.mxu0
      %v2277 = vadd.f32 0.0, %v2276
      %2278 = vdwg.mxu0
      %v2279 = vadd.f32 %v1994, %v2265
      %v2280 = vadd.f32 %v1995, %v2267
      %v2281 = vadd.f32 %v1996, %v2270
      %v2282 = vadd.f32 %v1997, %v2272
      %v2283 = vadd.f32 %v1998, %v2275
      %v2284 = vadd.f32 %v1999, %v2277
      %v2285 = vadd.f32 %v910, %v2279
      %v2286 = vadd.f32 %v911, %v2280
      %v2287 = vadd.f32 %v912, %v2281
      %v2288 = vadd.f32 %v913, %v2282
      %v2289 = vadd.f32 %v914, %v2283
      %v2290 = vadd.f32 %v915, %v2284
      %v2291 = vld [vmem:[%s791] sm:$0x1]
      %v2293 = vperm.slane %v2291, 0
      %v2295 = vadd.f32 %v2285, %v2293
      %v2296 = vadd.f32 %v2286, %v2293
      %v2297 = vadd.f32 %v2287, %v2293
      %v2298 = vadd.f32 %v2288, %v2293
      %v2299 = vadd.f32 %v2289, %v2293
      %v2300 = vadd.f32 %v2290, %v2293
      %v2301 = vld [vmem:[%s794] sm:$0x1]
      %v2302 = vld [vmem:[%s797] sm:$0x1]
      %v2303 = vsel %vm918, %v2295, 0.0
      %2304 = vadd.xlane.f32.xlu0 %v2303
      %v2305 = vpop.xlane.xlu0 %2304
      %v2306 = vsel %vm918, %v2296, 0.0
      %2307 = vadd.xlane.f32.xlu0 %v2306
      %v2308 = vpop.xlane.xlu0 %2307
      %v2309 = vsel %vm918, %v2297, 0.0
      %2310 = vadd.xlane.f32.xlu0 %v2309
      %v2311 = vpop.xlane.xlu0 %2310
      %v2312 = vsel %vm918, %v2298, 0.0
      %2313 = vadd.xlane.f32.xlu0 %v2312
      %v2314 = vpop.xlane.xlu0 %2313
      %v2315 = vsel %vm918, %v2299, 0.0
      %2316 = vadd.xlane.f32.xlu0 %v2315
      %v2317 = vpop.xlane.xlu0 %2316
      %v2318 = vsel %vm918, %v2300, 0.0
      %2319 = vadd.xlane.f32.xlu0 %v2318
      %v2320 = vpop.xlane.xlu0 %2319
      %v2321 = vmul.f32 %v2305, %v943
      %v2322 = vmul.f32 %v2308, %v943
      %v2323 = vmul.f32 %v2311, %v943
      %v2324 = vmul.f32 %v2314, %v943
      %v2325 = vmul.f32 %v2317, %v943
      %v2326 = vmul.f32 %v2320, %v943
      %v2327 = vsub.f32 %v2295, %v2321
      %v2328 = vsub.f32 %v2296, %v2322
      %v2329 = vsub.f32 %v2297, %v2323
      %v2330 = vsub.f32 %v2298, %v2324
      %v2331 = vsub.f32 %v2299, %v2325
      %v2332 = vsub.f32 %v2300, %v2326
      %v2333 = vmul.f32 %v2327, %v2327
      %v2334 = vmul.f32 %v2328, %v2328
      %v2335 = vmul.f32 %v2329, %v2329
      %v2336 = vmul.f32 %v2330, %v2330
      %v2337 = vmul.f32 %v2331, %v2331
      %v2338 = vmul.f32 %v2332, %v2332
      %v2339 = vsel %vm918, %v2333, 0.0
      %2340 = vadd.xlane.f32.xlu0 %v2339
      %v2341 = vpop.xlane.xlu0 %2340
      %v2342 = vsel %vm918, %v2334, 0.0
      %2343 = vadd.xlane.f32.xlu0 %v2342
      %v2344 = vpop.xlane.xlu0 %2343
      %v2345 = vsel %vm918, %v2335, 0.0
      %2346 = vadd.xlane.f32.xlu0 %v2345
      %v2347 = vpop.xlane.xlu0 %2346
      %v2348 = vsel %vm918, %v2336, 0.0
      %2349 = vadd.xlane.f32.xlu0 %v2348
      %v2350 = vpop.xlane.xlu0 %2349
      %v2351 = vsel %vm918, %v2337, 0.0
      %2352 = vadd.xlane.f32.xlu0 %v2351
      %v2353 = vpop.xlane.xlu0 %2352
      %v2354 = vsel %vm918, %v2338, 0.0
      %2355 = vadd.xlane.f32.xlu0 %v2354
      %v2356 = vpop.xlane.xlu0 %2355
      %v2357 = vmul.f32 %v2341, %v943
      %v2358 = vmul.f32 %v2344, %v943
      %v2359 = vmul.f32 %v2347, %v943
      %v2360 = vmul.f32 %v2350, %v943
      %v2361 = vmul.f32 %v2353, %v943
      %v2362 = vmul.f32 %v2356, %v943
      %v2363 = vadd.f32 %v2357, 1e-05
      %v2364 = vadd.f32 %v2358, 1e-05
      %v2365 = vadd.f32 %v2359, 1e-05
      %v2366 = vadd.f32 %v2360, 1e-05
      %v2367 = vadd.f32 %v2361, 1e-05
      %v2368 = vadd.f32 %v2362, 1e-05
      %v2369 = vrsqrt.pop %v2363
      %v2370 = vmul.f32 %v2369, %v2363
      %v2371 = vmul.f32 %v2370, %v2369
      %v2372 = vmul.f32 0.5, %v2371
      %v2373 = vsub.f32 1.5, %v2372
      %v2374 = vmul.f32 %v2369, %v2373
      %vm2375 = vweird.f32 %v2363
      %vm2376 = vweird.f32 %v2369
      %vm2377 = vmor %vm2375, %vm2376
      %v2378 = vsel %vm2377, %v2369, %v2374
      %v2379 = vrsqrt.pop %v2364
      %v2380 = vmul.f32 %v2379, %v2364
      %v2381 = vmul.f32 %v2380, %v2379
      %v2382 = vmul.f32 0.5, %v2381
      %v2383 = vsub.f32 1.5, %v2382
      %v2384 = vmul.f32 %v2379, %v2383
      %vm2385 = vweird.f32 %v2364
      %vm2386 = vweird.f32 %v2379
      %vm2387 = vmor %vm2385, %vm2386
      %v2388 = vsel %vm2387, %v2379, %v2384
      %v2389 = vrsqrt.pop %v2365
      %v2390 = vmul.f32 %v2389, %v2365
      %v2391 = vmul.f32 %v2390, %v2389
      %v2392 = vmul.f32 0.5, %v2391
      %v2393 = vsub.f32 1.5, %v2392
      %v2394 = vmul.f32 %v2389, %v2393
      %vm2395 = vweird.f32 %v2365
      %vm2396 = vweird.f32 %v2389
      %vm2397 = vmor %vm2395, %vm2396
      %v2398 = vsel %vm2397, %v2389, %v2394
      %v2399 = vrsqrt.pop %v2366
      %v2400 = vmul.f32 %v2399, %v2366
      %v2401 = vmul.f32 %v2400, %v2399
      %v2402 = vmul.f32 0.5, %v2401
      %v2403 = vsub.f32 1.5, %v2402
      %v2404 = vmul.f32 %v2399, %v2403
      %vm2405 = vweird.f32 %v2366
      %vm2406 = vweird.f32 %v2399
      %vm2407 = vmor %vm2405, %vm2406
      %v2408 = vsel %vm2407, %v2399, %v2404
      %v2409 = vrsqrt.pop %v2367
      %v2410 = vmul.f32 %v2409, %v2367
      %v2411 = vmul.f32 %v2410, %v2409
      %v2412 = vmul.f32 0.5, %v2411
      %v2413 = vsub.f32 1.5, %v2412
      %v2414 = vmul.f32 %v2409, %v2413
      %vm2415 = vweird.f32 %v2367
      %vm2416 = vweird.f32 %v2409
      %vm2417 = vmor %vm2415, %vm2416
      %v2418 = vsel %vm2417, %v2409, %v2414
      %v2419 = vrsqrt.pop %v2368
      %v2420 = vmul.f32 %v2419, %v2368
      %v2421 = vmul.f32 %v2420, %v2419
      %v2422 = vmul.f32 0.5, %v2421
      %v2423 = vsub.f32 1.5, %v2422
      %v2424 = vmul.f32 %v2419, %v2423
      %vm2425 = vweird.f32 %v2368
      %vm2426 = vweird.f32 %v2419
      %vm2427 = vmor %vm2425, %vm2426
      %v2428 = vsel %vm2427, %v2419, %v2424
      %v2429 = vmul.f32 %v2327, %v2378
      %v2430 = vmul.f32 %v2328, %v2388
      %v2431 = vmul.f32 %v2329, %v2398
      %v2432 = vmul.f32 %v2330, %v2408
      %v2433 = vmul.f32 %v2331, %v2418
      %v2434 = vmul.f32 %v2332, %v2428
      %v2436 = vperm.slane %v2301, 0
      %v2438 = vmul.f32 %v2429, %v2436
      %v2439 = vmul.f32 %v2430, %v2436
      %v2440 = vmul.f32 %v2431, %v2436
      %v2441 = vmul.f32 %v2432, %v2436
      %v2442 = vmul.f32 %v2433, %v2436
      %v2443 = vmul.f32 %v2434, %v2436
      %v2445 = vperm.slane %v2302, 0
      %v2447 = vadd.f32 %v2438, %v2445
      %v2448 = vadd.f32 %v2439, %v2445
      %v2449 = vadd.f32 %v2440, %v2445
      %v2450 = vadd.f32 %v2441, %v2445
      %v2451 = vadd.f32 %v2442, %v2445
      %v2452 = vadd.f32 %v2443, %v2445
      %v2453 = vpack.c.bf16 %v2448, %v2447
      %v2454 = vpack.c.bf16 %v2450, %v2449
      %v2455 = vpack.c.bf16 %v2452, %v2451
      %v2456 = vld [vmem:[%s802] sm:$0xf]
      %v2457 = vld [vmem:[%s802 + $0x4] sm:$0xf]
      %v2458 = vld [vmem:[%s802 + $0x8] sm:$0xf]
      %v2459 = vld [vmem:[%s802 + $0xc] sm:$0xf]
      %v2460 = vld [vmem:[%s805] sm:$0x1]
      %v2462 = vperm.slane %v2460, 0
      %v2468 = vunpack.c.l.b16 %v2456
      %v2469 = vunpack.c.l.b16 %v2457
      %v2470 = vunpack.c.l.b16 %v2458
      %v2471 = vunpack.c.l.b16 %v2459
      %v2472 = vpack.c.b16 %v2469, %v2468
      %v2473 = vpack.c.b16 %v2471, %v2470
      %v2477 = vsel %vm918, %v2453, 0
      %v2480 = vsel %vm918, %v2454, 0
      %v2483 = vsel %vm918, %v2455, 0
      %2485 = vmatpush.bf16.msra.mxu0 0
      %2486 = vmatpush.bf16.msra.mxu0 0
      %2487 = vmatpush.bf16.msra.mxu0 0
      %2488 = vmatpush.bf16.msra.mxu0 0
      %2489 = vmatpush.bf16.msra.mxu0 0
      %2490 = vmatpush.bf16.msra.mxu0 0
      %2491 = vmatpush.bf16.msra.mxu0 %v2473
      %2492 = vmatpush.bf16.msra.mxu0 %v2472
      %2493 = vmatmul.bf16.gmra.mxu0 %v2477
      %v2494 = vpop.f32.mrf.mxu0
      %v2495 = vadd.f32 %v2462, %v2494
      %v2496 = vpop.f32.mrf.mxu0
      %v2497 = vadd.f32 %v2462, %v2496
      %2498 = vmatmul.bf16.gmra.mxu0 %v2480
      %v2499 = vpop.f32.mrf.mxu0
      %v2500 = vadd.f32 %v2462, %v2499
      %v2501 = vpop.f32.mrf.mxu0
      %v2502 = vadd.f32 %v2462, %v2501
      %2503 = vmatmul.bf16.gmra.mxu0 %v2483
      %v2504 = vpop.f32.mrf.mxu0
      %v2505 = vadd.f32 %v2462, %v2504
      %v2506 = vpop.f32.mrf.mxu0
      %v2507 = vadd.f32 %v2462, %v2506
      %2508 = vdwg.mxu0
      %v2509 = vmul.f32 %v2495, %v2495
      %v2510 = vmul.f32 %v2497, %v2497
      %v2511 = vmul.f32 %v2500, %v2500
      %v2512 = vmul.f32 %v2502, %v2502
      %v2513 = vmul.f32 %v2505, %v2505
      %v2514 = vmul.f32 %v2507, %v2507
      %v2515 = vmul.f32 %v2495, %v2509
      %v2516 = vmul.f32 %v2497, %v2510
      %v2517 = vmul.f32 %v2500, %v2511
      %v2518 = vmul.f32 %v2502, %v2512
      %v2519 = vmul.f32 %v2505, %v2513
      %v2520 = vmul.f32 %v2507, %v2514
      %v2521 = vmul.f32 %v2515, 0.044715
      %v2522 = vmul.f32 %v2516, 0.044715
      %v2523 = vmul.f32 %v2517, 0.044715
      %v2524 = vmul.f32 %v2518, 0.044715
      %v2525 = vmul.f32 %v2519, 0.044715
      %v2526 = vmul.f32 %v2520, 0.044715
      %v2527 = vadd.f32 %v2495, %v2521
      %v2528 = vadd.f32 %v2497, %v2522
      %v2529 = vadd.f32 %v2500, %v2523
      %v2530 = vadd.f32 %v2502, %v2524
      %v2531 = vadd.f32 %v2505, %v2525
      %v2532 = vadd.f32 %v2507, %v2526
      %v2533 = vmul.f32 %v2527, 0.7978846
      %v2534 = vmul.f32 %v2528, 0.7978846
      %v2535 = vmul.f32 %v2529, 0.7978846
      %v2536 = vmul.f32 %v2530, 0.7978846
      %v2537 = vmul.f32 %v2531, 0.7978846
      %v2538 = vmul.f32 %v2532, 0.7978846
      %v2539 = vtanh.pop %v2533
      %v2540 = vtanh.pop %v2534
      %v2541 = vtanh.pop %v2535
      %v2542 = vtanh.pop %v2536
      %v2543 = vtanh.pop %v2537
      %v2544 = vtanh.pop %v2538
      %v2545 = vadd.f32 %v2539, 1.0
      %v2546 = vadd.f32 %v2540, 1.0
      %v2547 = vadd.f32 %v2541, 1.0
      %v2548 = vadd.f32 %v2542, 1.0
      %v2549 = vadd.f32 %v2543, 1.0
      %v2550 = vadd.f32 %v2544, 1.0
      %v2551 = vmul.f32 %v2545, 0.5
      %v2552 = vmul.f32 %v2546, 0.5
      %v2553 = vmul.f32 %v2547, 0.5
      %v2554 = vmul.f32 %v2548, 0.5
      %v2555 = vmul.f32 %v2549, 0.5
      %v2556 = vmul.f32 %v2550, 0.5
      %v2557 = vmul.f32 %v2495, %v2551
      %v2558 = vmul.f32 %v2497, %v2552
      %v2559 = vmul.f32 %v2500, %v2553
      %v2560 = vmul.f32 %v2502, %v2554
      %v2561 = vmul.f32 %v2505, %v2555
      %v2562 = vmul.f32 %v2507, %v2556
      %v2563 = vpack.c.bf16 %v2558, %v2557
      %v2564 = vpack.c.bf16 %v2560, %v2559
      %v2565 = vpack.c.bf16 %v2562, %v2561
      %v2566 = vld [vmem:[%s810] sm:$0xf]
      %v2567 = vld [vmem:[%s810 + $0x4] sm:$0xf]
      %v2568 = vld [vmem:[%s810 + $0x8] sm:$0xf]
      %v2569 = vld [vmem:[%s810 + $0xc] sm:$0xf]
      %v2570 = vld [vmem:[%s810 + $0x10] sm:$0xf]
      %v2571 = vld [vmem:[%s810 + $0x14] sm:$0xf]
      %v2572 = vld [vmem:[%s810 + $0x18] sm:$0xf]
      %v2573 = vld [vmem:[%s810 + $0x1c] sm:$0xf]
      %v2574 = vld [vmem:[%s813] sm:$0x1]
      %v2576 = vperm.slane %v2574, 0
      %v2586 = vunpack.c.l.b16 %v2566
      %v2587 = vunpack.c.l.b16 %v2567
      %v2588 = vunpack.c.l.b16 %v2568
      %v2589 = vunpack.c.l.b16 %v2569
      %v2590 = vunpack.c.l.b16 %v2570
      %v2591 = vunpack.c.l.b16 %v2571
      %v2592 = vunpack.c.l.b16 %v2572
      %v2593 = vunpack.c.l.b16 %v2573
      %v2594 = vpack.c.b16 %v2587, %v2586
      %v2595 = vpack.c.b16 %v2589, %v2588
      %v2596 = vpack.c.b16 %v2591, %v2590
      %v2597 = vpack.c.b16 %v2593, %v2592
      %vm2602 = vcmask 523264
      %v2604 = vsel %vm2602, %v2563, 0
      %v2607 = vsel %vm2602, %v2564, 0
      %v2610 = vsel %vm2602, %v2565, 0
      %2612 = vmatpush.bf16.msra.mxu0 0
      %2613 = vmatpush.bf16.msra.mxu0 0
      %2614 = vmatpush.bf16.msra.mxu0 0
      %2615 = vmatpush.bf16.msra.mxu0 0
      %2616 = vmatpush.bf16.msra.mxu0 %v2597
      %2617 = vmatpush.bf16.msra.mxu0 %v2596
      %2618 = vmatpush.bf16.msra.mxu0 %v2595
      %2619 = vmatpush.bf16.msra.mxu0 %v2594
      %2620 = vmatmul.bf16.gmra.mxu0 %v2604
      %v2621 = vpop.f32.mrf.mxu0
      %v2622 = vadd.f32 %v2576, %v2621
      %v2623 = vpop.f32.mrf.mxu0
      %v2624 = vadd.f32 %v2576, %v2623
      %2625 = vmatmul.bf16.gmra.mxu0 %v2607
      %v2626 = vpop.f32.mrf.mxu0
      %v2627 = vadd.f32 %v2576, %v2626
      %v2628 = vpop.f32.mrf.mxu0
      %v2629 = vadd.f32 %v2576, %v2628
      %2630 = vmatmul.bf16.gmra.mxu0 %v2610
      %v2631 = vpop.f32.mrf.mxu0
      %v2632 = vadd.f32 %v2576, %v2631
      %v2633 = vpop.f32.mrf.mxu0
      %v2634 = vadd.f32 %v2576, %v2633
      %2635 = vdwg.mxu0
      %v2636 = vadd.f32 %v2295, %v2622
      %v2637 = vadd.f32 %v2296, %v2624
      %v2638 = vadd.f32 %v2297, %v2627
      %v2639 = vadd.f32 %v2298, %v2629
      %v2640 = vadd.f32 %v2299, %v2632
      %v2641 = vadd.f32 %v2300, %v2634
      %2642 = vst.msk [vmem:[#allocation2] sm:$0xff] %vm918, %v2636
      %2643 = vst.msk [vmem:[#allocation2 + $0x8] sm:$0xff] %vm918, %v2637
      %2644 = vst.msk [vmem:[#allocation2 + $0x10] sm:$0xff] %vm918, %v2638
      %2645 = vst.msk [vmem:[#allocation2 + $0x18] sm:$0xff] %vm918, %v2639
      %2646 = vst.msk [vmem:[#allocation2 + $0x20] sm:$0xff] %vm918, %v2640
      %2647 = vst.msk [vmem:[#allocation2 + $0x28] sm:$0xff] %vm918, %v2641
      %p2648 = scmp.eq.s32.totalorder %s32, 1
      // Predicated region
      $region109: #{vit_forward.1} parent=103 // pred_check
        %p2649 = pneg %p2648
      $region110: #{vit_forward.1} parent=103 // pred_check_branch
        %2651 = sbr.rel (%p2649) target = $region112
      $region111: #{vit_forward.1} parent=103 // pred_region
        %v2652 = vld [vmem:[%s17] sm:$0x1]
        %v2653 = vld [vmem:[%s18] sm:$0x1]
        %v2654 = vsel %vm918, %v2636, 0.0
        %2655 = vadd.xlane.f32.xlu0 %v2654
        %v2656 = vpop.xlane.xlu0 %2655
        %v2657 = vsel %vm918, %v2637, 0.0
        %2658 = vadd.xlane.f32.xlu0 %v2657
        %v2659 = vpop.xlane.xlu0 %2658
        %v2660 = vsel %vm918, %v2638, 0.0
        %2661 = vadd.xlane.f32.xlu0 %v2660
        %v2662 = vpop.xlane.xlu0 %2661
        %v2663 = vsel %vm918, %v2639, 0.0
        %2664 = vadd.xlane.f32.xlu0 %v2663
        %v2665 = vpop.xlane.xlu0 %2664
        %v2666 = vsel %vm918, %v2640, 0.0
        %2667 = vadd.xlane.f32.xlu0 %v2666
        %v2668 = vpop.xlane.xlu0 %2667
        %v2669 = vsel %vm918, %v2641, 0.0
        %2670 = vadd.xlane.f32.xlu0 %v2669
        %v2671 = vpop.xlane.xlu0 %2670
        %v2672 = vmul.f32 %v2656, %v943
        %v2673 = vmul.f32 %v2659, %v943
        %v2674 = vmul.f32 %v2662, %v943
        %v2675 = vmul.f32 %v2665, %v943
        %v2676 = vmul.f32 %v2668, %v943
        %v2677 = vmul.f32 %v2671, %v943
        %v2678 = vsub.f32 %v2636, %v2672
        %v2679 = vsub.f32 %v2637, %v2673
        %v2680 = vsub.f32 %v2638, %v2674
        %v2681 = vsub.f32 %v2639, %v2675
        %v2682 = vsub.f32 %v2640, %v2676
        %v2683 = vsub.f32 %v2641, %v2677
        %v2684 = vmul.f32 %v2678, %v2678
        %v2685 = vmul.f32 %v2679, %v2679
        %v2686 = vmul.f32 %v2680, %v2680
        %v2687 = vmul.f32 %v2681, %v2681
        %v2688 = vmul.f32 %v2682, %v2682
        %v2689 = vmul.f32 %v2683, %v2683
        %v2690 = vsel %vm918, %v2684, 0.0
        %2691 = vadd.xlane.f32.xlu0 %v2690
        %v2692 = vpop.xlane.xlu0 %2691
        %v2693 = vsel %vm918, %v2685, 0.0
        %2694 = vadd.xlane.f32.xlu0 %v2693
        %v2695 = vpop.xlane.xlu0 %2694
        %v2696 = vsel %vm918, %v2686, 0.0
        %2697 = vadd.xlane.f32.xlu0 %v2696
        %v2698 = vpop.xlane.xlu0 %2697
        %v2699 = vsel %vm918, %v2687, 0.0
        %2700 = vadd.xlane.f32.xlu0 %v2699
        %v2701 = vpop.xlane.xlu0 %2700
        %v2702 = vsel %vm918, %v2688, 0.0
        %2703 = vadd.xlane.f32.xlu0 %v2702
        %v2704 = vpop.xlane.xlu0 %2703
        %v2705 = vsel %vm918, %v2689, 0.0
        %2706 = vadd.xlane.f32.xlu0 %v2705
        %v2707 = vpop.xlane.xlu0 %2706
        %v2708 = vmul.f32 %v2692, %v943
        %v2709 = vmul.f32 %v2695, %v943
        %v2710 = vmul.f32 %v2698, %v943
        %v2711 = vmul.f32 %v2701, %v943
        %v2712 = vmul.f32 %v2704, %v943
        %v2713 = vmul.f32 %v2707, %v943
        %v2714 = vadd.f32 %v2708, 1e-05
        %v2715 = vadd.f32 %v2709, 1e-05
        %v2716 = vadd.f32 %v2710, 1e-05
        %v2717 = vadd.f32 %v2711, 1e-05
        %v2718 = vadd.f32 %v2712, 1e-05
        %v2719 = vadd.f32 %v2713, 1e-05
        %v2720 = vrsqrt.pop %v2714
        %v2721 = vmul.f32 %v2720, %v2714
        %v2722 = vmul.f32 %v2721, %v2720
        %v2723 = vmul.f32 0.5, %v2722
        %v2724 = vsub.f32 1.5, %v2723
        %v2725 = vmul.f32 %v2720, %v2724
        %vm2726 = vweird.f32 %v2714
        %vm2727 = vweird.f32 %v2720
        %vm2728 = vmor %vm2726, %vm2727
        %v2729 = vsel %vm2728, %v2720, %v2725
        %v2730 = vrsqrt.pop %v2715
        %v2731 = vmul.f32 %v2730, %v2715
        %v2732 = vmul.f32 %v2731, %v2730
        %v2733 = vmul.f32 0.5, %v2732
        %v2734 = vsub.f32 1.5, %v2733
        %v2735 = vmul.f32 %v2730, %v2734
        %vm2736 = vweird.f32 %v2715
        %vm2737 = vweird.f32 %v2730
        %vm2738 = vmor %vm2736, %vm2737
        %v2739 = vsel %vm2738, %v2730, %v2735
        %v2740 = vrsqrt.pop %v2716
        %v2741 = vmul.f32 %v2740, %v2716
        %v2742 = vmul.f32 %v2741, %v2740
        %v2743 = vmul.f32 0.5, %v2742
        %v2744 = vsub.f32 1.5, %v2743
        %v2745 = vmul.f32 %v2740, %v2744
        %vm2746 = vweird.f32 %v2716
        %vm2747 = vweird.f32 %v2740
        %vm2748 = vmor %vm2746, %vm2747
        %v2749 = vsel %vm2748, %v2740, %v2745
        %v2750 = vrsqrt.pop %v2717
        %v2751 = vmul.f32 %v2750, %v2717
        %v2752 = vmul.f32 %v2751, %v2750
        %v2753 = vmul.f32 0.5, %v2752
        %v2754 = vsub.f32 1.5, %v2753
        %v2755 = vmul.f32 %v2750, %v2754
        %vm2756 = vweird.f32 %v2717
        %vm2757 = vweird.f32 %v2750
        %vm2758 = vmor %vm2756, %vm2757
        %v2759 = vsel %vm2758, %v2750, %v2755
        %v2760 = vrsqrt.pop %v2718
        %v2761 = vmul.f32 %v2760, %v2718
        %v2762 = vmul.f32 %v2761, %v2760
        %v2763 = vmul.f32 0.5, %v2762
        %v2764 = vsub.f32 1.5, %v2763
        %v2765 = vmul.f32 %v2760, %v2764
        %vm2766 = vweird.f32 %v2718
        %vm2767 = vweird.f32 %v2760
        %vm2768 = vmor %vm2766, %vm2767
        %v2769 = vsel %vm2768, %v2760, %v2765
        %v2770 = vrsqrt.pop %v2719
        %v2771 = vmul.f32 %v2770, %v2719
        %v2772 = vmul.f32 %v2771, %v2770
        %v2773 = vmul.f32 0.5, %v2772
        %v2774 = vsub.f32 1.5, %v2773
        %v2775 = vmul.f32 %v2770, %v2774
        %vm2776 = vweird.f32 %v2719
        %vm2777 = vweird.f32 %v2770
        %vm2778 = vmor %vm2776, %vm2777
        %v2779 = vsel %vm2778, %v2770, %v2775
        %v2780 = vmul.f32 %v2678, %v2729
        %v2781 = vmul.f32 %v2679, %v2739
        %v2782 = vmul.f32 %v2680, %v2749
        %v2783 = vmul.f32 %v2681, %v2759
        %v2784 = vmul.f32 %v2682, %v2769
        %v2785 = vmul.f32 %v2683, %v2779
        %v2787 = vperm.slane %v2652, 0
        %v2789 = vmul.f32 %v2780, %v2787
        %v2790 = vmul.f32 %v2781, %v2787
        %v2791 = vmul.f32 %v2782, %v2787
        %v2792 = vmul.f32 %v2783, %v2787
        %v2793 = vmul.f32 %v2784, %v2787
        %v2794 = vmul.f32 %v2785, %v2787
        %v2796 = vperm.slane %v2653, 0
        %v2798 = vadd.f32 %v2789, %v2796
        %v2799 = vadd.f32 %v2790, %v2796
        %v2800 = vadd.f32 %v2791, %v2796
        %v2801 = vadd.f32 %v2792, %v2796
        %v2802 = vadd.f32 %v2793, %v2796
        %v2803 = vadd.f32 %v2794, %v2796
        %v2804 = vpack.c.bf16 %v2799, %v2798
        %v2805 = vpack.c.bf16 %v2801, %v2800
        %v2806 = vpack.c.bf16 %v2803, %v2802
        %v2807 = vld [vmem:[%s19] sm:$0xf]
        %v2808 = vld [vmem:[%s19 + $0x4] sm:$0xf]
        %v2809 = vld [vmem:[%s19 + $0x8] sm:$0xf]
        %v2810 = vld [vmem:[%s19 + $0xc] sm:$0xf]
        %v2811 = vld [vmem:[%s20] sm:$0x1]
        %v2813 = vperm.slane %v2811, 0
        %v2819 = vunpack.c.l.b16 %v2807
        %v2820 = vunpack.c.l.b16 %v2808
        %v2821 = vunpack.c.l.b16 %v2809
        %v2822 = vunpack.c.l.b16 %v2810
        %v2823 = vpack.c.b16 %v2820, %v2819
        %v2824 = vpack.c.b16 %v2822, %v2821
        %v2828 = vsel %vm918, %v2804, 0
        %v2831 = vsel %vm918, %v2805, 0
        %v2834 = vsel %vm918, %v2806, 0
        %2836 = vmatpush.bf16.msra.mxu0 0
        %2837 = vmatpush.bf16.msra.mxu0 0
        %2838 = vmatpush.bf16.msra.mxu0 0
        %2839 = vmatpush.bf16.msra.mxu0 0
        %2840 = vmatpush.bf16.msra.mxu0 0
        %2841 = vmatpush.bf16.msra.mxu0 0
        %2842 = vmatpush.bf16.msra.mxu0 %v2824
        %2843 = vmatpush.bf16.msra.mxu0 %v2823
        %2844 = vmatmul.bf16.gmra.mxu0 %v2828
        %v2845 = vpop.f32.mrf.mxu0
        %v2846 = vadd.f32 %v2813, %v2845
        %v2847 = vpop.f32.mrf.mxu0
        %v2848 = vadd.f32 %v2813, %v2847
        %2849 = vmatmul.bf16.gmra.mxu0 %v2831
        %v2850 = vpop.f32.mrf.mxu0
        %v2851 = vadd.f32 %v2813, %v2850
        %v2852 = vpop.f32.mrf.mxu0
        %v2853 = vadd.f32 %v2813, %v2852
        %2854 = vmatmul.bf16.gmra.mxu0 %v2834
        %v2855 = vpop.f32.mrf.mxu0
        %v2856 = vadd.f32 %v2813, %v2855
        %v2857 = vpop.f32.mrf.mxu0
        %v2858 = vadd.f32 %v2813, %v2857
        %2859 = vdwg.mxu0
        %2860 = vst [vmem:[%s21] sm:$0xff] %v2846
        %2861 = vst [vmem:[%s21 + $0x8] sm:$0xff] %v2848
        %2862 = vst [vmem:[%s21 + $0x10] sm:$0xff] %v2851
        %2863 = vst [vmem:[%s21 + $0x18] sm:$0xff] %v2853
        %2864 = vst [vmem:[%s21 + $0x20] sm:$0xff] %v2856
        %2865 = vst [vmem:[%s21 + $0x28] sm:$0xff] %v2858
      $region112: #{vit_forward.1} parent=103 // pred_fallthru
        _
      // Predicated region
      $region113: #{vit_forward.1} parent=103 // pred_check
        %p2866 = pneg %p546
      $region114: #{vit_forward.1} parent=103 // pred_check_branch
        %2868 = sbr.rel (%p2866) target = $region116
      $region115: #{vit_forward.1} parent=103 // pred_region
        _
      $region116: #{vit_forward.1} parent=103 // pred_fallthru
        _
      // Predicated region
      $region117: #{vit_forward.1} parent=103 // pred_check
        %p2869 = pneg %p546
      $region118: #{vit_forward.1} parent=103 // pred_check_branch
        %2871 = sbr.rel (%p2869) target = $region120
      $region119: #{vit_forward.1} parent=103 // pred_region
        _
      $region120: #{vit_forward.1} parent=103 // pred_fallthru
        _
    $region104: #{vit_forward.1} parent=5 // pred_fallthru
      _
    %p2872 = scmp.le.s32.totalorder 2, %s27
    // Predicated region
    $region121: #{vit_forward.1} parent=5 // pred_check
      %p2873 = pneg %p2872
    $region122: #{vit_forward.1} parent=5 // pred_check_branch
      %2875 = sbr.rel (%p2873) target = $region124
    $region123: #{vit_forward.1} parent=5 // pred_region
      %s2876 = ssub.s32 %s27, 2
    $region124: #{vit_forward.1} parent=5 // pred_fallthru
      _
  $region6: #{vit_forward.1} parent=0 // loop_footer
    %s31 = sadd.s32 1, %s27
  $region7: #{vit_forward.1} parent=0 // loop_footer_branch
    %26 = sbr.rel target = $region3
  $region8: #{vit_forward.1} parent=0 // loop_exit
    _

</llo_original>
